<compile_context>
chip_gen: v7x
topology: tpu7x:2x2x1
jax: 0.10.0
libtpu: 0.0.40
codegen_flags: <defaults>
</compile_context>

<pallas_src>
import jax
import jax.numpy as jnp
from jax import lax
from jax.experimental import pallas as pl
from jax.experimental.pallas import tpu as pltpu

INPUT_DIM = 768
HIDDEN_DIM = 1024
OUTPUT_DIM = 64
OUTPUT_PAD = 128          # lane-dense output width (>= OUTPUT_DIM, multiple of 128)
LN_EPS = 1e-5


def drug_ffn_kernel(x_ref, w1_ref, b1_ref, gamma_ref, beta_ref,
                    w2_ref, b2_ref, o_ref):
    # ---- Linear(768 -> 1024): bf16 MXU inputs, f32 accumulation ----
    h = jnp.dot(x_ref[...], w1_ref[...],
                preferred_element_type=jnp.float32) + b1_ref[...]

    # ---- LayerNorm(1024) over the feature axis (f32 math) ----
    mean = jnp.mean(h, axis=-1, keepdims=True)
    centered = h - mean
    var = jnp.mean(centered * centered, axis=-1, keepdims=True)
    h_norm = centered * lax.rsqrt(var + LN_EPS)
    h_norm = h_norm * gamma_ref[...] + beta_ref[...]

    # ---- ReLU ----
    h_act = jnp.maximum(h_norm, 0.0)

    # ---- Dropout(0.5): inference mode -> identity ----
    # TODO(synk): training-mode dropout (pltpu.prng_random_bits mask) not emitted.

    # ---- Linear(1024 -> 128 padded): bf16 MXU inputs, f32 accumulation ----
    h_act = h_act.astype(w2_ref.dtype)
    o_ref[...] = (jnp.dot(h_act, w2_ref[...],
                          preferred_element_type=jnp.float32)
                  + b2_ref[...]).astype(o_ref.dtype)


def drug_ffn(x, w1, b1, gamma, beta, w2, b2, *, batch_tile=256, use_bf16=True):
    B, D = x.shape
    assert D == INPUT_DIM

    # ---- Pick the batch tile & pad B (no divisibility assert) ----
    if B >= batch_tile:
        tile = batch_tile
        B_pad = pl.cdiv(B, tile) * tile
    else:
        # Small batch: one tile covering the (sublane-rounded) batch.
        B_pad = max(8, ((B + 7) // 8) * 8)
        tile = B_pad

    # v7x has 2 TensorCores: prefer >= 2 grid steps when the tile is splittable.
    if B_pad // tile == 1 and tile >= 16 and (tile // 2) % 8 == 0:
        tile //= 2

    if B_pad != B:
        x = jnp.pad(x, ((0, B_pad - B), (0, 0)))

    # ---- Pad the second GEMM to a lane-dense (…,128) output ----
    w2p = jnp.pad(w2, ((0, 0), (0, OUTPUT_PAD - OUTPUT_DIM)))
    b2p = jnp.pad(b2, ((0, 0), (0, OUTPUT_PAD - OUTPUT_DIM)))

    # ---- bf16 MXU inputs (halves W1 DMA traffic; f32 accumulation in-kernel) ----
    if use_bf16:
        x_mx = x.astype(jnp.bfloat16)
        w1_mx = w1.astype(jnp.bfloat16)
        w2_mx = w2p.astype(jnp.bfloat16)
    else:
        x_mx, w1_mx, w2_mx = x, w1, w2p

    grid = (B_pad // tile,)

    out = pl.pallas_call(
        drug_ffn_kernel,
        out_shape=jax.ShapeDtypeStruct((B_pad, OUTPUT_PAD), jnp.float32),
        grid_spec=pltpu.PrefetchScalarGridSpec(
            num_scalar_prefetch=0,
            grid=grid,
            in_specs=[
                pl.BlockSpec((tile, INPUT_DIM), lambda i: (i, 0)),          # x tile
                pl.BlockSpec((INPUT_DIM, HIDDEN_DIM), lambda i: (0, 0)),    # W1
                pl.BlockSpec((1, HIDDEN_DIM), lambda i: (0, 0)),            # b1
                pl.BlockSpec((1, HIDDEN_DIM), lambda i: (0, 0)),            # LN gamma
                pl.BlockSpec((1, HIDDEN_DIM), lambda i: (0, 0)),            # LN beta
                pl.BlockSpec((HIDDEN_DIM, OUTPUT_PAD), lambda i: (0, 0)),   # W2 (padded)
                pl.BlockSpec((1, OUTPUT_PAD), lambda i: (0, 0)),            # b2 (padded)
            ],
            out_specs=pl.BlockSpec((tile, OUTPUT_PAD), lambda i: (i, 0)),
        ),
        compiler_params=pltpu.CompilerParams(
            dimension_semantics=("parallel",),
            vmem_limit_bytes=32 * 1024 * 1024,   # safe on v5e/v6e/v7x; usage ~6-8 MiB
        ),
    )(x_mx, w1_mx, b1, gamma, beta, w2_mx, b2p)

    # Strip batch padding and the 64->128 lane padding.
    return out[:B, :OUTPUT_DIM]


def reference(x, w1, b1, gamma, beta, w2, b2):
    h = x @ w1 + b1
    mean = jnp.mean(h, axis=-1, keepdims=True)
    var = jnp.mean((h - mean) ** 2, axis=-1, keepdims=True)
    h = (h - mean) * lax.rsqrt(var + LN_EPS) * gamma + beta
    h = jnp.maximum(h, 0.0)
    return h @ w2 + b2


if __name__ == "__main__":
    key = jax.random.PRNGKey(0)
    k_x, k_w1, k_b1, k_w2, k_b2 = jax.random.split(key, 5)

    B = 8  # small batch for the smoke test
    x = jax.random.normal(k_x, (B, INPUT_DIM), dtype=jnp.float32)

    # Deterministic parameter init (synthetic; roughly PyTorch-like scale).
    w1 = jax.random.normal(k_w1, (INPUT_DIM, HIDDEN_DIM), jnp.float32) * (INPUT_DIM ** -0.5)
    b1 = jax.random.normal(k_b1, (1, HIDDEN_DIM), jnp.float32) * 0.01
    gamma = jnp.ones((1, HIDDEN_DIM), jnp.float32)
    beta = jnp.zeros((1, HIDDEN_DIM), jnp.float32)
    w2 = jax.random.normal(k_w2, (HIDDEN_DIM, OUTPUT_DIM), jnp.float32) * (HIDDEN_DIM ** -0.5)
    b2 = jax.random.normal(k_b2, (1, OUTPUT_DIM), jnp.float32) * 0.01

    out = drug_ffn(x, w1, b1, gamma, beta, w2, b2)
    out = jax.block_until_ready(out)

    ref = reference(x, w1, b1, gamma, beta, w2, b2)
    assert out.shape == (B, OUTPUT_DIM)
    # bf16 MXU inputs (f32 accumulation) loosen the tolerance vs. the f32 reference.
    assert jnp.allclose(out, ref, atol=7e-2, rtol=7e-2), "mismatch vs reference"

    print("KERNEL_OK")
</pallas_src>

<mosaic_0001>
module attributes {stable_mosaic.version = 11 : i64} {
  func.func @drug_ffn_kernel(%arg0: i32, %arg1: memref<8x768xbf16, #tpu.memory_space<vmem>>, %arg2: memref<768x1024xbf16, #tpu.memory_space<vmem>>, %arg3: memref<1x1024xf32, #tpu.memory_space<vmem>>, %arg4: memref<1x1024xf32, #tpu.memory_space<vmem>>, %arg5: memref<1x1024xf32, #tpu.memory_space<vmem>>, %arg6: memref<1024x128xbf16, #tpu.memory_space<vmem>>, %arg7: memref<1x128xf32, #tpu.memory_space<vmem>>, %arg8: memref<8x128xf32, #tpu.memory_space<vmem>>) attributes {dimension_semantics = [#tpu.dimension_semantics<parallel>], iteration_bounds = array<i64: 1>, scalar_prefetch = 0 : i64, scratch_operands = 0 : i64, tpu.core_type = #tpu.core_type<tc>, window_params = [{transform_indices = @transform_0, window_bounds = array<i64: 8, 768>}, {pipeline_mode = #tpu.pipeline_mode<synchronous>, transform_indices = @transform_1, window_bounds = array<i64: 768, 1024>}, {pipeline_mode = #tpu.pipeline_mode<synchronous>, transform_indices = @transform_2, window_bounds = array<i64: 1, 1024>}, {pipeline_mode = #tpu.pipeline_mode<synchronous>, transform_indices = @transform_3, window_bounds = array<i64: 1, 1024>}, {pipeline_mode = #tpu.pipeline_mode<synchronous>, transform_indices = @transform_4, window_bounds = array<i64: 1, 1024>}, {pipeline_mode = #tpu.pipeline_mode<synchronous>, transform_indices = @transform_5, window_bounds = array<i64: 1024, 128>}, {pipeline_mode = #tpu.pipeline_mode<synchronous>, transform_indices = @transform_6, window_bounds = array<i64: 1, 128>}, {transform_indices = @transform_7, window_bounds = array<i64: 8, 128>}]} {
    %c0 = arith.constant 0 : index
    %c0_0 = arith.constant 0 : index
    %0 = vector.load %arg1[%c0, %c0_0] : memref<8x768xbf16, #tpu.memory_space<vmem>>, vector<8x768xbf16>
    %c0_1 = arith.constant 0 : index
    %c0_2 = arith.constant 0 : index
    %1 = vector.load %arg2[%c0_1, %c0_2] : memref<768x1024xbf16, #tpu.memory_space<vmem>>, vector<768x1024xbf16>
    %cst = arith.constant dense<0.000000e+00> : vector<8x1024xf32>
    %2 = tpu.matmul %0, %1, %cst {dimension_numbers = #tpu.dot_dimension_numbers<[1], [0], [0], [1], [0, 0, 1, 1], [], []>} : vector<8x768xbf16>, vector<768x1024xbf16>, vector<8x1024xf32> -> vector<8x1024xf32>
    %c0_3 = arith.constant 0 : index
    %c0_4 = arith.constant 0 : index
    %3 = vector.load %arg3[%c0_3, %c0_4] : memref<1x1024xf32, #tpu.memory_space<vmem>>, vector<1x1024xf32>
    %4 = vector.broadcast %3 : vector<1x1024xf32> to vector<8x1024xf32>
    %5 = arith.addf %2, %4 : vector<8x1024xf32>
    %cst_5 = arith.constant dense<0.000000e+00> : vector<8xf32>
    %6 = vector.multi_reduction <add>, %5, %cst_5 [1] : vector<8x1024xf32> to vector<8xf32>
    %7 = vector.shape_cast %6 : vector<8xf32> to vector<8x1xf32>
    %cst_6 = arith.constant 1.024000e+03 : f32
    %8 = vector.broadcast %cst_6 : f32 to vector<8x1xf32>
    %9 = arith.divf %7, %8 : vector<8x1xf32>
    %10 = vector.broadcast %9 : vector<8x1xf32> to vector<8x1024xf32>
    %11 = arith.subf %5, %10 : vector<8x1024xf32>
    %12 = arith.mulf %11, %11 : vector<8x1024xf32>
    %cst_7 = arith.constant dense<0.000000e+00> : vector<8xf32>
    %13 = vector.multi_reduction <add>, %12, %cst_7 [1] : vector<8x1024xf32> to vector<8xf32>
    %14 = vector.shape_cast %13 : vector<8xf32> to vector<8x1xf32>
    %cst_8 = arith.constant 1.024000e+03 : f32
    %15 = vector.broadcast %cst_8 : f32 to vector<8x1xf32>
    %16 = arith.divf %14, %15 : vector<8x1xf32>
    %cst_9 = arith.constant 9.99999974E-6 : f32
    %17 = vector.broadcast %cst_9 : f32 to vector<8x1xf32>
    %18 = arith.addf %16, %17 : vector<8x1xf32>
    %19 = math.rsqrt %18 : vector<8x1xf32>
    %20 = vector.broadcast %19 : vector<8x1xf32> to vector<8x1024xf32>
    %21 = arith.mulf %11, %20 : vector<8x1024xf32>
    %c0_10 = arith.constant 0 : index
    %c0_11 = arith.constant 0 : index
    %22 = vector.load %arg4[%c0_10, %c0_11] : memref<1x1024xf32, #tpu.memory_space<vmem>>, vector<1x1024xf32>
    %23 = vector.broadcast %22 : vector<1x1024xf32> to vector<8x1024xf32>
    %24 = arith.mulf %21, %23 : vector<8x1024xf32>
    %c0_12 = arith.constant 0 : index
    %c0_13 = arith.constant 0 : index
    %25 = vector.load %arg5[%c0_12, %c0_13] : memref<1x1024xf32, #tpu.memory_space<vmem>>, vector<1x1024xf32>
    %26 = vector.broadcast %25 : vector<1x1024xf32> to vector<8x1024xf32>
    %27 = arith.addf %24, %26 : vector<8x1024xf32>
    %cst_14 = arith.constant 0.000000e+00 : f32
    %28 = vector.broadcast %cst_14 : f32 to vector<8x1024xf32>
    %29 = arith.maximumf %27, %28 : vector<8x1024xf32>
    %30 = arith.truncf %29 : vector<8x1024xf32> to vector<8x1024xbf16>
    %c0_15 = arith.constant 0 : index
    %c0_16 = arith.constant 0 : index
    %31 = vector.load %arg6[%c0_15, %c0_16] : memref<1024x128xbf16, #tpu.memory_space<vmem>>, vector<1024x128xbf16>
    %cst_17 = arith.constant dense<0.000000e+00> : vector<8x128xf32>
    %32 = tpu.matmul %30, %31, %cst_17 {dimension_numbers = #tpu.dot_dimension_numbers<[1], [0], [0], [1], [0, 0, 1, 1], [], []>} : vector<8x1024xbf16>, vector<1024x128xbf16>, vector<8x128xf32> -> vector<8x128xf32>
    %c0_18 = arith.constant 0 : index
    %c0_19 = arith.constant 0 : index
    %33 = vector.load %arg7[%c0_18, %c0_19] : memref<1x128xf32, #tpu.memory_space<vmem>>, vector<1x128xf32>
    %34 = vector.broadcast %33 : vector<1x128xf32> to vector<8x128xf32>
    %35 = arith.addf %32, %34 : vector<8x128xf32>
    %c0_20 = arith.constant 0 : index
    %c0_21 = arith.constant 0 : index
    %36 = vector.load %arg8[%c0_20, %c0_21] : memref<8x128xf32, #tpu.memory_space<vmem>>, vector<8x128xf32>
    tpu.vector_store %arg8[%c0_20, %c0_21], %35 {strides = array<i32>} : memref<8x128xf32, #tpu.memory_space<vmem>>, vector<8x128xf32>,
    return
  }
  func.func @transform_0(%arg0: i32) -> (i32, i32) {
    %c0_i32 = arith.constant 0 : i32
    %c0_i32_0 = arith.constant 0 : i32
    return %arg0, %c0_i32 : i32, i32
  }
  func.func @transform_1(%arg0: i32) -> (i32, i32) {
    %c0_i32 = arith.constant 0 : i32
    %c0_i32_0 = arith.constant 0 : i32
    %c0_i32_1 = arith.constant 0 : i32
    return %c0_i32, %c0_i32_0 : i32, i32
  }
  func.func @transform_2(%arg0: i32) -> (i32, i32) {
    %c0_i32 = arith.constant 0 : i32
    %c0_i32_0 = arith.constant 0 : i32
    %c0_i32_1 = arith.constant 0 : i32
    return %c0_i32, %c0_i32_0 : i32, i32
  }
  func.func @transform_3(%arg0: i32) -> (i32, i32) {
    %c0_i32 = arith.constant 0 : i32
    %c0_i32_0 = arith.constant 0 : i32
    %c0_i32_1 = arith.constant 0 : i32
    return %c0_i32, %c0_i32_0 : i32, i32
  }
  func.func @transform_4(%arg0: i32) -> (i32, i32) {
    %c0_i32 = arith.constant 0 : i32
    %c0_i32_0 = arith.constant 0 : i32
    %c0_i32_1 = arith.constant 0 : i32
    return %c0_i32, %c0_i32_0 : i32, i32
  }
  func.func @transform_5(%arg0: i32) -> (i32, i32) {
    %c0_i32 = arith.constant 0 : i32
    %c0_i32_0 = arith.constant 0 : i32
    %c0_i32_1 = arith.constant 0 : i32
    return %c0_i32, %c0_i32_0 : i32, i32
  }
  func.func @transform_6(%arg0: i32) -> (i32, i32) {
    %c0_i32 = arith.constant 0 : i32
    %c0_i32_0 = arith.constant 0 : i32
    %c0_i32_1 = arith.constant 0 : i32
    return %c0_i32, %c0_i32_0 : i32, i32
  }
  func.func @transform_7(%arg0: i32) -> (i32, i32) {
    %c0_i32 = arith.constant 0 : i32
    %c0_i32_0 = arith.constant 0 : i32
    return %arg0, %c0_i32 : i32, i32
  }
}

</mosaic_0001>

<llo_original>
// kernel: tpu_custom_call.1
$region0: #{tpu_custom_call.1}
  #allocation0 [shape = 'u32[]', space=smem, size = 0x4, offset = 0x4, fixed_abs, tag = 'smem constant byte address 0x4 - core index']
  #allocation1 [shape = 'u32[144,128]{1,0:T(1,128)}', space=vmem, size = 0x12000, scoped, tag = 'internal scratch']
  %s0 = inlined_call_operand.hbm [shape: bf16[8,768], index: 0, kind: input, shape index: {}]
  %s1 = inlined_call_operand.hbm [shape: bf16[768,1024], index: 1, kind: input, shape index: {}]
  %s2 = inlined_call_operand.hbm [shape: f32[1,1024], index: 2, kind: input, shape index: {}]
  %s3 = inlined_call_operand.hbm [shape: f32[1,1024], index: 3, kind: input, shape index: {}]
  %s4 = inlined_call_operand.hbm [shape: f32[1,1024], index: 4, kind: input, shape index: {}]
  %s5 = inlined_call_operand.hbm [shape: bf16[1024,128], index: 5, kind: input, shape index: {}]
  %s6 = inlined_call_operand.hbm [shape: f32[1,128], index: 6, kind: input, shape index: {}]
  %s7 = inlined_call_operand.hbm [shape: f32[8,128], index: 7, kind: output, shape index: {}]
  %s8 = sld [smem:[#allocation0]]
  $region66: #{tpu_custom_call.1} parent=0
    _
  %s10 = ssub.s32 1, %s8
  %s11 = scalar_select 0, %s10, %s8
  $region1: #{tpu_custom_call.1} parent=0
    #allocation2 [shape = 'u8[12288]{0}', space=vmem, size = 0x3000, scoped, tag = 'input window, operand 0, single buffered']
    #allocation3 [shape = 's32[1]{0}', space=sflag, size = 0x4, scoped, tag = 'scoped memory for tpu_custom_call.1']
    #allocation4 [shape = 's32[1]{0}', space=sflag, size = 0x4, scoped, tag = 'scoped memory for tpu_custom_call.1']
    #allocation5 [shape = 'u8[1572864]{0}', space=vmem, size = 0x180000, scoped, tag = 'input window, operand 1, single buffered']
    #allocation6 [shape = 's32[1]{0}', space=sflag, size = 0x4, scoped, tag = 'scoped memory for tpu_custom_call.1']
    #allocation7 [shape = 'u8[4096]{0}', space=vmem, size = 0x1000, scoped, tag = 'input window, operand 2, single buffered']
    #allocation8 [shape = 'u8[4096]{0}', space=vmem, size = 0x1000, scoped, tag = 'input window, operand 3, single buffered']
    #allocation9 [shape = 's32[1]{0}', space=sflag, size = 0x4, scoped, tag = 'scoped memory for tpu_custom_call.1']
    #allocation10 [shape = 'u8[4096]{0}', space=vmem, size = 0x1000, scoped, tag = 'input window, operand 4, single buffered']
    #allocation11 [shape = 'u8[262144]{0}', space=vmem, size = 0x40000, scoped, tag = 'input window, operand 5, single buffered']
    #allocation12 [shape = 's32[1]{0}', space=sflag, size = 0x4, scoped, tag = 'scoped memory for tpu_custom_call.1']
    #allocation13 [shape = 'u8[512]{0}', space=vmem, size = 0x400, scoped, tag = 'input window, operand 6, single buffered']
    #allocation14 [shape = 'u8[4096]{0}', space=vmem, size = 0x1000, scoped, tag = 'output window, operand 0, single buffered']
    %12 = vsyncpa [#allocation3], 0
    %13 = vsyncpa [#allocation6], 0
    %14 = vsyncpa [#allocation9], 0
    %15 = vsyncpa [#allocation12], 0
    %16 = vsyncpa [#allocation4], 0
    // Predicated region
    $region2: #{tpu_custom_call.1} parent=1 // pred_check
      _
    $region3: #{tpu_custom_call.1} parent=1 // pred_check_branch
      %18 = sbr.rel (0) target = $region5
    $region4: #{tpu_custom_call.1} parent=1 // pred_region
      %s20 = ssub.s32 384, 384
      %21 = vsyncadd [#allocation3], %s20
      %s23 = sshll.u32 [#allocation2], 4
      %s24 = int_to_ptr.vmem [resolvable:$true] %s23
      %26 = dma.hbm_to_vmem [thread:$0]  %s0, 384, %s24, [#allocation3]
    $region5: #{tpu_custom_call.1} parent=1 // pred_fallthru
      _
    // Predicated region
    $region6: #{tpu_custom_call.1} parent=1 // pred_check
      _
    $region7: #{tpu_custom_call.1} parent=1 // pred_check_branch
      %28 = sbr.rel (0) target = $region9
    $region8: #{tpu_custom_call.1} parent=1 // pred_region
      %s30 = ssub.s32 49152, 49152
      %31 = vsyncadd [#allocation6], %s30
      %s32 = sshll.u32 [#allocation5], 4
      %s33 = int_to_ptr.vmem [resolvable:$true] %s32
      %38 = dma.hbm_to_vmem [thread:$0]  %s1, 49152, %s33, [#allocation6], 512, 512, 32
    $region9: #{tpu_custom_call.1} parent=1 // pred_fallthru
      _
    // Predicated region
    $region10: #{tpu_custom_call.1} parent=1 // pred_check
      _
    $region11: #{tpu_custom_call.1} parent=1 // pred_check_branch
      %40 = sbr.rel (0) target = $region13
    $region12: #{tpu_custom_call.1} parent=1 // pred_region
      %s42 = ssub.s32 128, 128
      %43 = vsyncadd [#allocation6], %s42
      %s45 = sshll.u32 [#allocation7], 4
      %s46 = int_to_ptr.vmem [resolvable:$true] %s45
      %48 = dma.hbm_to_vmem [thread:$0]  %s2, 128, %s46, [#allocation6]
    $region13: #{tpu_custom_call.1} parent=1 // pred_fallthru
      _
    // Predicated region
    $region14: #{tpu_custom_call.1} parent=1 // pred_check
      _
    $region15: #{tpu_custom_call.1} parent=1 // pred_check_branch
      %50 = sbr.rel (0) target = $region17
    $region16: #{tpu_custom_call.1} parent=1 // pred_region
      %s52 = ssub.s32 128, 128
      %53 = vsyncadd [#allocation9], %s52
      %s55 = sshll.u32 [#allocation8], 4
      %s56 = int_to_ptr.vmem [resolvable:$true] %s55
      %58 = dma.hbm_to_vmem [thread:$0]  %s3, 128, %s56, [#allocation9]
    $region17: #{tpu_custom_call.1} parent=1 // pred_fallthru
      _
    // Predicated region
    $region18: #{tpu_custom_call.1} parent=1 // pred_check
      _
    $region19: #{tpu_custom_call.1} parent=1 // pred_check_branch
      %60 = sbr.rel (0) target = $region21
    $region20: #{tpu_custom_call.1} parent=1 // pred_region
      %s62 = ssub.s32 128, 128
      %63 = vsyncadd [#allocation9], %s62
      %s65 = sshll.u32 [#allocation10], 4
      %s66 = int_to_ptr.vmem [resolvable:$true] %s65
      %68 = dma.hbm_to_vmem [thread:$0]  %s4, 128, %s66, [#allocation9]
    $region21: #{tpu_custom_call.1} parent=1 // pred_fallthru
      _
    // Predicated region
    $region22: #{tpu_custom_call.1} parent=1 // pred_check
      _
    $region23: #{tpu_custom_call.1} parent=1 // pred_check_branch
      %70 = sbr.rel (0) target = $region25
    $region24: #{tpu_custom_call.1} parent=1 // pred_region
      %s72 = ssub.s32 8192, 8192
      %73 = vsyncadd [#allocation12], %s72
      %s74 = sshll.u32 [#allocation11], 4
      %s75 = int_to_ptr.vmem [resolvable:$true] %s74
      %80 = dma.hbm_to_vmem [thread:$0]  %s5, 8192, %s75, [#allocation12], 64, 64, 4
    $region25: #{tpu_custom_call.1} parent=1 // pred_fallthru
      _
    // Predicated region
    $region26: #{tpu_custom_call.1} parent=1 // pred_check
      _
    $region27: #{tpu_custom_call.1} parent=1 // pred_check_branch
      %82 = sbr.rel (0) target = $region29
    $region28: #{tpu_custom_call.1} parent=1 // pred_region
      %s84 = ssub.s32 16, 16
      %85 = vsyncadd [#allocation12], %s84
      %s87 = sshll.u32 [#allocation13], 4
      %s88 = int_to_ptr.vmem [resolvable:$true] %s87
      %90 = dma.hbm_to_vmem [thread:$0]  %s6, 16, %s88, [#allocation12]
    $region29: #{tpu_custom_call.1} parent=1 // pred_fallthru
      _
    // Predicated region
    $region30: #{tpu_custom_call.1} parent=1 // pred_check
      _
    $region31: #{tpu_custom_call.1} parent=1 // pred_check_branch
      %92 = sbr.rel (0) target = $region33
    $region32: #{tpu_custom_call.1} parent=1 // pred_region
      %93 = dma.done [#allocation3], 384
    $region33: #{tpu_custom_call.1} parent=1 // pred_fallthru
      _
    // Predicated region
    $region34: #{tpu_custom_call.1} parent=1 // pred_check
      _
    $region35: #{tpu_custom_call.1} parent=1 // pred_check_branch
      %95 = sbr.rel (0) target = $region37
    $region36: #{tpu_custom_call.1} parent=1 // pred_region
      %96 = dma.done [#allocation6], 49152
    $region37: #{tpu_custom_call.1} parent=1 // pred_fallthru
      _
    // Predicated region
    $region38: #{tpu_custom_call.1} parent=1 // pred_check
      _
    $region39: #{tpu_custom_call.1} parent=1 // pred_check_branch
      %98 = sbr.rel (0) target = $region41
    $region40: #{tpu_custom_call.1} parent=1 // pred_region
      %99 = dma.done [#allocation6], 128
    $region41: #{tpu_custom_call.1} parent=1 // pred_fallthru
      _
    // Predicated region
    $region42: #{tpu_custom_call.1} parent=1 // pred_check
      _
    $region43: #{tpu_custom_call.1} parent=1 // pred_check_branch
      %101 = sbr.rel (0) target = $region45
    $region44: #{tpu_custom_call.1} parent=1 // pred_region
      %102 = dma.done [#allocation9], 128
    $region45: #{tpu_custom_call.1} parent=1 // pred_fallthru
      _
    // Predicated region
    $region46: #{tpu_custom_call.1} parent=1 // pred_check
      _
    $region47: #{tpu_custom_call.1} parent=1 // pred_check_branch
      %104 = sbr.rel (0) target = $region49
    $region48: #{tpu_custom_call.1} parent=1 // pred_region
      %105 = dma.done [#allocation9], 128
    $region49: #{tpu_custom_call.1} parent=1 // pred_fallthru
      _
    // Predicated region
    $region50: #{tpu_custom_call.1} parent=1 // pred_check
      _
    $region51: #{tpu_custom_call.1} parent=1 // pred_check_branch
      %107 = sbr.rel (0) target = $region53
    $region52: #{tpu_custom_call.1} parent=1 // pred_region
      %108 = dma.done [#allocation12], 8192
    $region53: #{tpu_custom_call.1} parent=1 // pred_fallthru
      _
    // Predicated region
    $region54: #{tpu_custom_call.1} parent=1 // pred_check
      _
    $region55: #{tpu_custom_call.1} parent=1 // pred_check_branch
      %110 = sbr.rel (0) target = $region57
    $region56: #{tpu_custom_call.1} parent=1 // pred_region
      %111 = dma.done [#allocation12], 16
    $region57: #{tpu_custom_call.1} parent=1 // pred_fallthru
      _
    %v113 = vld [vmem:[#allocation2] sm:$0xff]
    %v114 = vld [vmem:[#allocation2 + $0x8] sm:$0xff]
    %v115 = vld [vmem:[#allocation2 + $0x10] sm:$0xff]
    %v116 = vld [vmem:[#allocation5] sm:$0xff]
    %v117 = vld [vmem:[#allocation5 + $0x8] sm:$0xff]
    %v118 = vld [vmem:[#allocation5 + $0x10] sm:$0xff]
    %v119 = vld [vmem:[#allocation5 + $0x18] sm:$0xff]
    %v120 = vld [vmem:[#allocation5 + $0x20] sm:$0xff]
    %v121 = vld [vmem:[#allocation5 + $0x28] sm:$0xff]
    %v122 = vld [vmem:[#allocation5 + $0x30] sm:$0xff]
    %v123 = vld [vmem:[#allocation5 + $0x38] sm:$0xff]
    %v124 = vld [vmem:[#allocation5 + $0x40] sm:$0xff]
    %v125 = vld [vmem:[#allocation5 + $0x48] sm:$0xff]
    %v126 = vld [vmem:[#allocation5 + $0x50] sm:$0xff]
    %v127 = vld [vmem:[#allocation5 + $0x58] sm:$0xff]
    %v128 = vld [vmem:[#allocation5 + $0x60] sm:$0xff]
    %v129 = vld [vmem:[#allocation5 + $0x68] sm:$0xff]
    %v130 = vld [vmem:[#allocation5 + $0x70] sm:$0xff]
    %v131 = vld [vmem:[#allocation5 + $0x78] sm:$0xff]
    %v132 = vld [vmem:[#allocation5 + $0x80] sm:$0xff]
    %v133 = vld [vmem:[#allocation5 + $0x88] sm:$0xff]
    %v134 = vld [vmem:[#allocation5 + $0x90] sm:$0xff]
    %v135 = vld [vmem:[#allocation5 + $0x98] sm:$0xff]
    %v136 = vld [vmem:[#allocation5 + $0xa0] sm:$0xff]
    %v137 = vld [vmem:[#allocation5 + $0xa8] sm:$0xff]
    %v138 = vld [vmem:[#allocation5 + $0xb0] sm:$0xff]
    %v139 = vld [vmem:[#allocation5 + $0xb8] sm:$0xff]
    %v140 = vld [vmem:[#allocation5 + $0xc0] sm:$0xff]
    %v141 = vld [vmem:[#allocation5 + $0xc8] sm:$0xff]
    %v142 = vld [vmem:[#allocation5 + $0xd0] sm:$0xff]
    %v143 = vld [vmem:[#allocation5 + $0xd8] sm:$0xff]
    %v144 = vld [vmem:[#allocation5 + $0xe0] sm:$0xff]
    %v145 = vld [vmem:[#allocation5 + $0xe8] sm:$0xff]
    %v146 = vld [vmem:[#allocation5 + $0xf0] sm:$0xff]
    %v147 = vld [vmem:[#allocation5 + $0xf8] sm:$0xff]
    %v148 = vld [vmem:[#allocation5 + $0x100] sm:$0xff]
    %v149 = vld [vmem:[#allocation5 + $0x108] sm:$0xff]
    %v150 = vld [vmem:[#allocation5 + $0x110] sm:$0xff]
    %v151 = vld [vmem:[#allocation5 + $0x118] sm:$0xff]
    %v152 = vld [vmem:[#allocation5 + $0x120] sm:$0xff]
    %v153 = vld [vmem:[#allocation5 + $0x128] sm:$0xff]
    %v154 = vld [vmem:[#allocation5 + $0x130] sm:$0xff]
    %v155 = vld [vmem:[#allocation5 + $0x138] sm:$0xff]
    %v156 = vld [vmem:[#allocation5 + $0x140] sm:$0xff]
    %v157 = vld [vmem:[#allocation5 + $0x148] sm:$0xff]
    %v158 = vld [vmem:[#allocation5 + $0x150] sm:$0xff]
    %v159 = vld [vmem:[#allocation5 + $0x158] sm:$0xff]
    %v160 = vld [vmem:[#allocation5 + $0x160] sm:$0xff]
    %v161 = vld [vmem:[#allocation5 + $0x168] sm:$0xff]
    %v162 = vld [vmem:[#allocation5 + $0x170] sm:$0xff]
    %v163 = vld [vmem:[#allocation5 + $0x178] sm:$0xff]
    %v164 = vld [vmem:[#allocation5 + $0x180] sm:$0xff]
    %v165 = vld [vmem:[#allocation5 + $0x188] sm:$0xff]
    %v166 = vld [vmem:[#allocation5 + $0x190] sm:$0xff]
    %v167 = vld [vmem:[#allocation5 + $0x198] sm:$0xff]
    %v168 = vld [vmem:[#allocation5 + $0x1a0] sm:$0xff]
    %v169 = vld [vmem:[#allocation5 + $0x1a8] sm:$0xff]
    %v170 = vld [vmem:[#allocation5 + $0x1b0] sm:$0xff]
    %v171 = vld [vmem:[#allocation5 + $0x1b8] sm:$0xff]
    %v172 = vld [vmem:[#allocation5 + $0x1c0] sm:$0xff]
    %v173 = vld [vmem:[#allocation5 + $0x1c8] sm:$0xff]
    %v174 = vld [vmem:[#allocation5 + $0x1d0] sm:$0xff]
    %v175 = vld [vmem:[#allocation5 + $0x1d8] sm:$0xff]
    %v176 = vld [vmem:[#allocation5 + $0x1e0] sm:$0xff]
    %v177 = vld [vmem:[#allocation5 + $0x1e8] sm:$0xff]
    %v178 = vld [vmem:[#allocation5 + $0x1f0] sm:$0xff]
    %v179 = vld [vmem:[#allocation5 + $0x1f8] sm:$0xff]
    %v180 = vld [vmem:[#allocation5 + $0x200] sm:$0xff]
    %v181 = vld [vmem:[#allocation5 + $0x208] sm:$0xff]
    %v182 = vld [vmem:[#allocation5 + $0x210] sm:$0xff]
    %v183 = vld [vmem:[#allocation5 + $0x218] sm:$0xff]
    %v184 = vld [vmem:[#allocation5 + $0x220] sm:$0xff]
    %v185 = vld [vmem:[#allocation5 + $0x228] sm:$0xff]
    %v186 = vld [vmem:[#allocation5 + $0x230] sm:$0xff]
    %v187 = vld [vmem:[#allocation5 + $0x238] sm:$0xff]
    %v188 = vld [vmem:[#allocation5 + $0x240] sm:$0xff]
    %v189 = vld [vmem:[#allocation5 + $0x248] sm:$0xff]
    %v190 = vld [vmem:[#allocation5 + $0x250] sm:$0xff]
    %v191 = vld [vmem:[#allocation5 + $0x258] sm:$0xff]
    %v192 = vld [vmem:[#allocation5 + $0x260] sm:$0xff]
    %v193 = vld [vmem:[#allocation5 + $0x268] sm:$0xff]
    %v194 = vld [vmem:[#allocation5 + $0x270] sm:$0xff]
    %v195 = vld [vmem:[#allocation5 + $0x278] sm:$0xff]
    %v196 = vld [vmem:[#allocation5 + $0x280] sm:$0xff]
    %v197 = vld [vmem:[#allocation5 + $0x288] sm:$0xff]
    %v198 = vld [vmem:[#allocation5 + $0x290] sm:$0xff]
    %v199 = vld [vmem:[#allocation5 + $0x298] sm:$0xff]
    %v200 = vld [vmem:[#allocation5 + $0x2a0] sm:$0xff]
    %v201 = vld [vmem:[#allocation5 + $0x2a8] sm:$0xff]
    %v202 = vld [vmem:[#allocation5 + $0x2b0] sm:$0xff]
    %v203 = vld [vmem:[#allocation5 + $0x2b8] sm:$0xff]
    %v204 = vld [vmem:[#allocation5 + $0x2c0] sm:$0xff]
    %v205 = vld [vmem:[#allocation5 + $0x2c8] sm:$0xff]
    %v206 = vld [vmem:[#allocation5 + $0x2d0] sm:$0xff]
    %v207 = vld [vmem:[#allocation5 + $0x2d8] sm:$0xff]
    %v208 = vld [vmem:[#allocation5 + $0x2e0] sm:$0xff]
    %v209 = vld [vmem:[#allocation5 + $0x2e8] sm:$0xff]
    %v210 = vld [vmem:[#allocation5 + $0x2f0] sm:$0xff]
    %v211 = vld [vmem:[#allocation5 + $0x2f8] sm:$0xff]
    %v212 = vld [vmem:[#allocation5 + $0x300] sm:$0xff]
    %v213 = vld [vmem:[#allocation5 + $0x308] sm:$0xff]
    %v214 = vld [vmem:[#allocation5 + $0x310] sm:$0xff]
    %v215 = vld [vmem:[#allocation5 + $0x318] sm:$0xff]
    %v216 = vld [vmem:[#allocation5 + $0x320] sm:$0xff]
    %v217 = vld [vmem:[#allocation5 + $0x328] sm:$0xff]
    %v218 = vld [vmem:[#allocation5 + $0x330] sm:$0xff]
    %v219 = vld [vmem:[#allocation5 + $0x338] sm:$0xff]
    %v220 = vld [vmem:[#allocation5 + $0x340] sm:$0xff]
    %v221 = vld [vmem:[#allocation5 + $0x348] sm:$0xff]
    %v222 = vld [vmem:[#allocation5 + $0x350] sm:$0xff]
    %v223 = vld [vmem:[#allocation5 + $0x358] sm:$0xff]
    %v224 = vld [vmem:[#allocation5 + $0x360] sm:$0xff]
    %v225 = vld [vmem:[#allocation5 + $0x368] sm:$0xff]
    %v226 = vld [vmem:[#allocation5 + $0x370] sm:$0xff]
    %v227 = vld [vmem:[#allocation5 + $0x378] sm:$0xff]
    %v228 = vld [vmem:[#allocation5 + $0x380] sm:$0xff]
    %v229 = vld [vmem:[#allocation5 + $0x388] sm:$0xff]
    %v230 = vld [vmem:[#allocation5 + $0x390] sm:$0xff]
    %v231 = vld [vmem:[#allocation5 + $0x398] sm:$0xff]
    %v232 = vld [vmem:[#allocation5 + $0x3a0] sm:$0xff]
    %v233 = vld [vmem:[#allocation5 + $0x3a8] sm:$0xff]
    %v234 = vld [vmem:[#allocation5 + $0x3b0] sm:$0xff]
    %v235 = vld [vmem:[#allocation5 + $0x3b8] sm:$0xff]
    %v236 = vld [vmem:[#allocation5 + $0x3c0] sm:$0xff]
    %v237 = vld [vmem:[#allocation5 + $0x3c8] sm:$0xff]
    %v238 = vld [vmem:[#allocation5 + $0x3d0] sm:$0xff]
    %v239 = vld [vmem:[#allocation5 + $0x3d8] sm:$0xff]
    %v240 = vld [vmem:[#allocation5 + $0x3e0] sm:$0xff]
    %v241 = vld [vmem:[#allocation5 + $0x3e8] sm:$0xff]
    %v242 = vld [vmem:[#allocation5 + $0x3f0] sm:$0xff]
    %v243 = vld [vmem:[#allocation5 + $0x3f8] sm:$0xff]
    %v244 = vld [vmem:[#allocation5 + $0x400] sm:$0xff]
    %v245 = vld [vmem:[#allocation5 + $0x408] sm:$0xff]
    %v246 = vld [vmem:[#allocation5 + $0x410] sm:$0xff]
    %v247 = vld [vmem:[#allocation5 + $0x418] sm:$0xff]
    %v248 = vld [vmem:[#allocation5 + $0x420] sm:$0xff]
    %v249 = vld [vmem:[#allocation5 + $0x428] sm:$0xff]
    %v250 = vld [vmem:[#allocation5 + $0x430] sm:$0xff]
    %v251 = vld [vmem:[#allocation5 + $0x438] sm:$0xff]
    %v252 = vld [vmem:[#allocation5 + $0x440] sm:$0xff]
    %v253 = vld [vmem:[#allocation5 + $0x448] sm:$0xff]
    %v254 = vld [vmem:[#allocation5 + $0x450] sm:$0xff]
    %v255 = vld [vmem:[#allocation5 + $0x458] sm:$0xff]
    %v256 = vld [vmem:[#allocation5 + $0x460] sm:$0xff]
    %v257 = vld [vmem:[#allocation5 + $0x468] sm:$0xff]
    %v258 = vld [vmem:[#allocation5 + $0x470] sm:$0xff]
    %v259 = vld [vmem:[#allocation5 + $0x478] sm:$0xff]
    %v260 = vld [vmem:[#allocation5 + $0x480] sm:$0xff]
    %v261 = vld [vmem:[#allocation5 + $0x488] sm:$0xff]
    %v262 = vld [vmem:[#allocation5 + $0x490] sm:$0xff]
    %v263 = vld [vmem:[#allocation5 + $0x498] sm:$0xff]
    %v264 = vld [vmem:[#allocation5 + $0x4a0] sm:$0xff]
    %v265 = vld [vmem:[#allocation5 + $0x4a8] sm:$0xff]
    %v266 = vld [vmem:[#allocation5 + $0x4b0] sm:$0xff]
    %v267 = vld [vmem:[#allocation5 + $0x4b8] sm:$0xff]
    %v268 = vld [vmem:[#allocation5 + $0x4c0] sm:$0xff]
    %v269 = vld [vmem:[#allocation5 + $0x4c8] sm:$0xff]
    %v270 = vld [vmem:[#allocation5 + $0x4d0] sm:$0xff]
    %v271 = vld [vmem:[#allocation5 + $0x4d8] sm:$0xff]
    %v272 = vld [vmem:[#allocation5 + $0x4e0] sm:$0xff]
    %v273 = vld [vmem:[#allocation5 + $0x4e8] sm:$0xff]
    %v274 = vld [vmem:[#allocation5 + $0x4f0] sm:$0xff]
    %v275 = vld [vmem:[#allocation5 + $0x4f8] sm:$0xff]
    %v276 = vld [vmem:[#allocation5 + $0x500] sm:$0xff]
    %v277 = vld [vmem:[#allocation5 + $0x508] sm:$0xff]
    %v278 = vld [vmem:[#allocation5 + $0x510] sm:$0xff]
    %v279 = vld [vmem:[#allocation5 + $0x518] sm:$0xff]
    %v280 = vld [vmem:[#allocation5 + $0x520] sm:$0xff]
    %v281 = vld [vmem:[#allocation5 + $0x528] sm:$0xff]
    %v282 = vld [vmem:[#allocation5 + $0x530] sm:$0xff]
    %v283 = vld [vmem:[#allocation5 + $0x538] sm:$0xff]
    %v284 = vld [vmem:[#allocation5 + $0x540] sm:$0xff]
    %v285 = vld [vmem:[#allocation5 + $0x548] sm:$0xff]
    %v286 = vld [vmem:[#allocation5 + $0x550] sm:$0xff]
    %v287 = vld [vmem:[#allocation5 + $0x558] sm:$0xff]
    %v288 = vld [vmem:[#allocation5 + $0x560] sm:$0xff]
    %v289 = vld [vmem:[#allocation5 + $0x568] sm:$0xff]
    %v290 = vld [vmem:[#allocation5 + $0x570] sm:$0xff]
    %v291 = vld [vmem:[#allocation5 + $0x578] sm:$0xff]
    %v292 = vld [vmem:[#allocation5 + $0x580] sm:$0xff]
    %v293 = vld [vmem:[#allocation5 + $0x588] sm:$0xff]
    %v294 = vld [vmem:[#allocation5 + $0x590] sm:$0xff]
    %v295 = vld [vmem:[#allocation5 + $0x598] sm:$0xff]
    %v296 = vld [vmem:[#allocation5 + $0x5a0] sm:$0xff]
    %v297 = vld [vmem:[#allocation5 + $0x5a8] sm:$0xff]
    %v298 = vld [vmem:[#allocation5 + $0x5b0] sm:$0xff]
    %v299 = vld [vmem:[#allocation5 + $0x5b8] sm:$0xff]
    %v300 = vld [vmem:[#allocation5 + $0x5c0] sm:$0xff]
    %v301 = vld [vmem:[#allocation5 + $0x5c8] sm:$0xff]
    %v302 = vld [vmem:[#allocation5 + $0x5d0] sm:$0xff]
    %v303 = vld [vmem:[#allocation5 + $0x5d8] sm:$0xff]
    %v304 = vld [vmem:[#allocation5 + $0x5e0] sm:$0xff]
    %v305 = vld [vmem:[#allocation5 + $0x5e8] sm:$0xff]
    %v306 = vld [vmem:[#allocation5 + $0x5f0] sm:$0xff]
    %v307 = vld [vmem:[#allocation5 + $0x5f8] sm:$0xff]
    %v308 = vld [vmem:[#allocation5 + $0x600] sm:$0xff]
    %v309 = vld [vmem:[#allocation5 + $0x608] sm:$0xff]
    %v310 = vld [vmem:[#allocation5 + $0x610] sm:$0xff]
    %v311 = vld [vmem:[#allocation5 + $0x618] sm:$0xff]
    %v312 = vld [vmem:[#allocation5 + $0x620] sm:$0xff]
    %v313 = vld [vmem:[#allocation5 + $0x628] sm:$0xff]
    %v314 = vld [vmem:[#allocation5 + $0x630] sm:$0xff]
    %v315 = vld [vmem:[#allocation5 + $0x638] sm:$0xff]
    %v316 = vld [vmem:[#allocation5 + $0x640] sm:$0xff]
    %v317 = vld [vmem:[#allocation5 + $0x648] sm:$0xff]
    %v318 = vld [vmem:[#allocation5 + $0x650] sm:$0xff]
    %v319 = vld [vmem:[#allocation5 + $0x658] sm:$0xff]
    %v320 = vld [vmem:[#allocation5 + $0x660] sm:$0xff]
    %v321 = vld [vmem:[#allocation5 + $0x668] sm:$0xff]
    %v322 = vld [vmem:[#allocation5 + $0x670] sm:$0xff]
    %v323 = vld [vmem:[#allocation5 + $0x678] sm:$0xff]
    %v324 = vld [vmem:[#allocation5 + $0x680] sm:$0xff]
    %v325 = vld [vmem:[#allocation5 + $0x688] sm:$0xff]
    %v326 = vld [vmem:[#allocation5 + $0x690] sm:$0xff]
    %v327 = vld [vmem:[#allocation5 + $0x698] sm:$0xff]
    %v328 = vld [vmem:[#allocation5 + $0x6a0] sm:$0xff]
    %v329 = vld [vmem:[#allocation5 + $0x6a8] sm:$0xff]
    %v330 = vld [vmem:[#allocation5 + $0x6b0] sm:$0xff]
    %v331 = vld [vmem:[#allocation5 + $0x6b8] sm:$0xff]
    %v332 = vld [vmem:[#allocation5 + $0x6c0] sm:$0xff]
    %v333 = vld [vmem:[#allocation5 + $0x6c8] sm:$0xff]
    %v334 = vld [vmem:[#allocation5 + $0x6d0] sm:$0xff]
    %v335 = vld [vmem:[#allocation5 + $0x6d8] sm:$0xff]
    %v336 = vld [vmem:[#allocation5 + $0x6e0] sm:$0xff]
    %v337 = vld [vmem:[#allocation5 + $0x6e8] sm:$0xff]
    %v338 = vld [vmem:[#allocation5 + $0x6f0] sm:$0xff]
    %v339 = vld [vmem:[#allocation5 + $0x6f8] sm:$0xff]
    %v340 = vld [vmem:[#allocation5 + $0x700] sm:$0xff]
    %v341 = vld [vmem:[#allocation5 + $0x708] sm:$0xff]
    %v342 = vld [vmem:[#allocation5 + $0x710] sm:$0xff]
    %v343 = vld [vmem:[#allocation5 + $0x718] sm:$0xff]
    %v344 = vld [vmem:[#allocation5 + $0x720] sm:$0xff]
    %v345 = vld [vmem:[#allocation5 + $0x728] sm:$0xff]
    %v346 = vld [vmem:[#allocation5 + $0x730] sm:$0xff]
    %v347 = vld [vmem:[#allocation5 + $0x738] sm:$0xff]
    %v348 = vld [vmem:[#allocation5 + $0x740] sm:$0xff]
    %v349 = vld [vmem:[#allocation5 + $0x748] sm:$0xff]
    %v350 = vld [vmem:[#allocation5 + $0x750] sm:$0xff]
    %v351 = vld [vmem:[#allocation5 + $0x758] sm:$0xff]
    %v352 = vld [vmem:[#allocation5 + $0x760] sm:$0xff]
    %v353 = vld [vmem:[#allocation5 + $0x768] sm:$0xff]
    %v354 = vld [vmem:[#allocation5 + $0x770] sm:$0xff]
    %v355 = vld [vmem:[#allocation5 + $0x778] sm:$0xff]
    %v356 = vld [vmem:[#allocation5 + $0x780] sm:$0xff]
    %v357 = vld [vmem:[#allocation5 + $0x788] sm:$0xff]
    %v358 = vld [vmem:[#allocation5 + $0x790] sm:$0xff]
    %v359 = vld [vmem:[#allocation5 + $0x798] sm:$0xff]
    %v360 = vld [vmem:[#allocation5 + $0x7a0] sm:$0xff]
    %v361 = vld [vmem:[#allocation5 + $0x7a8] sm:$0xff]
    %v362 = vld [vmem:[#allocation5 + $0x7b0] sm:$0xff]
    %v363 = vld [vmem:[#allocation5 + $0x7b8] sm:$0xff]
    %v364 = vld [vmem:[#allocation5 + $0x7c0] sm:$0xff]
    %v365 = vld [vmem:[#allocation5 + $0x7c8] sm:$0xff]
    %v366 = vld [vmem:[#allocation5 + $0x7d0] sm:$0xff]
    %v367 = vld [vmem:[#allocation5 + $0x7d8] sm:$0xff]
    %v368 = vld [vmem:[#allocation5 + $0x7e0] sm:$0xff]
    %v369 = vld [vmem:[#allocation5 + $0x7e8] sm:$0xff]
    %v370 = vld [vmem:[#allocation5 + $0x7f0] sm:$0xff]
    %v371 = vld [vmem:[#allocation5 + $0x7f8] sm:$0xff]
    %v372 = vld [vmem:[#allocation5 + $0x800] sm:$0xff]
    %v373 = vld [vmem:[#allocation5 + $0x808] sm:$0xff]
    %v374 = vld [vmem:[#allocation5 + $0x810] sm:$0xff]
    %v375 = vld [vmem:[#allocation5 + $0x818] sm:$0xff]
    %v376 = vld [vmem:[#allocation5 + $0x820] sm:$0xff]
    %v377 = vld [vmem:[#allocation5 + $0x828] sm:$0xff]
    %v378 = vld [vmem:[#allocation5 + $0x830] sm:$0xff]
    %v379 = vld [vmem:[#allocation5 + $0x838] sm:$0xff]
    %v380 = vld [vmem:[#allocation5 + $0x840] sm:$0xff]
    %v381 = vld [vmem:[#allocation5 + $0x848] sm:$0xff]
    %v382 = vld [vmem:[#allocation5 + $0x850] sm:$0xff]
    %v383 = vld [vmem:[#allocation5 + $0x858] sm:$0xff]
    %v384 = vld [vmem:[#allocation5 + $0x860] sm:$0xff]
    %v385 = vld [vmem:[#allocation5 + $0x868] sm:$0xff]
    %v386 = vld [vmem:[#allocation5 + $0x870] sm:$0xff]
    %v387 = vld [vmem:[#allocation5 + $0x878] sm:$0xff]
    %v388 = vld [vmem:[#allocation5 + $0x880] sm:$0xff]
    %v389 = vld [vmem:[#allocation5 + $0x888] sm:$0xff]
    %v390 = vld [vmem:[#allocation5 + $0x890] sm:$0xff]
    %v391 = vld [vmem:[#allocation5 + $0x898] sm:$0xff]
    %v392 = vld [vmem:[#allocation5 + $0x8a0] sm:$0xff]
    %v393 = vld [vmem:[#allocation5 + $0x8a8] sm:$0xff]
    %v394 = vld [vmem:[#allocation5 + $0x8b0] sm:$0xff]
    %v395 = vld [vmem:[#allocation5 + $0x8b8] sm:$0xff]
    %v396 = vld [vmem:[#allocation5 + $0x8c0] sm:$0xff]
    %v397 = vld [vmem:[#allocation5 + $0x8c8] sm:$0xff]
    %v398 = vld [vmem:[#allocation5 + $0x8d0] sm:$0xff]
    %v399 = vld [vmem:[#allocation5 + $0x8d8] sm:$0xff]
    %v400 = vld [vmem:[#allocation5 + $0x8e0] sm:$0xff]
    %v401 = vld [vmem:[#allocation5 + $0x8e8] sm:$0xff]
    %v402 = vld [vmem:[#allocation5 + $0x8f0] sm:$0xff]
    %v403 = vld [vmem:[#allocation5 + $0x8f8] sm:$0xff]
    %v404 = vld [vmem:[#allocation5 + $0x900] sm:$0xff]
    %v405 = vld [vmem:[#allocation5 + $0x908] sm:$0xff]
    %v406 = vld [vmem:[#allocation5 + $0x910] sm:$0xff]
    %v407 = vld [vmem:[#allocation5 + $0x918] sm:$0xff]
    %v408 = vld [vmem:[#allocation5 + $0x920] sm:$0xff]
    %v409 = vld [vmem:[#allocation5 + $0x928] sm:$0xff]
    %v410 = vld [vmem:[#allocation5 + $0x930] sm:$0xff]
    %v411 = vld [vmem:[#allocation5 + $0x938] sm:$0xff]
    %v412 = vld [vmem:[#allocation5 + $0x940] sm:$0xff]
    %v413 = vld [vmem:[#allocation5 + $0x948] sm:$0xff]
    %v414 = vld [vmem:[#allocation5 + $0x950] sm:$0xff]
    %v415 = vld [vmem:[#allocation5 + $0x958] sm:$0xff]
    %v416 = vld [vmem:[#allocation5 + $0x960] sm:$0xff]
    %v417 = vld [vmem:[#allocation5 + $0x968] sm:$0xff]
    %v418 = vld [vmem:[#allocation5 + $0x970] sm:$0xff]
    %v419 = vld [vmem:[#allocation5 + $0x978] sm:$0xff]
    %v420 = vld [vmem:[#allocation5 + $0x980] sm:$0xff]
    %v421 = vld [vmem:[#allocation5 + $0x988] sm:$0xff]
    %v422 = vld [vmem:[#allocation5 + $0x990] sm:$0xff]
    %v423 = vld [vmem:[#allocation5 + $0x998] sm:$0xff]
    %v424 = vld [vmem:[#allocation5 + $0x9a0] sm:$0xff]
    %v425 = vld [vmem:[#allocation5 + $0x9a8] sm:$0xff]
    %v426 = vld [vmem:[#allocation5 + $0x9b0] sm:$0xff]
    %v427 = vld [vmem:[#allocation5 + $0x9b8] sm:$0xff]
    %v428 = vld [vmem:[#allocation5 + $0x9c0] sm:$0xff]
    %v429 = vld [vmem:[#allocation5 + $0x9c8] sm:$0xff]
    %v430 = vld [vmem:[#allocation5 + $0x9d0] sm:$0xff]
    %v431 = vld [vmem:[#allocation5 + $0x9d8] sm:$0xff]
    %v432 = vld [vmem:[#allocation5 + $0x9e0] sm:$0xff]
    %v433 = vld [vmem:[#allocation5 + $0x9e8] sm:$0xff]
    %v434 = vld [vmem:[#allocation5 + $0x9f0] sm:$0xff]
    %v435 = vld [vmem:[#allocation5 + $0x9f8] sm:$0xff]
    %v436 = vld [vmem:[#allocation5 + $0xa00] sm:$0xff]
    %v437 = vld [vmem:[#allocation5 + $0xa08] sm:$0xff]
    %v438 = vld [vmem:[#allocation5 + $0xa10] sm:$0xff]
    %v439 = vld [vmem:[#allocation5 + $0xa18] sm:$0xff]
    %v440 = vld [vmem:[#allocation5 + $0xa20] sm:$0xff]
    %v441 = vld [vmem:[#allocation5 + $0xa28] sm:$0xff]
    %v442 = vld [vmem:[#allocation5 + $0xa30] sm:$0xff]
    %v443 = vld [vmem:[#allocation5 + $0xa38] sm:$0xff]
    %v444 = vld [vmem:[#allocation5 + $0xa40] sm:$0xff]
    %v445 = vld [vmem:[#allocation5 + $0xa48] sm:$0xff]
    %v446 = vld [vmem:[#allocation5 + $0xa50] sm:$0xff]
    %v447 = vld [vmem:[#allocation5 + $0xa58] sm:$0xff]
    %v448 = vld [vmem:[#allocation5 + $0xa60] sm:$0xff]
    %v449 = vld [vmem:[#allocation5 + $0xa68] sm:$0xff]
    %v450 = vld [vmem:[#allocation5 + $0xa70] sm:$0xff]
    %v451 = vld [vmem:[#allocation5 + $0xa78] sm:$0xff]
    %v452 = vld [vmem:[#allocation5 + $0xa80] sm:$0xff]
    %v453 = vld [vmem:[#allocation5 + $0xa88] sm:$0xff]
    %v454 = vld [vmem:[#allocation5 + $0xa90] sm:$0xff]
    %v455 = vld [vmem:[#allocation5 + $0xa98] sm:$0xff]
    %v456 = vld [vmem:[#allocation5 + $0xaa0] sm:$0xff]
    %v457 = vld [vmem:[#allocation5 + $0xaa8] sm:$0xff]
    %v458 = vld [vmem:[#allocation5 + $0xab0] sm:$0xff]
    %v459 = vld [vmem:[#allocation5 + $0xab8] sm:$0xff]
    %v460 = vld [vmem:[#allocation5 + $0xac0] sm:$0xff]
    %v461 = vld [vmem:[#allocation5 + $0xac8] sm:$0xff]
    %v462 = vld [vmem:[#allocation5 + $0xad0] sm:$0xff]
    %v463 = vld [vmem:[#allocation5 + $0xad8] sm:$0xff]
    %v464 = vld [vmem:[#allocation5 + $0xae0] sm:$0xff]
    %v465 = vld [vmem:[#allocation5 + $0xae8] sm:$0xff]
    %v466 = vld [vmem:[#allocation5 + $0xaf0] sm:$0xff]
    %v467 = vld [vmem:[#allocation5 + $0xaf8] sm:$0xff]
    %v468 = vld [vmem:[#allocation5 + $0xb00] sm:$0xff]
    %v469 = vld [vmem:[#allocation5 + $0xb08] sm:$0xff]
    %v470 = vld [vmem:[#allocation5 + $0xb10] sm:$0xff]
    %v471 = vld [vmem:[#allocation5 + $0xb18] sm:$0xff]
    %v472 = vld [vmem:[#allocation5 + $0xb20] sm:$0xff]
    %v473 = vld [vmem:[#allocation5 + $0xb28] sm:$0xff]
    %v474 = vld [vmem:[#allocation5 + $0xb30] sm:$0xff]
    %v475 = vld [vmem:[#allocation5 + $0xb38] sm:$0xff]
    %v476 = vld [vmem:[#allocation5 + $0xb40] sm:$0xff]
    %v477 = vld [vmem:[#allocation5 + $0xb48] sm:$0xff]
    %v478 = vld [vmem:[#allocation5 + $0xb50] sm:$0xff]
    %v479 = vld [vmem:[#allocation5 + $0xb58] sm:$0xff]
    %v480 = vld [vmem:[#allocation5 + $0xb60] sm:$0xff]
    %v481 = vld [vmem:[#allocation5 + $0xb68] sm:$0xff]
    %v482 = vld [vmem:[#allocation5 + $0xb70] sm:$0xff]
    %v483 = vld [vmem:[#allocation5 + $0xb78] sm:$0xff]
    %v484 = vld [vmem:[#allocation5 + $0xb80] sm:$0xff]
    %v485 = vld [vmem:[#allocation5 + $0xb88] sm:$0xff]
    %v486 = vld [vmem:[#allocation5 + $0xb90] sm:$0xff]
    %v487 = vld [vmem:[#allocation5 + $0xb98] sm:$0xff]
    %v488 = vld [vmem:[#allocation5 + $0xba0] sm:$0xff]
    %v489 = vld [vmem:[#allocation5 + $0xba8] sm:$0xff]
    %v490 = vld [vmem:[#allocation5 + $0xbb0] sm:$0xff]
    %v491 = vld [vmem:[#allocation5 + $0xbb8] sm:$0xff]
    %v492 = vld [vmem:[#allocation5 + $0xbc0] sm:$0xff]
    %v493 = vld [vmem:[#allocation5 + $0xbc8] sm:$0xff]
    %v494 = vld [vmem:[#allocation5 + $0xbd0] sm:$0xff]
    %v495 = vld [vmem:[#allocation5 + $0xbd8] sm:$0xff]
    %v496 = vld [vmem:[#allocation5 + $0xbe0] sm:$0xff]
    %v497 = vld [vmem:[#allocation5 + $0xbe8] sm:$0xff]
    %v498 = vld [vmem:[#allocation5 + $0xbf0] sm:$0xff]
    %v499 = vld [vmem:[#allocation5 + $0xbf8] sm:$0xff]
    %v500 = vld [vmem:[#allocation7] sm:$0xff]
    %v502 = vlaneseq
    %v503 = vshrl.u32 %v502, 7
    %v504 = vsub.s32 0, %v503
    %v505 = vrot.slane %v500, %v504
    %v506 = vlaneseq
    %v507 = vshrl.u32 %v506, 7
    %v508 = vsub.s32 1, %v507
    %v509 = vrot.slane %v500, %v508
    %v510 = vlaneseq
    %v511 = vshrl.u32 %v510, 7
    %v512 = vsub.s32 2, %v511
    %v513 = vrot.slane %v500, %v512
    %v514 = vlaneseq
    %v515 = vshrl.u32 %v514, 7
    %v516 = vsub.s32 3, %v515
    %v517 = vrot.slane %v500, %v516
    %v518 = vlaneseq
    %v519 = vshrl.u32 %v518, 7
    %v520 = vsub.s32 4, %v519
    %v521 = vrot.slane %v500, %v520
    %v522 = vlaneseq
    %v523 = vshrl.u32 %v522, 7
    %v524 = vsub.s32 5, %v523
    %v525 = vrot.slane %v500, %v524
    %v526 = vlaneseq
    %v527 = vshrl.u32 %v526, 7
    %v528 = vsub.s32 6, %v527
    %v529 = vrot.slane %v500, %v528
    %v530 = vlaneseq
    %v531 = vshrl.u32 %v530, 7
    %v532 = vsub.s32 7, %v531
    %v533 = vrot.slane %v500, %v532
    %v545 = vunpack.c.l.b16 %v113
    %v546 = vunpack.c.h.b16 %v113
    %v547 = vunpack.c.l.b16 %v114
    %v548 = vunpack.c.h.b16 %v114
    %v549 = vunpack.c.l.b16 %v115
    %v550 = vunpack.c.h.b16 %v115
    %v551 = vpack.c.b16 %v545, %v545
    %v552 = vpack.c.b16 %v546, %v546
    %v553 = vpack.c.b16 %v547, %v547
    %v554 = vpack.c.b16 %v548, %v548
    %v555 = vpack.c.b16 %v549, %v549
    %v556 = vpack.c.b16 %v550, %v550
    %v947 = vunpack.c.l.b16 %v116
    %v948 = vunpack.c.h.b16 %v116
    %v949 = vunpack.c.l.b16 %v117
    %v950 = vunpack.c.h.b16 %v117
    %v951 = vunpack.c.l.b16 %v118
    %v952 = vunpack.c.h.b16 %v118
    %v953 = vunpack.c.l.b16 %v119
    %v954 = vunpack.c.h.b16 %v119
    %v955 = vunpack.c.l.b16 %v120
    %v956 = vunpack.c.h.b16 %v120
    %v957 = vunpack.c.l.b16 %v121
    %v958 = vunpack.c.h.b16 %v121
    %v959 = vunpack.c.l.b16 %v122
    %v960 = vunpack.c.h.b16 %v122
    %v961 = vunpack.c.l.b16 %v123
    %v962 = vunpack.c.h.b16 %v123
    %v963 = vunpack.c.l.b16 %v124
    %v964 = vunpack.c.h.b16 %v124
    %v965 = vunpack.c.l.b16 %v125
    %v966 = vunpack.c.h.b16 %v125
    %v967 = vunpack.c.l.b16 %v126
    %v968 = vunpack.c.h.b16 %v126
    %v969 = vunpack.c.l.b16 %v127
    %v970 = vunpack.c.h.b16 %v127
    %v971 = vunpack.c.l.b16 %v128
    %v972 = vunpack.c.h.b16 %v128
    %v973 = vunpack.c.l.b16 %v129
    %v974 = vunpack.c.h.b16 %v129
    %v975 = vunpack.c.l.b16 %v130
    %v976 = vunpack.c.h.b16 %v130
    %v977 = vunpack.c.l.b16 %v131
    %v978 = vunpack.c.h.b16 %v131
    %v979 = vunpack.c.l.b16 %v132
    %v980 = vunpack.c.h.b16 %v132
    %v981 = vunpack.c.l.b16 %v133
    %v982 = vunpack.c.h.b16 %v133
    %v983 = vunpack.c.l.b16 %v134
    %v984 = vunpack.c.h.b16 %v134
    %v985 = vunpack.c.l.b16 %v135
    %v986 = vunpack.c.h.b16 %v135
    %v987 = vunpack.c.l.b16 %v136
    %v988 = vunpack.c.h.b16 %v136
    %v989 = vunpack.c.l.b16 %v137
    %v990 = vunpack.c.h.b16 %v137
    %v991 = vunpack.c.l.b16 %v138
    %v992 = vunpack.c.h.b16 %v138
    %v993 = vunpack.c.l.b16 %v139
    %v994 = vunpack.c.h.b16 %v139
    %v995 = vunpack.c.l.b16 %v140
    %v996 = vunpack.c.h.b16 %v140
    %v997 = vunpack.c.l.b16 %v141
    %v998 = vunpack.c.h.b16 %v141
    %v999 = vunpack.c.l.b16 %v142
    %v1000 = vunpack.c.h.b16 %v142
    %v1001 = vunpack.c.l.b16 %v143
    %v1002 = vunpack.c.h.b16 %v143
    %v1003 = vunpack.c.l.b16 %v144
    %v1004 = vunpack.c.h.b16 %v144
    %v1005 = vunpack.c.l.b16 %v145
    %v1006 = vunpack.c.h.b16 %v145
    %v1007 = vunpack.c.l.b16 %v146
    %v1008 = vunpack.c.h.b16 %v146
    %v1009 = vunpack.c.l.b16 %v147
    %v1010 = vunpack.c.h.b16 %v147
    %v1011 = vunpack.c.l.b16 %v148
    %v1012 = vunpack.c.h.b16 %v148
    %v1013 = vunpack.c.l.b16 %v149
    %v1014 = vunpack.c.h.b16 %v149
    %v1015 = vunpack.c.l.b16 %v150
    %v1016 = vunpack.c.h.b16 %v150
    %v1017 = vunpack.c.l.b16 %v151
    %v1018 = vunpack.c.h.b16 %v151
    %v1019 = vunpack.c.l.b16 %v152
    %v1020 = vunpack.c.h.b16 %v152
    %v1021 = vunpack.c.l.b16 %v153
    %v1022 = vunpack.c.h.b16 %v153
    %v1023 = vunpack.c.l.b16 %v154
    %v1024 = vunpack.c.h.b16 %v154
    %v1025 = vunpack.c.l.b16 %v155
    %v1026 = vunpack.c.h.b16 %v155
    %v1027 = vunpack.c.l.b16 %v156
    %v1028 = vunpack.c.h.b16 %v156
    %v1029 = vunpack.c.l.b16 %v157
    %v1030 = vunpack.c.h.b16 %v157
    %v1031 = vunpack.c.l.b16 %v158
    %v1032 = vunpack.c.h.b16 %v158
    %v1033 = vunpack.c.l.b16 %v159
    %v1034 = vunpack.c.h.b16 %v159
    %v1035 = vunpack.c.l.b16 %v160
    %v1036 = vunpack.c.h.b16 %v160
    %v1037 = vunpack.c.l.b16 %v161
    %v1038 = vunpack.c.h.b16 %v161
    %v1039 = vunpack.c.l.b16 %v162
    %v1040 = vunpack.c.h.b16 %v162
    %v1041 = vunpack.c.l.b16 %v163
    %v1042 = vunpack.c.h.b16 %v163
    %v1043 = vunpack.c.l.b16 %v164
    %v1044 = vunpack.c.h.b16 %v164
    %v1045 = vunpack.c.l.b16 %v165
    %v1046 = vunpack.c.h.b16 %v165
    %v1047 = vunpack.c.l.b16 %v166
    %v1048 = vunpack.c.h.b16 %v166
    %v1049 = vunpack.c.l.b16 %v167
    %v1050 = vunpack.c.h.b16 %v167
    %v1051 = vunpack.c.l.b16 %v168
    %v1052 = vunpack.c.h.b16 %v168
    %v1053 = vunpack.c.l.b16 %v169
    %v1054 = vunpack.c.h.b16 %v169
    %v1055 = vunpack.c.l.b16 %v170
    %v1056 = vunpack.c.h.b16 %v170
    %v1057 = vunpack.c.l.b16 %v171
    %v1058 = vunpack.c.h.b16 %v171
    %v1059 = vunpack.c.l.b16 %v172
    %v1060 = vunpack.c.h.b16 %v172
    %v1061 = vunpack.c.l.b16 %v173
    %v1062 = vunpack.c.h.b16 %v173
    %v1063 = vunpack.c.l.b16 %v174
    %v1064 = vunpack.c.h.b16 %v174
    %v1065 = vunpack.c.l.b16 %v175
    %v1066 = vunpack.c.h.b16 %v175
    %v1067 = vunpack.c.l.b16 %v176
    %v1068 = vunpack.c.h.b16 %v176
    %v1069 = vunpack.c.l.b16 %v177
    %v1070 = vunpack.c.h.b16 %v177
    %v1071 = vunpack.c.l.b16 %v178
    %v1072 = vunpack.c.h.b16 %v178
    %v1073 = vunpack.c.l.b16 %v179
    %v1074 = vunpack.c.h.b16 %v179
    %v1075 = vunpack.c.l.b16 %v180
    %v1076 = vunpack.c.h.b16 %v180
    %v1077 = vunpack.c.l.b16 %v181
    %v1078 = vunpack.c.h.b16 %v181
    %v1079 = vunpack.c.l.b16 %v182
    %v1080 = vunpack.c.h.b16 %v182
    %v1081 = vunpack.c.l.b16 %v183
    %v1082 = vunpack.c.h.b16 %v183
    %v1083 = vunpack.c.l.b16 %v184
    %v1084 = vunpack.c.h.b16 %v184
    %v1085 = vunpack.c.l.b16 %v185
    %v1086 = vunpack.c.h.b16 %v185
    %v1087 = vunpack.c.l.b16 %v186
    %v1088 = vunpack.c.h.b16 %v186
    %v1089 = vunpack.c.l.b16 %v187
    %v1090 = vunpack.c.h.b16 %v187
    %v1091 = vunpack.c.l.b16 %v188
    %v1092 = vunpack.c.h.b16 %v188
    %v1093 = vunpack.c.l.b16 %v189
    %v1094 = vunpack.c.h.b16 %v189
    %v1095 = vunpack.c.l.b16 %v190
    %v1096 = vunpack.c.h.b16 %v190
    %v1097 = vunpack.c.l.b16 %v191
    %v1098 = vunpack.c.h.b16 %v191
    %v1099 = vunpack.c.l.b16 %v192
    %v1100 = vunpack.c.h.b16 %v192
    %v1101 = vunpack.c.l.b16 %v193
    %v1102 = vunpack.c.h.b16 %v193
    %v1103 = vunpack.c.l.b16 %v194
    %v1104 = vunpack.c.h.b16 %v194
    %v1105 = vunpack.c.l.b16 %v195
    %v1106 = vunpack.c.h.b16 %v195
    %v1107 = vunpack.c.l.b16 %v196
    %v1108 = vunpack.c.h.b16 %v196
    %v1109 = vunpack.c.l.b16 %v197
    %v1110 = vunpack.c.h.b16 %v197
    %v1111 = vunpack.c.l.b16 %v198
    %v1112 = vunpack.c.h.b16 %v198
    %v1113 = vunpack.c.l.b16 %v199
    %v1114 = vunpack.c.h.b16 %v199
    %v1115 = vunpack.c.l.b16 %v200
    %v1116 = vunpack.c.h.b16 %v200
    %v1117 = vunpack.c.l.b16 %v201
    %v1118 = vunpack.c.h.b16 %v201
    %v1119 = vunpack.c.l.b16 %v202
    %v1120 = vunpack.c.h.b16 %v202
    %v1121 = vunpack.c.l.b16 %v203
    %v1122 = vunpack.c.h.b16 %v203
    %v1123 = vunpack.c.l.b16 %v204
    %v1124 = vunpack.c.h.b16 %v204
    %v1125 = vunpack.c.l.b16 %v205
    %v1126 = vunpack.c.h.b16 %v205
    %v1127 = vunpack.c.l.b16 %v206
    %v1128 = vunpack.c.h.b16 %v206
    %v1129 = vunpack.c.l.b16 %v207
    %v1130 = vunpack.c.h.b16 %v207
    %v1131 = vunpack.c.l.b16 %v208
    %v1132 = vunpack.c.h.b16 %v208
    %v1133 = vunpack.c.l.b16 %v209
    %v1134 = vunpack.c.h.b16 %v209
    %v1135 = vunpack.c.l.b16 %v210
    %v1136 = vunpack.c.h.b16 %v210
    %v1137 = vunpack.c.l.b16 %v211
    %v1138 = vunpack.c.h.b16 %v211
    %v1139 = vunpack.c.l.b16 %v212
    %v1140 = vunpack.c.h.b16 %v212
    %v1141 = vunpack.c.l.b16 %v213
    %v1142 = vunpack.c.h.b16 %v213
    %v1143 = vunpack.c.l.b16 %v214
    %v1144 = vunpack.c.h.b16 %v214
    %v1145 = vunpack.c.l.b16 %v215
    %v1146 = vunpack.c.h.b16 %v215
    %v1147 = vunpack.c.l.b16 %v216
    %v1148 = vunpack.c.h.b16 %v216
    %v1149 = vunpack.c.l.b16 %v217
    %v1150 = vunpack.c.h.b16 %v217
    %v1151 = vunpack.c.l.b16 %v218
    %v1152 = vunpack.c.h.b16 %v218
    %v1153 = vunpack.c.l.b16 %v219
    %v1154 = vunpack.c.h.b16 %v219
    %v1155 = vunpack.c.l.b16 %v220
    %v1156 = vunpack.c.h.b16 %v220
    %v1157 = vunpack.c.l.b16 %v221
    %v1158 = vunpack.c.h.b16 %v221
    %v1159 = vunpack.c.l.b16 %v222
    %v1160 = vunpack.c.h.b16 %v222
    %v1161 = vunpack.c.l.b16 %v223
    %v1162 = vunpack.c.h.b16 %v223
    %v1163 = vunpack.c.l.b16 %v224
    %v1164 = vunpack.c.h.b16 %v224
    %v1165 = vunpack.c.l.b16 %v225
    %v1166 = vunpack.c.h.b16 %v225
    %v1167 = vunpack.c.l.b16 %v226
    %v1168 = vunpack.c.h.b16 %v226
    %v1169 = vunpack.c.l.b16 %v227
    %v1170 = vunpack.c.h.b16 %v227
    %v1171 = vunpack.c.l.b16 %v228
    %v1172 = vunpack.c.h.b16 %v228
    %v1173 = vunpack.c.l.b16 %v229
    %v1174 = vunpack.c.h.b16 %v229
    %v1175 = vunpack.c.l.b16 %v230
    %v1176 = vunpack.c.h.b16 %v230
    %v1177 = vunpack.c.l.b16 %v231
    %v1178 = vunpack.c.h.b16 %v231
    %v1179 = vunpack.c.l.b16 %v232
    %v1180 = vunpack.c.h.b16 %v232
    %v1181 = vunpack.c.l.b16 %v233
    %v1182 = vunpack.c.h.b16 %v233
    %v1183 = vunpack.c.l.b16 %v234
    %v1184 = vunpack.c.h.b16 %v234
    %v1185 = vunpack.c.l.b16 %v235
    %v1186 = vunpack.c.h.b16 %v235
    %v1187 = vunpack.c.l.b16 %v236
    %v1188 = vunpack.c.h.b16 %v236
    %v1189 = vunpack.c.l.b16 %v237
    %v1190 = vunpack.c.h.b16 %v237
    %v1191 = vunpack.c.l.b16 %v238
    %v1192 = vunpack.c.h.b16 %v238
    %v1193 = vunpack.c.l.b16 %v239
    %v1194 = vunpack.c.h.b16 %v239
    %v1195 = vunpack.c.l.b16 %v240
    %v1196 = vunpack.c.h.b16 %v240
    %v1197 = vunpack.c.l.b16 %v241
    %v1198 = vunpack.c.h.b16 %v241
    %v1199 = vunpack.c.l.b16 %v242
    %v1200 = vunpack.c.h.b16 %v242
    %v1201 = vunpack.c.l.b16 %v243
    %v1202 = vunpack.c.h.b16 %v243
    %v1203 = vunpack.c.l.b16 %v244
    %v1204 = vunpack.c.h.b16 %v244
    %v1205 = vunpack.c.l.b16 %v245
    %v1206 = vunpack.c.h.b16 %v245
    %v1207 = vunpack.c.l.b16 %v246
    %v1208 = vunpack.c.h.b16 %v246
    %v1209 = vunpack.c.l.b16 %v247
    %v1210 = vunpack.c.h.b16 %v247
    %v1211 = vunpack.c.l.b16 %v248
    %v1212 = vunpack.c.h.b16 %v248
    %v1213 = vunpack.c.l.b16 %v249
    %v1214 = vunpack.c.h.b16 %v249
    %v1215 = vunpack.c.l.b16 %v250
    %v1216 = vunpack.c.h.b16 %v250
    %v1217 = vunpack.c.l.b16 %v251
    %v1218 = vunpack.c.h.b16 %v251
    %v1219 = vunpack.c.l.b16 %v252
    %v1220 = vunpack.c.h.b16 %v252
    %v1221 = vunpack.c.l.b16 %v253
    %v1222 = vunpack.c.h.b16 %v253
    %v1223 = vunpack.c.l.b16 %v254
    %v1224 = vunpack.c.h.b16 %v254
    %v1225 = vunpack.c.l.b16 %v255
    %v1226 = vunpack.c.h.b16 %v255
    %v1227 = vunpack.c.l.b16 %v256
    %v1228 = vunpack.c.h.b16 %v256
    %v1229 = vunpack.c.l.b16 %v257
    %v1230 = vunpack.c.h.b16 %v257
    %v1231 = vunpack.c.l.b16 %v258
    %v1232 = vunpack.c.h.b16 %v258
    %v1233 = vunpack.c.l.b16 %v259
    %v1234 = vunpack.c.h.b16 %v259
    %v1235 = vunpack.c.l.b16 %v260
    %v1236 = vunpack.c.h.b16 %v260
    %v1237 = vunpack.c.l.b16 %v261
    %v1238 = vunpack.c.h.b16 %v261
    %v1239 = vunpack.c.l.b16 %v262
    %v1240 = vunpack.c.h.b16 %v262
    %v1241 = vunpack.c.l.b16 %v263
    %v1242 = vunpack.c.h.b16 %v263
    %v1243 = vunpack.c.l.b16 %v264
    %v1244 = vunpack.c.h.b16 %v264
    %v1245 = vunpack.c.l.b16 %v265
    %v1246 = vunpack.c.h.b16 %v265
    %v1247 = vunpack.c.l.b16 %v266
    %v1248 = vunpack.c.h.b16 %v266
    %v1249 = vunpack.c.l.b16 %v267
    %v1250 = vunpack.c.h.b16 %v267
    %v1251 = vunpack.c.l.b16 %v268
    %v1252 = vunpack.c.h.b16 %v268
    %v1253 = vunpack.c.l.b16 %v269
    %v1254 = vunpack.c.h.b16 %v269
    %v1255 = vunpack.c.l.b16 %v270
    %v1256 = vunpack.c.h.b16 %v270
    %v1257 = vunpack.c.l.b16 %v271
    %v1258 = vunpack.c.h.b16 %v271
    %v1259 = vunpack.c.l.b16 %v272
    %v1260 = vunpack.c.h.b16 %v272
    %v1261 = vunpack.c.l.b16 %v273
    %v1262 = vunpack.c.h.b16 %v273
    %v1263 = vunpack.c.l.b16 %v274
    %v1264 = vunpack.c.h.b16 %v274
    %v1265 = vunpack.c.l.b16 %v275
    %v1266 = vunpack.c.h.b16 %v275
    %v1267 = vunpack.c.l.b16 %v276
    %v1268 = vunpack.c.h.b16 %v276
    %v1269 = vunpack.c.l.b16 %v277
    %v1270 = vunpack.c.h.b16 %v277
    %v1271 = vunpack.c.l.b16 %v278
    %v1272 = vunpack.c.h.b16 %v278
    %v1273 = vunpack.c.l.b16 %v279
    %v1274 = vunpack.c.h.b16 %v279
    %v1275 = vunpack.c.l.b16 %v280
    %v1276 = vunpack.c.h.b16 %v280
    %v1277 = vunpack.c.l.b16 %v281
    %v1278 = vunpack.c.h.b16 %v281
    %v1279 = vunpack.c.l.b16 %v282
    %v1280 = vunpack.c.h.b16 %v282
    %v1281 = vunpack.c.l.b16 %v283
    %v1282 = vunpack.c.h.b16 %v283
    %v1283 = vunpack.c.l.b16 %v284
    %v1284 = vunpack.c.h.b16 %v284
    %v1285 = vunpack.c.l.b16 %v285
    %v1286 = vunpack.c.h.b16 %v285
    %v1287 = vunpack.c.l.b16 %v286
    %v1288 = vunpack.c.h.b16 %v286
    %v1289 = vunpack.c.l.b16 %v287
    %v1290 = vunpack.c.h.b16 %v287
    %v1291 = vunpack.c.l.b16 %v288
    %v1292 = vunpack.c.h.b16 %v288
    %v1293 = vunpack.c.l.b16 %v289
    %v1294 = vunpack.c.h.b16 %v289
    %v1295 = vunpack.c.l.b16 %v290
    %v1296 = vunpack.c.h.b16 %v290
    %v1297 = vunpack.c.l.b16 %v291
    %v1298 = vunpack.c.h.b16 %v291
    %v1299 = vunpack.c.l.b16 %v292
    %v1300 = vunpack.c.h.b16 %v292
    %v1301 = vunpack.c.l.b16 %v293
    %v1302 = vunpack.c.h.b16 %v293
    %v1303 = vunpack.c.l.b16 %v294
    %v1304 = vunpack.c.h.b16 %v294
    %v1305 = vunpack.c.l.b16 %v295
    %v1306 = vunpack.c.h.b16 %v295
    %v1307 = vunpack.c.l.b16 %v296
    %v1308 = vunpack.c.h.b16 %v296
    %v1309 = vunpack.c.l.b16 %v297
    %v1310 = vunpack.c.h.b16 %v297
    %v1311 = vunpack.c.l.b16 %v298
    %v1312 = vunpack.c.h.b16 %v298
    %v1313 = vunpack.c.l.b16 %v299
    %v1314 = vunpack.c.h.b16 %v299
    %v1315 = vunpack.c.l.b16 %v300
    %v1316 = vunpack.c.h.b16 %v300
    %v1317 = vunpack.c.l.b16 %v301
    %v1318 = vunpack.c.h.b16 %v301
    %v1319 = vunpack.c.l.b16 %v302
    %v1320 = vunpack.c.h.b16 %v302
    %v1321 = vunpack.c.l.b16 %v303
    %v1322 = vunpack.c.h.b16 %v303
    %v1323 = vunpack.c.l.b16 %v304
    %v1324 = vunpack.c.h.b16 %v304
    %v1325 = vunpack.c.l.b16 %v305
    %v1326 = vunpack.c.h.b16 %v305
    %v1327 = vunpack.c.l.b16 %v306
    %v1328 = vunpack.c.h.b16 %v306
    %v1329 = vunpack.c.l.b16 %v307
    %v1330 = vunpack.c.h.b16 %v307
    %v1331 = vunpack.c.l.b16 %v308
    %v1332 = vunpack.c.h.b16 %v308
    %v1333 = vunpack.c.l.b16 %v309
    %v1334 = vunpack.c.h.b16 %v309
    %v1335 = vunpack.c.l.b16 %v310
    %v1336 = vunpack.c.h.b16 %v310
    %v1337 = vunpack.c.l.b16 %v311
    %v1338 = vunpack.c.h.b16 %v311
    %v1339 = vunpack.c.l.b16 %v312
    %v1340 = vunpack.c.h.b16 %v312
    %v1341 = vunpack.c.l.b16 %v313
    %v1342 = vunpack.c.h.b16 %v313
    %v1343 = vunpack.c.l.b16 %v314
    %v1344 = vunpack.c.h.b16 %v314
    %v1345 = vunpack.c.l.b16 %v315
    %v1346 = vunpack.c.h.b16 %v315
    %v1347 = vunpack.c.l.b16 %v316
    %v1348 = vunpack.c.h.b16 %v316
    %v1349 = vunpack.c.l.b16 %v317
    %v1350 = vunpack.c.h.b16 %v317
    %v1351 = vunpack.c.l.b16 %v318
    %v1352 = vunpack.c.h.b16 %v318
    %v1353 = vunpack.c.l.b16 %v319
    %v1354 = vunpack.c.h.b16 %v319
    %v1355 = vunpack.c.l.b16 %v320
    %v1356 = vunpack.c.h.b16 %v320
    %v1357 = vunpack.c.l.b16 %v321
    %v1358 = vunpack.c.h.b16 %v321
    %v1359 = vunpack.c.l.b16 %v322
    %v1360 = vunpack.c.h.b16 %v322
    %v1361 = vunpack.c.l.b16 %v323
    %v1362 = vunpack.c.h.b16 %v323
    %v1363 = vunpack.c.l.b16 %v324
    %v1364 = vunpack.c.h.b16 %v324
    %v1365 = vunpack.c.l.b16 %v325
    %v1366 = vunpack.c.h.b16 %v325
    %v1367 = vunpack.c.l.b16 %v326
    %v1368 = vunpack.c.h.b16 %v326
    %v1369 = vunpack.c.l.b16 %v327
    %v1370 = vunpack.c.h.b16 %v327
    %v1371 = vunpack.c.l.b16 %v328
    %v1372 = vunpack.c.h.b16 %v328
    %v1373 = vunpack.c.l.b16 %v329
    %v1374 = vunpack.c.h.b16 %v329
    %v1375 = vunpack.c.l.b16 %v330
    %v1376 = vunpack.c.h.b16 %v330
    %v1377 = vunpack.c.l.b16 %v331
    %v1378 = vunpack.c.h.b16 %v331
    %v1379 = vunpack.c.l.b16 %v332
    %v1380 = vunpack.c.h.b16 %v332
    %v1381 = vunpack.c.l.b16 %v333
    %v1382 = vunpack.c.h.b16 %v333
    %v1383 = vunpack.c.l.b16 %v334
    %v1384 = vunpack.c.h.b16 %v334
    %v1385 = vunpack.c.l.b16 %v335
    %v1386 = vunpack.c.h.b16 %v335
    %v1387 = vunpack.c.l.b16 %v336
    %v1388 = vunpack.c.h.b16 %v336
    %v1389 = vunpack.c.l.b16 %v337
    %v1390 = vunpack.c.h.b16 %v337
    %v1391 = vunpack.c.l.b16 %v338
    %v1392 = vunpack.c.h.b16 %v338
    %v1393 = vunpack.c.l.b16 %v339
    %v1394 = vunpack.c.h.b16 %v339
    %v1395 = vunpack.c.l.b16 %v340
    %v1396 = vunpack.c.h.b16 %v340
    %v1397 = vunpack.c.l.b16 %v341
    %v1398 = vunpack.c.h.b16 %v341
    %v1399 = vunpack.c.l.b16 %v342
    %v1400 = vunpack.c.h.b16 %v342
    %v1401 = vunpack.c.l.b16 %v343
    %v1402 = vunpack.c.h.b16 %v343
    %v1403 = vunpack.c.l.b16 %v344
    %v1404 = vunpack.c.h.b16 %v344
    %v1405 = vunpack.c.l.b16 %v345
    %v1406 = vunpack.c.h.b16 %v345
    %v1407 = vunpack.c.l.b16 %v346
    %v1408 = vunpack.c.h.b16 %v346
    %v1409 = vunpack.c.l.b16 %v347
    %v1410 = vunpack.c.h.b16 %v347
    %v1411 = vunpack.c.l.b16 %v348
    %v1412 = vunpack.c.h.b16 %v348
    %v1413 = vunpack.c.l.b16 %v349
    %v1414 = vunpack.c.h.b16 %v349
    %v1415 = vunpack.c.l.b16 %v350
    %v1416 = vunpack.c.h.b16 %v350
    %v1417 = vunpack.c.l.b16 %v351
    %v1418 = vunpack.c.h.b16 %v351
    %v1419 = vunpack.c.l.b16 %v352
    %v1420 = vunpack.c.h.b16 %v352
    %v1421 = vunpack.c.l.b16 %v353
    %v1422 = vunpack.c.h.b16 %v353
    %v1423 = vunpack.c.l.b16 %v354
    %v1424 = vunpack.c.h.b16 %v354
    %v1425 = vunpack.c.l.b16 %v355
    %v1426 = vunpack.c.h.b16 %v355
    %v1427 = vunpack.c.l.b16 %v356
    %v1428 = vunpack.c.h.b16 %v356
    %v1429 = vunpack.c.l.b16 %v357
    %v1430 = vunpack.c.h.b16 %v357
    %v1431 = vunpack.c.l.b16 %v358
    %v1432 = vunpack.c.h.b16 %v358
    %v1433 = vunpack.c.l.b16 %v359
    %v1434 = vunpack.c.h.b16 %v359
    %v1435 = vunpack.c.l.b16 %v360
    %v1436 = vunpack.c.h.b16 %v360
    %v1437 = vunpack.c.l.b16 %v361
    %v1438 = vunpack.c.h.b16 %v361
    %v1439 = vunpack.c.l.b16 %v362
    %v1440 = vunpack.c.h.b16 %v362
    %v1441 = vunpack.c.l.b16 %v363
    %v1442 = vunpack.c.h.b16 %v363
    %v1443 = vunpack.c.l.b16 %v364
    %v1444 = vunpack.c.h.b16 %v364
    %v1445 = vunpack.c.l.b16 %v365
    %v1446 = vunpack.c.h.b16 %v365
    %v1447 = vunpack.c.l.b16 %v366
    %v1448 = vunpack.c.h.b16 %v366
    %v1449 = vunpack.c.l.b16 %v367
    %v1450 = vunpack.c.h.b16 %v367
    %v1451 = vunpack.c.l.b16 %v368
    %v1452 = vunpack.c.h.b16 %v368
    %v1453 = vunpack.c.l.b16 %v369
    %v1454 = vunpack.c.h.b16 %v369
    %v1455 = vunpack.c.l.b16 %v370
    %v1456 = vunpack.c.h.b16 %v370
    %v1457 = vunpack.c.l.b16 %v371
    %v1458 = vunpack.c.h.b16 %v371
    %v1459 = vunpack.c.l.b16 %v372
    %v1460 = vunpack.c.h.b16 %v372
    %v1461 = vunpack.c.l.b16 %v373
    %v1462 = vunpack.c.h.b16 %v373
    %v1463 = vunpack.c.l.b16 %v374
    %v1464 = vunpack.c.h.b16 %v374
    %v1465 = vunpack.c.l.b16 %v375
    %v1466 = vunpack.c.h.b16 %v375
    %v1467 = vunpack.c.l.b16 %v376
    %v1468 = vunpack.c.h.b16 %v376
    %v1469 = vunpack.c.l.b16 %v377
    %v1470 = vunpack.c.h.b16 %v377
    %v1471 = vunpack.c.l.b16 %v378
    %v1472 = vunpack.c.h.b16 %v378
    %v1473 = vunpack.c.l.b16 %v379
    %v1474 = vunpack.c.h.b16 %v379
    %v1475 = vunpack.c.l.b16 %v380
    %v1476 = vunpack.c.h.b16 %v380
    %v1477 = vunpack.c.l.b16 %v381
    %v1478 = vunpack.c.h.b16 %v381
    %v1479 = vunpack.c.l.b16 %v382
    %v1480 = vunpack.c.h.b16 %v382
    %v1481 = vunpack.c.l.b16 %v383
    %v1482 = vunpack.c.h.b16 %v383
    %v1483 = vunpack.c.l.b16 %v384
    %v1484 = vunpack.c.h.b16 %v384
    %v1485 = vunpack.c.l.b16 %v385
    %v1486 = vunpack.c.h.b16 %v385
    %v1487 = vunpack.c.l.b16 %v386
    %v1488 = vunpack.c.h.b16 %v386
    %v1489 = vunpack.c.l.b16 %v387
    %v1490 = vunpack.c.h.b16 %v387
    %v1491 = vunpack.c.l.b16 %v388
    %v1492 = vunpack.c.h.b16 %v388
    %v1493 = vunpack.c.l.b16 %v389
    %v1494 = vunpack.c.h.b16 %v389
    %v1495 = vunpack.c.l.b16 %v390
    %v1496 = vunpack.c.h.b16 %v390
    %v1497 = vunpack.c.l.b16 %v391
    %v1498 = vunpack.c.h.b16 %v391
    %v1499 = vunpack.c.l.b16 %v392
    %v1500 = vunpack.c.h.b16 %v392
    %v1501 = vunpack.c.l.b16 %v393
    %v1502 = vunpack.c.h.b16 %v393
    %v1503 = vunpack.c.l.b16 %v394
    %v1504 = vunpack.c.h.b16 %v394
    %v1505 = vunpack.c.l.b16 %v395
    %v1506 = vunpack.c.h.b16 %v395
    %v1507 = vunpack.c.l.b16 %v396
    %v1508 = vunpack.c.h.b16 %v396
    %v1509 = vunpack.c.l.b16 %v397
    %v1510 = vunpack.c.h.b16 %v397
    %v1511 = vunpack.c.l.b16 %v398
    %v1512 = vunpack.c.h.b16 %v398
    %v1513 = vunpack.c.l.b16 %v399
    %v1514 = vunpack.c.h.b16 %v399
    %v1515 = vunpack.c.l.b16 %v400
    %v1516 = vunpack.c.h.b16 %v400
    %v1517 = vunpack.c.l.b16 %v401
    %v1518 = vunpack.c.h.b16 %v401
    %v1519 = vunpack.c.l.b16 %v402
    %v1520 = vunpack.c.h.b16 %v402
    %v1521 = vunpack.c.l.b16 %v403
    %v1522 = vunpack.c.h.b16 %v403
    %v1523 = vunpack.c.l.b16 %v404
    %v1524 = vunpack.c.h.b16 %v404
    %v1525 = vunpack.c.l.b16 %v405
    %v1526 = vunpack.c.h.b16 %v405
    %v1527 = vunpack.c.l.b16 %v406
    %v1528 = vunpack.c.h.b16 %v406
    %v1529 = vunpack.c.l.b16 %v407
    %v1530 = vunpack.c.h.b16 %v407
    %v1531 = vunpack.c.l.b16 %v408
    %v1532 = vunpack.c.h.b16 %v408
    %v1533 = vunpack.c.l.b16 %v409
    %v1534 = vunpack.c.h.b16 %v409
    %v1535 = vunpack.c.l.b16 %v410
    %v1536 = vunpack.c.h.b16 %v410
    %v1537 = vunpack.c.l.b16 %v411
    %v1538 = vunpack.c.h.b16 %v411
    %v1539 = vunpack.c.l.b16 %v412
    %v1540 = vunpack.c.h.b16 %v412
    %v1541 = vunpack.c.l.b16 %v413
    %v1542 = vunpack.c.h.b16 %v413
    %v1543 = vunpack.c.l.b16 %v414
    %v1544 = vunpack.c.h.b16 %v414
    %v1545 = vunpack.c.l.b16 %v415
    %v1546 = vunpack.c.h.b16 %v415
    %v1547 = vunpack.c.l.b16 %v416
    %v1548 = vunpack.c.h.b16 %v416
    %v1549 = vunpack.c.l.b16 %v417
    %v1550 = vunpack.c.h.b16 %v417
    %v1551 = vunpack.c.l.b16 %v418
    %v1552 = vunpack.c.h.b16 %v418
    %v1553 = vunpack.c.l.b16 %v419
    %v1554 = vunpack.c.h.b16 %v419
    %v1555 = vunpack.c.l.b16 %v420
    %v1556 = vunpack.c.h.b16 %v420
    %v1557 = vunpack.c.l.b16 %v421
    %v1558 = vunpack.c.h.b16 %v421
    %v1559 = vunpack.c.l.b16 %v422
    %v1560 = vunpack.c.h.b16 %v422
    %v1561 = vunpack.c.l.b16 %v423
    %v1562 = vunpack.c.h.b16 %v423
    %v1563 = vunpack.c.l.b16 %v424
    %v1564 = vunpack.c.h.b16 %v424
    %v1565 = vunpack.c.l.b16 %v425
    %v1566 = vunpack.c.h.b16 %v425
    %v1567 = vunpack.c.l.b16 %v426
    %v1568 = vunpack.c.h.b16 %v426
    %v1569 = vunpack.c.l.b16 %v427
    %v1570 = vunpack.c.h.b16 %v427
    %v1571 = vunpack.c.l.b16 %v428
    %v1572 = vunpack.c.h.b16 %v428
    %v1573 = vunpack.c.l.b16 %v429
    %v1574 = vunpack.c.h.b16 %v429
    %v1575 = vunpack.c.l.b16 %v430
    %v1576 = vunpack.c.h.b16 %v430
    %v1577 = vunpack.c.l.b16 %v431
    %v1578 = vunpack.c.h.b16 %v431
    %v1579 = vunpack.c.l.b16 %v432
    %v1580 = vunpack.c.h.b16 %v432
    %v1581 = vunpack.c.l.b16 %v433
    %v1582 = vunpack.c.h.b16 %v433
    %v1583 = vunpack.c.l.b16 %v434
    %v1584 = vunpack.c.h.b16 %v434
    %v1585 = vunpack.c.l.b16 %v435
    %v1586 = vunpack.c.h.b16 %v435
    %v1587 = vunpack.c.l.b16 %v436
    %v1588 = vunpack.c.h.b16 %v436
    %v1589 = vunpack.c.l.b16 %v437
    %v1590 = vunpack.c.h.b16 %v437
    %v1591 = vunpack.c.l.b16 %v438
    %v1592 = vunpack.c.h.b16 %v438
    %v1593 = vunpack.c.l.b16 %v439
    %v1594 = vunpack.c.h.b16 %v439
    %v1595 = vunpack.c.l.b16 %v440
    %v1596 = vunpack.c.h.b16 %v440
    %v1597 = vunpack.c.l.b16 %v441
    %v1598 = vunpack.c.h.b16 %v441
    %v1599 = vunpack.c.l.b16 %v442
    %v1600 = vunpack.c.h.b16 %v442
    %v1601 = vunpack.c.l.b16 %v443
    %v1602 = vunpack.c.h.b16 %v443
    %v1603 = vunpack.c.l.b16 %v444
    %v1604 = vunpack.c.h.b16 %v444
    %v1605 = vunpack.c.l.b16 %v445
    %v1606 = vunpack.c.h.b16 %v445
    %v1607 = vunpack.c.l.b16 %v446
    %v1608 = vunpack.c.h.b16 %v446
    %v1609 = vunpack.c.l.b16 %v447
    %v1610 = vunpack.c.h.b16 %v447
    %v1611 = vunpack.c.l.b16 %v448
    %v1612 = vunpack.c.h.b16 %v448
    %v1613 = vunpack.c.l.b16 %v449
    %v1614 = vunpack.c.h.b16 %v449
    %v1615 = vunpack.c.l.b16 %v450
    %v1616 = vunpack.c.h.b16 %v450
    %v1617 = vunpack.c.l.b16 %v451
    %v1618 = vunpack.c.h.b16 %v451
    %v1619 = vunpack.c.l.b16 %v452
    %v1620 = vunpack.c.h.b16 %v452
    %v1621 = vunpack.c.l.b16 %v453
    %v1622 = vunpack.c.h.b16 %v453
    %v1623 = vunpack.c.l.b16 %v454
    %v1624 = vunpack.c.h.b16 %v454
    %v1625 = vunpack.c.l.b16 %v455
    %v1626 = vunpack.c.h.b16 %v455
    %v1627 = vunpack.c.l.b16 %v456
    %v1628 = vunpack.c.h.b16 %v456
    %v1629 = vunpack.c.l.b16 %v457
    %v1630 = vunpack.c.h.b16 %v457
    %v1631 = vunpack.c.l.b16 %v458
    %v1632 = vunpack.c.h.b16 %v458
    %v1633 = vunpack.c.l.b16 %v459
    %v1634 = vunpack.c.h.b16 %v459
    %v1635 = vunpack.c.l.b16 %v460
    %v1636 = vunpack.c.h.b16 %v460
    %v1637 = vunpack.c.l.b16 %v461
    %v1638 = vunpack.c.h.b16 %v461
    %v1639 = vunpack.c.l.b16 %v462
    %v1640 = vunpack.c.h.b16 %v462
    %v1641 = vunpack.c.l.b16 %v463
    %v1642 = vunpack.c.h.b16 %v463
    %v1643 = vunpack.c.l.b16 %v464
    %v1644 = vunpack.c.h.b16 %v464
    %v1645 = vunpack.c.l.b16 %v465
    %v1646 = vunpack.c.h.b16 %v465
    %v1647 = vunpack.c.l.b16 %v466
    %v1648 = vunpack.c.h.b16 %v466
    %v1649 = vunpack.c.l.b16 %v467
    %v1650 = vunpack.c.h.b16 %v467
    %v1651 = vunpack.c.l.b16 %v468
    %v1652 = vunpack.c.h.b16 %v468
    %v1653 = vunpack.c.l.b16 %v469
    %v1654 = vunpack.c.h.b16 %v469
    %v1655 = vunpack.c.l.b16 %v470
    %v1656 = vunpack.c.h.b16 %v470
    %v1657 = vunpack.c.l.b16 %v471
    %v1658 = vunpack.c.h.b16 %v471
    %v1659 = vunpack.c.l.b16 %v472
    %v1660 = vunpack.c.h.b16 %v472
    %v1661 = vunpack.c.l.b16 %v473
    %v1662 = vunpack.c.h.b16 %v473
    %v1663 = vunpack.c.l.b16 %v474
    %v1664 = vunpack.c.h.b16 %v474
    %v1665 = vunpack.c.l.b16 %v475
    %v1666 = vunpack.c.h.b16 %v475
    %v1667 = vunpack.c.l.b16 %v476
    %v1668 = vunpack.c.h.b16 %v476
    %v1669 = vunpack.c.l.b16 %v477
    %v1670 = vunpack.c.h.b16 %v477
    %v1671 = vunpack.c.l.b16 %v478
    %v1672 = vunpack.c.h.b16 %v478
    %v1673 = vunpack.c.l.b16 %v479
    %v1674 = vunpack.c.h.b16 %v479
    %v1675 = vunpack.c.l.b16 %v480
    %v1676 = vunpack.c.h.b16 %v480
    %v1677 = vunpack.c.l.b16 %v481
    %v1678 = vunpack.c.h.b16 %v481
    %v1679 = vunpack.c.l.b16 %v482
    %v1680 = vunpack.c.h.b16 %v482
    %v1681 = vunpack.c.l.b16 %v483
    %v1682 = vunpack.c.h.b16 %v483
    %v1683 = vunpack.c.l.b16 %v484
    %v1684 = vunpack.c.h.b16 %v484
    %v1685 = vunpack.c.l.b16 %v485
    %v1686 = vunpack.c.h.b16 %v485
    %v1687 = vunpack.c.l.b16 %v486
    %v1688 = vunpack.c.h.b16 %v486
    %v1689 = vunpack.c.l.b16 %v487
    %v1690 = vunpack.c.h.b16 %v487
    %v1691 = vunpack.c.l.b16 %v488
    %v1692 = vunpack.c.h.b16 %v488
    %v1693 = vunpack.c.l.b16 %v489
    %v1694 = vunpack.c.h.b16 %v489
    %v1695 = vunpack.c.l.b16 %v490
    %v1696 = vunpack.c.h.b16 %v490
    %v1697 = vunpack.c.l.b16 %v491
    %v1698 = vunpack.c.h.b16 %v491
    %v1699 = vunpack.c.l.b16 %v492
    %v1700 = vunpack.c.h.b16 %v492
    %v1701 = vunpack.c.l.b16 %v493
    %v1702 = vunpack.c.h.b16 %v493
    %v1703 = vunpack.c.l.b16 %v494
    %v1704 = vunpack.c.h.b16 %v494
    %v1705 = vunpack.c.l.b16 %v495
    %v1706 = vunpack.c.h.b16 %v495
    %v1707 = vunpack.c.l.b16 %v496
    %v1708 = vunpack.c.h.b16 %v496
    %v1709 = vunpack.c.l.b16 %v497
    %v1710 = vunpack.c.h.b16 %v497
    %v1711 = vunpack.c.l.b16 %v498
    %v1712 = vunpack.c.h.b16 %v498
    %v1713 = vunpack.c.l.b16 %v499
    %v1714 = vunpack.c.h.b16 %v499
    %v1715 = vpack.c.b16 %v955, %v947
    %v1716 = vpack.c.b16 %v956, %v948
    %v1717 = vpack.c.b16 %v957, %v949
    %v1718 = vpack.c.b16 %v958, %v950
    %v1719 = vpack.c.b16 %v959, %v951
    %v1720 = vpack.c.b16 %v960, %v952
    %v1721 = vpack.c.b16 %v961, %v953
    %v1722 = vpack.c.b16 %v962, %v954
    %v1723 = vpack.c.b16 %v971, %v963
    %v1724 = vpack.c.b16 %v972, %v964
    %v1725 = vpack.c.b16 %v973, %v965
    %v1726 = vpack.c.b16 %v974, %v966
    %v1727 = vpack.c.b16 %v975, %v967
    %v1728 = vpack.c.b16 %v976, %v968
    %v1729 = vpack.c.b16 %v977, %v969
    %v1730 = vpack.c.b16 %v978, %v970
    %v1731 = vpack.c.b16 %v987, %v979
    %v1732 = vpack.c.b16 %v988, %v980
    %v1733 = vpack.c.b16 %v989, %v981
    %v1734 = vpack.c.b16 %v990, %v982
    %v1735 = vpack.c.b16 %v991, %v983
    %v1736 = vpack.c.b16 %v992, %v984
    %v1737 = vpack.c.b16 %v993, %v985
    %v1738 = vpack.c.b16 %v994, %v986
    %v1739 = vpack.c.b16 %v1003, %v995
    %v1740 = vpack.c.b16 %v1004, %v996
    %v1741 = vpack.c.b16 %v1005, %v997
    %v1742 = vpack.c.b16 %v1006, %v998
    %v1743 = vpack.c.b16 %v1007, %v999
    %v1744 = vpack.c.b16 %v1008, %v1000
    %v1745 = vpack.c.b16 %v1009, %v1001
    %v1746 = vpack.c.b16 %v1010, %v1002
    %v1747 = vpack.c.b16 %v1019, %v1011
    %v1748 = vpack.c.b16 %v1020, %v1012
    %v1749 = vpack.c.b16 %v1021, %v1013
    %v1750 = vpack.c.b16 %v1022, %v1014
    %v1751 = vpack.c.b16 %v1023, %v1015
    %v1752 = vpack.c.b16 %v1024, %v1016
    %v1753 = vpack.c.b16 %v1025, %v1017
    %v1754 = vpack.c.b16 %v1026, %v1018
    %v1755 = vpack.c.b16 %v1035, %v1027
    %v1756 = vpack.c.b16 %v1036, %v1028
    %v1757 = vpack.c.b16 %v1037, %v1029
    %v1758 = vpack.c.b16 %v1038, %v1030
    %v1759 = vpack.c.b16 %v1039, %v1031
    %v1760 = vpack.c.b16 %v1040, %v1032
    %v1761 = vpack.c.b16 %v1041, %v1033
    %v1762 = vpack.c.b16 %v1042, %v1034
    %v1763 = vpack.c.b16 %v1051, %v1043
    %v1764 = vpack.c.b16 %v1052, %v1044
    %v1765 = vpack.c.b16 %v1053, %v1045
    %v1766 = vpack.c.b16 %v1054, %v1046
    %v1767 = vpack.c.b16 %v1055, %v1047
    %v1768 = vpack.c.b16 %v1056, %v1048
    %v1769 = vpack.c.b16 %v1057, %v1049
    %v1770 = vpack.c.b16 %v1058, %v1050
    %v1771 = vpack.c.b16 %v1067, %v1059
    %v1772 = vpack.c.b16 %v1068, %v1060
    %v1773 = vpack.c.b16 %v1069, %v1061
    %v1774 = vpack.c.b16 %v1070, %v1062
    %v1775 = vpack.c.b16 %v1071, %v1063
    %v1776 = vpack.c.b16 %v1072, %v1064
    %v1777 = vpack.c.b16 %v1073, %v1065
    %v1778 = vpack.c.b16 %v1074, %v1066
    %v1779 = vpack.c.b16 %v1083, %v1075
    %v1780 = vpack.c.b16 %v1084, %v1076
    %v1781 = vpack.c.b16 %v1085, %v1077
    %v1782 = vpack.c.b16 %v1086, %v1078
    %v1783 = vpack.c.b16 %v1087, %v1079
    %v1784 = vpack.c.b16 %v1088, %v1080
    %v1785 = vpack.c.b16 %v1089, %v1081
    %v1786 = vpack.c.b16 %v1090, %v1082
    %v1787 = vpack.c.b16 %v1099, %v1091
    %v1788 = vpack.c.b16 %v1100, %v1092
    %v1789 = vpack.c.b16 %v1101, %v1093
    %v1790 = vpack.c.b16 %v1102, %v1094
    %v1791 = vpack.c.b16 %v1103, %v1095
    %v1792 = vpack.c.b16 %v1104, %v1096
    %v1793 = vpack.c.b16 %v1105, %v1097
    %v1794 = vpack.c.b16 %v1106, %v1098
    %v1795 = vpack.c.b16 %v1115, %v1107
    %v1796 = vpack.c.b16 %v1116, %v1108
    %v1797 = vpack.c.b16 %v1117, %v1109
    %v1798 = vpack.c.b16 %v1118, %v1110
    %v1799 = vpack.c.b16 %v1119, %v1111
    %v1800 = vpack.c.b16 %v1120, %v1112
    %v1801 = vpack.c.b16 %v1121, %v1113
    %v1802 = vpack.c.b16 %v1122, %v1114
    %v1803 = vpack.c.b16 %v1131, %v1123
    %v1804 = vpack.c.b16 %v1132, %v1124
    %v1805 = vpack.c.b16 %v1133, %v1125
    %v1806 = vpack.c.b16 %v1134, %v1126
    %v1807 = vpack.c.b16 %v1135, %v1127
    %v1808 = vpack.c.b16 %v1136, %v1128
    %v1809 = vpack.c.b16 %v1137, %v1129
    %v1810 = vpack.c.b16 %v1138, %v1130
    %v1811 = vpack.c.b16 %v1147, %v1139
    %v1812 = vpack.c.b16 %v1148, %v1140
    %v1813 = vpack.c.b16 %v1149, %v1141
    %v1814 = vpack.c.b16 %v1150, %v1142
    %v1815 = vpack.c.b16 %v1151, %v1143
    %v1816 = vpack.c.b16 %v1152, %v1144
    %v1817 = vpack.c.b16 %v1153, %v1145
    %v1818 = vpack.c.b16 %v1154, %v1146
    %v1819 = vpack.c.b16 %v1163, %v1155
    %v1820 = vpack.c.b16 %v1164, %v1156
    %v1821 = vpack.c.b16 %v1165, %v1157
    %v1822 = vpack.c.b16 %v1166, %v1158
    %v1823 = vpack.c.b16 %v1167, %v1159
    %v1824 = vpack.c.b16 %v1168, %v1160
    %v1825 = vpack.c.b16 %v1169, %v1161
    %v1826 = vpack.c.b16 %v1170, %v1162
    %v1827 = vpack.c.b16 %v1179, %v1171
    %v1828 = vpack.c.b16 %v1180, %v1172
    %v1829 = vpack.c.b16 %v1181, %v1173
    %v1830 = vpack.c.b16 %v1182, %v1174
    %v1831 = vpack.c.b16 %v1183, %v1175
    %v1832 = vpack.c.b16 %v1184, %v1176
    %v1833 = vpack.c.b16 %v1185, %v1177
    %v1834 = vpack.c.b16 %v1186, %v1178
    %v1835 = vpack.c.b16 %v1195, %v1187
    %v1836 = vpack.c.b16 %v1196, %v1188
    %v1837 = vpack.c.b16 %v1197, %v1189
    %v1838 = vpack.c.b16 %v1198, %v1190
    %v1839 = vpack.c.b16 %v1199, %v1191
    %v1840 = vpack.c.b16 %v1200, %v1192
    %v1841 = vpack.c.b16 %v1201, %v1193
    %v1842 = vpack.c.b16 %v1202, %v1194
    %v1843 = vpack.c.b16 %v1211, %v1203
    %v1844 = vpack.c.b16 %v1212, %v1204
    %v1845 = vpack.c.b16 %v1213, %v1205
    %v1846 = vpack.c.b16 %v1214, %v1206
    %v1847 = vpack.c.b16 %v1215, %v1207
    %v1848 = vpack.c.b16 %v1216, %v1208
    %v1849 = vpack.c.b16 %v1217, %v1209
    %v1850 = vpack.c.b16 %v1218, %v1210
    %v1851 = vpack.c.b16 %v1227, %v1219
    %v1852 = vpack.c.b16 %v1228, %v1220
    %v1853 = vpack.c.b16 %v1229, %v1221
    %v1854 = vpack.c.b16 %v1230, %v1222
    %v1855 = vpack.c.b16 %v1231, %v1223
    %v1856 = vpack.c.b16 %v1232, %v1224
    %v1857 = vpack.c.b16 %v1233, %v1225
    %v1858 = vpack.c.b16 %v1234, %v1226
    %v1859 = vpack.c.b16 %v1243, %v1235
    %v1860 = vpack.c.b16 %v1244, %v1236
    %v1861 = vpack.c.b16 %v1245, %v1237
    %v1862 = vpack.c.b16 %v1246, %v1238
    %v1863 = vpack.c.b16 %v1247, %v1239
    %v1864 = vpack.c.b16 %v1248, %v1240
    %v1865 = vpack.c.b16 %v1249, %v1241
    %v1866 = vpack.c.b16 %v1250, %v1242
    %v1867 = vpack.c.b16 %v1259, %v1251
    %v1868 = vpack.c.b16 %v1260, %v1252
    %v1869 = vpack.c.b16 %v1261, %v1253
    %v1870 = vpack.c.b16 %v1262, %v1254
    %v1871 = vpack.c.b16 %v1263, %v1255
    %v1872 = vpack.c.b16 %v1264, %v1256
    %v1873 = vpack.c.b16 %v1265, %v1257
    %v1874 = vpack.c.b16 %v1266, %v1258
    %v1875 = vpack.c.b16 %v1275, %v1267
    %v1876 = vpack.c.b16 %v1276, %v1268
    %v1877 = vpack.c.b16 %v1277, %v1269
    %v1878 = vpack.c.b16 %v1278, %v1270
    %v1879 = vpack.c.b16 %v1279, %v1271
    %v1880 = vpack.c.b16 %v1280, %v1272
    %v1881 = vpack.c.b16 %v1281, %v1273
    %v1882 = vpack.c.b16 %v1282, %v1274
    %v1883 = vpack.c.b16 %v1291, %v1283
    %v1884 = vpack.c.b16 %v1292, %v1284
    %v1885 = vpack.c.b16 %v1293, %v1285
    %v1886 = vpack.c.b16 %v1294, %v1286
    %v1887 = vpack.c.b16 %v1295, %v1287
    %v1888 = vpack.c.b16 %v1296, %v1288
    %v1889 = vpack.c.b16 %v1297, %v1289
    %v1890 = vpack.c.b16 %v1298, %v1290
    %v1891 = vpack.c.b16 %v1307, %v1299
    %v1892 = vpack.c.b16 %v1308, %v1300
    %v1893 = vpack.c.b16 %v1309, %v1301
    %v1894 = vpack.c.b16 %v1310, %v1302
    %v1895 = vpack.c.b16 %v1311, %v1303
    %v1896 = vpack.c.b16 %v1312, %v1304
    %v1897 = vpack.c.b16 %v1313, %v1305
    %v1898 = vpack.c.b16 %v1314, %v1306
    %v1899 = vpack.c.b16 %v1323, %v1315
    %v1900 = vpack.c.b16 %v1324, %v1316
    %v1901 = vpack.c.b16 %v1325, %v1317
    %v1902 = vpack.c.b16 %v1326, %v1318
    %v1903 = vpack.c.b16 %v1327, %v1319
    %v1904 = vpack.c.b16 %v1328, %v1320
    %v1905 = vpack.c.b16 %v1329, %v1321
    %v1906 = vpack.c.b16 %v1330, %v1322
    %v1907 = vpack.c.b16 %v1339, %v1331
    %v1908 = vpack.c.b16 %v1340, %v1332
    %v1909 = vpack.c.b16 %v1341, %v1333
    %v1910 = vpack.c.b16 %v1342, %v1334
    %v1911 = vpack.c.b16 %v1343, %v1335
    %v1912 = vpack.c.b16 %v1344, %v1336
    %v1913 = vpack.c.b16 %v1345, %v1337
    %v1914 = vpack.c.b16 %v1346, %v1338
    %v1915 = vpack.c.b16 %v1355, %v1347
    %v1916 = vpack.c.b16 %v1356, %v1348
    %v1917 = vpack.c.b16 %v1357, %v1349
    %v1918 = vpack.c.b16 %v1358, %v1350
    %v1919 = vpack.c.b16 %v1359, %v1351
    %v1920 = vpack.c.b16 %v1360, %v1352
    %v1921 = vpack.c.b16 %v1361, %v1353
    %v1922 = vpack.c.b16 %v1362, %v1354
    %v1923 = vpack.c.b16 %v1371, %v1363
    %v1924 = vpack.c.b16 %v1372, %v1364
    %v1925 = vpack.c.b16 %v1373, %v1365
    %v1926 = vpack.c.b16 %v1374, %v1366
    %v1927 = vpack.c.b16 %v1375, %v1367
    %v1928 = vpack.c.b16 %v1376, %v1368
    %v1929 = vpack.c.b16 %v1377, %v1369
    %v1930 = vpack.c.b16 %v1378, %v1370
    %v1931 = vpack.c.b16 %v1387, %v1379
    %v1932 = vpack.c.b16 %v1388, %v1380
    %v1933 = vpack.c.b16 %v1389, %v1381
    %v1934 = vpack.c.b16 %v1390, %v1382
    %v1935 = vpack.c.b16 %v1391, %v1383
    %v1936 = vpack.c.b16 %v1392, %v1384
    %v1937 = vpack.c.b16 %v1393, %v1385
    %v1938 = vpack.c.b16 %v1394, %v1386
    %v1939 = vpack.c.b16 %v1403, %v1395
    %v1940 = vpack.c.b16 %v1404, %v1396
    %v1941 = vpack.c.b16 %v1405, %v1397
    %v1942 = vpack.c.b16 %v1406, %v1398
    %v1943 = vpack.c.b16 %v1407, %v1399
    %v1944 = vpack.c.b16 %v1408, %v1400
    %v1945 = vpack.c.b16 %v1409, %v1401
    %v1946 = vpack.c.b16 %v1410, %v1402
    %v1947 = vpack.c.b16 %v1419, %v1411
    %v1948 = vpack.c.b16 %v1420, %v1412
    %v1949 = vpack.c.b16 %v1421, %v1413
    %v1950 = vpack.c.b16 %v1422, %v1414
    %v1951 = vpack.c.b16 %v1423, %v1415
    %v1952 = vpack.c.b16 %v1424, %v1416
    %v1953 = vpack.c.b16 %v1425, %v1417
    %v1954 = vpack.c.b16 %v1426, %v1418
    %v1955 = vpack.c.b16 %v1435, %v1427
    %v1956 = vpack.c.b16 %v1436, %v1428
    %v1957 = vpack.c.b16 %v1437, %v1429
    %v1958 = vpack.c.b16 %v1438, %v1430
    %v1959 = vpack.c.b16 %v1439, %v1431
    %v1960 = vpack.c.b16 %v1440, %v1432
    %v1961 = vpack.c.b16 %v1441, %v1433
    %v1962 = vpack.c.b16 %v1442, %v1434
    %v1963 = vpack.c.b16 %v1451, %v1443
    %v1964 = vpack.c.b16 %v1452, %v1444
    %v1965 = vpack.c.b16 %v1453, %v1445
    %v1966 = vpack.c.b16 %v1454, %v1446
    %v1967 = vpack.c.b16 %v1455, %v1447
    %v1968 = vpack.c.b16 %v1456, %v1448
    %v1969 = vpack.c.b16 %v1457, %v1449
    %v1970 = vpack.c.b16 %v1458, %v1450
    %v1971 = vpack.c.b16 %v1467, %v1459
    %v1972 = vpack.c.b16 %v1468, %v1460
    %v1973 = vpack.c.b16 %v1469, %v1461
    %v1974 = vpack.c.b16 %v1470, %v1462
    %v1975 = vpack.c.b16 %v1471, %v1463
    %v1976 = vpack.c.b16 %v1472, %v1464
    %v1977 = vpack.c.b16 %v1473, %v1465
    %v1978 = vpack.c.b16 %v1474, %v1466
    %v1979 = vpack.c.b16 %v1483, %v1475
    %v1980 = vpack.c.b16 %v1484, %v1476
    %v1981 = vpack.c.b16 %v1485, %v1477
    %v1982 = vpack.c.b16 %v1486, %v1478
    %v1983 = vpack.c.b16 %v1487, %v1479
    %v1984 = vpack.c.b16 %v1488, %v1480
    %v1985 = vpack.c.b16 %v1489, %v1481
    %v1986 = vpack.c.b16 %v1490, %v1482
    %v1987 = vpack.c.b16 %v1499, %v1491
    %v1988 = vpack.c.b16 %v1500, %v1492
    %v1989 = vpack.c.b16 %v1501, %v1493
    %v1990 = vpack.c.b16 %v1502, %v1494
    %v1991 = vpack.c.b16 %v1503, %v1495
    %v1992 = vpack.c.b16 %v1504, %v1496
    %v1993 = vpack.c.b16 %v1505, %v1497
    %v1994 = vpack.c.b16 %v1506, %v1498
    %v1995 = vpack.c.b16 %v1515, %v1507
    %v1996 = vpack.c.b16 %v1516, %v1508
    %v1997 = vpack.c.b16 %v1517, %v1509
    %v1998 = vpack.c.b16 %v1518, %v1510
    %v1999 = vpack.c.b16 %v1519, %v1511
    %v2000 = vpack.c.b16 %v1520, %v1512
    %v2001 = vpack.c.b16 %v1521, %v1513
    %v2002 = vpack.c.b16 %v1522, %v1514
    %v2003 = vpack.c.b16 %v1531, %v1523
    %v2004 = vpack.c.b16 %v1532, %v1524
    %v2005 = vpack.c.b16 %v1533, %v1525
    %v2006 = vpack.c.b16 %v1534, %v1526
    %v2007 = vpack.c.b16 %v1535, %v1527
    %v2008 = vpack.c.b16 %v1536, %v1528
    %v2009 = vpack.c.b16 %v1537, %v1529
    %v2010 = vpack.c.b16 %v1538, %v1530
    %v2011 = vpack.c.b16 %v1547, %v1539
    %v2012 = vpack.c.b16 %v1548, %v1540
    %v2013 = vpack.c.b16 %v1549, %v1541
    %v2014 = vpack.c.b16 %v1550, %v1542
    %v2015 = vpack.c.b16 %v1551, %v1543
    %v2016 = vpack.c.b16 %v1552, %v1544
    %v2017 = vpack.c.b16 %v1553, %v1545
    %v2018 = vpack.c.b16 %v1554, %v1546
    %v2019 = vpack.c.b16 %v1563, %v1555
    %v2020 = vpack.c.b16 %v1564, %v1556
    %v2021 = vpack.c.b16 %v1565, %v1557
    %v2022 = vpack.c.b16 %v1566, %v1558
    %v2023 = vpack.c.b16 %v1567, %v1559
    %v2024 = vpack.c.b16 %v1568, %v1560
    %v2025 = vpack.c.b16 %v1569, %v1561
    %v2026 = vpack.c.b16 %v1570, %v1562
    %v2027 = vpack.c.b16 %v1579, %v1571
    %v2028 = vpack.c.b16 %v1580, %v1572
    %v2029 = vpack.c.b16 %v1581, %v1573
    %v2030 = vpack.c.b16 %v1582, %v1574
    %v2031 = vpack.c.b16 %v1583, %v1575
    %v2032 = vpack.c.b16 %v1584, %v1576
    %v2033 = vpack.c.b16 %v1585, %v1577
    %v2034 = vpack.c.b16 %v1586, %v1578
    %v2035 = vpack.c.b16 %v1595, %v1587
    %v2036 = vpack.c.b16 %v1596, %v1588
    %v2037 = vpack.c.b16 %v1597, %v1589
    %v2038 = vpack.c.b16 %v1598, %v1590
    %v2039 = vpack.c.b16 %v1599, %v1591
    %v2040 = vpack.c.b16 %v1600, %v1592
    %v2041 = vpack.c.b16 %v1601, %v1593
    %v2042 = vpack.c.b16 %v1602, %v1594
    %v2043 = vpack.c.b16 %v1611, %v1603
    %v2044 = vpack.c.b16 %v1612, %v1604
    %v2045 = vpack.c.b16 %v1613, %v1605
    %v2046 = vpack.c.b16 %v1614, %v1606
    %v2047 = vpack.c.b16 %v1615, %v1607
    %v2048 = vpack.c.b16 %v1616, %v1608
    %v2049 = vpack.c.b16 %v1617, %v1609
    %v2050 = vpack.c.b16 %v1618, %v1610
    %v2051 = vpack.c.b16 %v1627, %v1619
    %v2052 = vpack.c.b16 %v1628, %v1620
    %v2053 = vpack.c.b16 %v1629, %v1621
    %v2054 = vpack.c.b16 %v1630, %v1622
    %v2055 = vpack.c.b16 %v1631, %v1623
    %v2056 = vpack.c.b16 %v1632, %v1624
    %v2057 = vpack.c.b16 %v1633, %v1625
    %v2058 = vpack.c.b16 %v1634, %v1626
    %v2059 = vpack.c.b16 %v1643, %v1635
    %v2060 = vpack.c.b16 %v1644, %v1636
    %v2061 = vpack.c.b16 %v1645, %v1637
    %v2062 = vpack.c.b16 %v1646, %v1638
    %v2063 = vpack.c.b16 %v1647, %v1639
    %v2064 = vpack.c.b16 %v1648, %v1640
    %v2065 = vpack.c.b16 %v1649, %v1641
    %v2066 = vpack.c.b16 %v1650, %v1642
    %v2067 = vpack.c.b16 %v1659, %v1651
    %v2068 = vpack.c.b16 %v1660, %v1652
    %v2069 = vpack.c.b16 %v1661, %v1653
    %v2070 = vpack.c.b16 %v1662, %v1654
    %v2071 = vpack.c.b16 %v1663, %v1655
    %v2072 = vpack.c.b16 %v1664, %v1656
    %v2073 = vpack.c.b16 %v1665, %v1657
    %v2074 = vpack.c.b16 %v1666, %v1658
    %v2075 = vpack.c.b16 %v1675, %v1667
    %v2076 = vpack.c.b16 %v1676, %v1668
    %v2077 = vpack.c.b16 %v1677, %v1669
    %v2078 = vpack.c.b16 %v1678, %v1670
    %v2079 = vpack.c.b16 %v1679, %v1671
    %v2080 = vpack.c.b16 %v1680, %v1672
    %v2081 = vpack.c.b16 %v1681, %v1673
    %v2082 = vpack.c.b16 %v1682, %v1674
    %v2083 = vpack.c.b16 %v1691, %v1683
    %v2084 = vpack.c.b16 %v1692, %v1684
    %v2085 = vpack.c.b16 %v1693, %v1685
    %v2086 = vpack.c.b16 %v1694, %v1686
    %v2087 = vpack.c.b16 %v1695, %v1687
    %v2088 = vpack.c.b16 %v1696, %v1688
    %v2089 = vpack.c.b16 %v1697, %v1689
    %v2090 = vpack.c.b16 %v1698, %v1690
    %v2091 = vpack.c.b16 %v1707, %v1699
    %v2092 = vpack.c.b16 %v1708, %v1700
    %v2093 = vpack.c.b16 %v1709, %v1701
    %v2094 = vpack.c.b16 %v1710, %v1702
    %v2095 = vpack.c.b16 %v1711, %v1703
    %v2096 = vpack.c.b16 %v1712, %v1704
    %v2097 = vpack.c.b16 %v1713, %v1705
    %v2098 = vpack.c.b16 %v1714, %v1706
    %2483 = vmatprep.subr.bf16.mxu0 %v1716
    %2484 = vmatpush1.bf16.msra.mxu0 %v1715
    %2485 = vmatprep.subr.bf16.mxu0 %v1724
    %2486 = vmatpush1.bf16.msra.mxu0 %v1723
    %2487 = vmatprep.subr.bf16.mxu0 %v1732
    %2488 = vmatpush1.bf16.msra.mxu0 %v1731
    %2489 = vmatprep.subr.bf16.mxu0 %v1740
    %2490 = vmatpush1.bf16.msra.mxu0 %v1739
    %2491 = vmatprep.subr.bf16.mxu0 %v1748
    %2492 = vmatpush1.bf16.msra.mxu0 %v1747
    %2493 = vmatprep.subr.bf16.mxu0 %v1756
    %2494 = vmatpush1.bf16.msra.mxu0 %v1755
    %2495 = vmatprep.subr.bf16.mxu0 %v1764
    %2496 = vmatpush1.bf16.msra.mxu0 %v1763
    %2497 = vmatprep.subr.bf16.mxu0 %v1772
    %2498 = vmatpush1.bf16.msra.mxu0 %v1771
    %2499 = vmatprep.subr.bf16.mxu0 %v1780
    %2500 = vmatpush1.bf16.msra.mxu0 %v1779
    %2501 = vmatprep.subr.bf16.mxu0 %v1788
    %2502 = vmatpush1.bf16.msra.mxu0 %v1787
    %2503 = vmatprep.subr.bf16.mxu0 %v1796
    %2504 = vmatpush1.bf16.msra.mxu0 %v1795
    %2505 = vmatprep.subr.bf16.mxu0 %v1804
    %2506 = vmatpush1.bf16.msra.mxu0 %v1803
    %2507 = vmatprep.subr.bf16.mxu0 %v1812
    %2508 = vmatpush1.bf16.msra.mxu0 %v1811
    %2509 = vmatprep.subr.bf16.mxu0 %v1820
    %2510 = vmatpush1.bf16.msra.mxu0 %v1819
    %2511 = vmatprep.subr.bf16.mxu0 %v1828
    %2512 = vmatpush1.bf16.msra.mxu0 %v1827
    %2513 = vmatprep.subr.bf16.mxu0 %v1836
    %2514 = vmatpush1.bf16.msra.mxu0 %v1835
    %2515 = vmatprep.mubr.bf16.mxu0 %v552
    %2516 = vmatmul.mubr.bf16.gmra.mrb[0].mxu0 %v551
    %v2517 = vpop.f32.mrb[0].mxu0
    %v2518 = vadd.f32 %v505, %v2517
    %v2519 = vpop.f32.mrb[0].mxu0
    %v2520 = vadd.f32 %v509, %v2519
    %v2521 = vpop.f32.mrb[0].mxu0
    %v2522 = vpop.f32.mrb[0].mxu0
    %2523 = vdwg.mxu0
    %2524 = vmatprep.subr.bf16.mxu0 %v1844
    %2525 = vmatpush1.bf16.msra.mxu0 %v1843
    %2526 = vmatprep.subr.bf16.mxu0 %v1852
    %2527 = vmatpush1.bf16.msra.mxu0 %v1851
    %2528 = vmatprep.subr.bf16.mxu0 %v1860
    %2529 = vmatpush1.bf16.msra.mxu0 %v1859
    %2530 = vmatprep.subr.bf16.mxu0 %v1868
    %2531 = vmatpush1.bf16.msra.mxu0 %v1867
    %2532 = vmatprep.subr.bf16.mxu0 %v1876
    %2533 = vmatpush1.bf16.msra.mxu0 %v1875
    %2534 = vmatprep.subr.bf16.mxu0 %v1884
    %2535 = vmatpush1.bf16.msra.mxu0 %v1883
    %2536 = vmatprep.subr.bf16.mxu0 %v1892
    %2537 = vmatpush1.bf16.msra.mxu0 %v1891
    %2538 = vmatprep.subr.bf16.mxu0 %v1900
    %2539 = vmatpush1.bf16.msra.mxu0 %v1899
    %2540 = vmatprep.subr.bf16.mxu0 %v1908
    %2541 = vmatpush1.bf16.msra.mxu0 %v1907
    %2542 = vmatprep.subr.bf16.mxu0 %v1916
    %2543 = vmatpush1.bf16.msra.mxu0 %v1915
    %2544 = vmatprep.subr.bf16.mxu0 %v1924
    %2545 = vmatpush1.bf16.msra.mxu0 %v1923
    %2546 = vmatprep.subr.bf16.mxu0 %v1932
    %2547 = vmatpush1.bf16.msra.mxu0 %v1931
    %2548 = vmatprep.subr.bf16.mxu0 %v1940
    %2549 = vmatpush1.bf16.msra.mxu0 %v1939
    %2550 = vmatprep.subr.bf16.mxu0 %v1948
    %2551 = vmatpush1.bf16.msra.mxu0 %v1947
    %2552 = vmatprep.subr.bf16.mxu0 %v1956
    %2553 = vmatpush1.bf16.msra.mxu0 %v1955
    %2554 = vmatprep.subr.bf16.mxu0 %v1964
    %2555 = vmatpush1.bf16.msra.mxu0 %v1963
    %2556 = vmatprep.mubr.bf16.mxu0 %v554
    %2557 = vmatmul.mubr.bf16.gmra.mrb[0].mxu0 %v553
    %v2558 = vpop.f32.mrb[0].mxu0
    %v2559 = vadd.f32 %v2518, %v2558
    %v2560 = vpop.f32.mrb[0].mxu0
    %v2561 = vadd.f32 %v2520, %v2560
    %v2562 = vpop.f32.mrb[0].mxu0
    %v2563 = vpop.f32.mrb[0].mxu0
    %2564 = vdwg.mxu0
    %2565 = vmatprep.subr.bf16.mxu0 %v1972
    %2566 = vmatpush1.bf16.msra.mxu0 %v1971
    %2567 = vmatprep.subr.bf16.mxu0 %v1980
    %2568 = vmatpush1.bf16.msra.mxu0 %v1979
    %2569 = vmatprep.subr.bf16.mxu0 %v1988
    %2570 = vmatpush1.bf16.msra.mxu0 %v1987
    %2571 = vmatprep.subr.bf16.mxu0 %v1996
    %2572 = vmatpush1.bf16.msra.mxu0 %v1995
    %2573 = vmatprep.subr.bf16.mxu0 %v2004
    %2574 = vmatpush1.bf16.msra.mxu0 %v2003
    %2575 = vmatprep.subr.bf16.mxu0 %v2012
    %2576 = vmatpush1.bf16.msra.mxu0 %v2011
    %2577 = vmatprep.subr.bf16.mxu0 %v2020
    %2578 = vmatpush1.bf16.msra.mxu0 %v2019
    %2579 = vmatprep.subr.bf16.mxu0 %v2028
    %2580 = vmatpush1.bf16.msra.mxu0 %v2027
    %2581 = vmatprep.subr.bf16.mxu0 %v2036
    %2582 = vmatpush1.bf16.msra.mxu0 %v2035
    %2583 = vmatprep.subr.bf16.mxu0 %v2044
    %2584 = vmatpush1.bf16.msra.mxu0 %v2043
    %2585 = vmatprep.subr.bf16.mxu0 %v2052
    %2586 = vmatpush1.bf16.msra.mxu0 %v2051
    %2587 = vmatprep.subr.bf16.mxu0 %v2060
    %2588 = vmatpush1.bf16.msra.mxu0 %v2059
    %2589 = vmatprep.subr.bf16.mxu0 %v2068
    %2590 = vmatpush1.bf16.msra.mxu0 %v2067
    %2591 = vmatprep.subr.bf16.mxu0 %v2076
    %2592 = vmatpush1.bf16.msra.mxu0 %v2075
    %2593 = vmatprep.subr.bf16.mxu0 %v2084
    %2594 = vmatpush1.bf16.msra.mxu0 %v2083
    %2595 = vmatprep.subr.bf16.mxu0 %v2092
    %2596 = vmatpush1.bf16.msra.mxu0 %v2091
    %2597 = vmatprep.mubr.bf16.mxu0 %v556
    %2598 = vmatmul.mubr.bf16.gmra.mrb[0].mxu0 %v555
    %v2599 = vpop.f32.mrb[0].mxu0
    %v2600 = vadd.f32 %v2559, %v2599
    %v2601 = vpop.f32.mrb[0].mxu0
    %v2602 = vadd.f32 %v2561, %v2601
    %v2603 = vpop.f32.mrb[0].mxu0
    %v2604 = vpop.f32.mrb[0].mxu0
    %2605 = vdwg.mxu0
    %2606 = vmatprep.subr.bf16.mxu0 %v1718
    %2607 = vmatpush1.bf16.msra.mxu0 %v1717
    %2608 = vmatprep.subr.bf16.mxu0 %v1726
    %2609 = vmatpush1.bf16.msra.mxu0 %v1725
    %2610 = vmatprep.subr.bf16.mxu0 %v1734
    %2611 = vmatpush1.bf16.msra.mxu0 %v1733
    %2612 = vmatprep.subr.bf16.mxu0 %v1742
    %2613 = vmatpush1.bf16.msra.mxu0 %v1741
    %2614 = vmatprep.subr.bf16.mxu0 %v1750
    %2615 = vmatpush1.bf16.msra.mxu0 %v1749
    %2616 = vmatprep.subr.bf16.mxu0 %v1758
    %2617 = vmatpush1.bf16.msra.mxu0 %v1757
    %2618 = vmatprep.subr.bf16.mxu0 %v1766
    %2619 = vmatpush1.bf16.msra.mxu0 %v1765
    %2620 = vmatprep.subr.bf16.mxu0 %v1774
    %2621 = vmatpush1.bf16.msra.mxu0 %v1773
    %2622 = vmatprep.subr.bf16.mxu0 %v1782
    %2623 = vmatpush1.bf16.msra.mxu0 %v1781
    %2624 = vmatprep.subr.bf16.mxu0 %v1790
    %2625 = vmatpush1.bf16.msra.mxu0 %v1789
    %2626 = vmatprep.subr.bf16.mxu0 %v1798
    %2627 = vmatpush1.bf16.msra.mxu0 %v1797
    %2628 = vmatprep.subr.bf16.mxu0 %v1806
    %2629 = vmatpush1.bf16.msra.mxu0 %v1805
    %2630 = vmatprep.subr.bf16.mxu0 %v1814
    %2631 = vmatpush1.bf16.msra.mxu0 %v1813
    %2632 = vmatprep.subr.bf16.mxu0 %v1822
    %2633 = vmatpush1.bf16.msra.mxu0 %v1821
    %2634 = vmatprep.subr.bf16.mxu0 %v1830
    %2635 = vmatpush1.bf16.msra.mxu0 %v1829
    %2636 = vmatprep.subr.bf16.mxu0 %v1838
    %2637 = vmatpush1.bf16.msra.mxu0 %v1837
    %2638 = vmatprep.mubr.bf16.mxu0 %v552
    %2639 = vmatmul.mubr.bf16.gmra.mrb[0].mxu0 %v551
    %v2640 = vpop.f32.mrb[0].mxu0
    %v2641 = vadd.f32 %v513, %v2640
    %v2642 = vpop.f32.mrb[0].mxu0
    %v2643 = vadd.f32 %v517, %v2642
    %v2644 = vpop.f32.mrb[0].mxu0
    %v2645 = vpop.f32.mrb[0].mxu0
    %2646 = vdwg.mxu0
    %2647 = vmatprep.subr.bf16.mxu0 %v1846
    %2648 = vmatpush1.bf16.msra.mxu0 %v1845
    %2649 = vmatprep.subr.bf16.mxu0 %v1854
    %2650 = vmatpush1.bf16.msra.mxu0 %v1853
    %2651 = vmatprep.subr.bf16.mxu0 %v1862
    %2652 = vmatpush1.bf16.msra.mxu0 %v1861
    %2653 = vmatprep.subr.bf16.mxu0 %v1870
    %2654 = vmatpush1.bf16.msra.mxu0 %v1869
    %2655 = vmatprep.subr.bf16.mxu0 %v1878
    %2656 = vmatpush1.bf16.msra.mxu0 %v1877
    %2657 = vmatprep.subr.bf16.mxu0 %v1886
    %2658 = vmatpush1.bf16.msra.mxu0 %v1885
    %2659 = vmatprep.subr.bf16.mxu0 %v1894
    %2660 = vmatpush1.bf16.msra.mxu0 %v1893
    %2661 = vmatprep.subr.bf16.mxu0 %v1902
    %2662 = vmatpush1.bf16.msra.mxu0 %v1901
    %2663 = vmatprep.subr.bf16.mxu0 %v1910
    %2664 = vmatpush1.bf16.msra.mxu0 %v1909
    %2665 = vmatprep.subr.bf16.mxu0 %v1918
    %2666 = vmatpush1.bf16.msra.mxu0 %v1917
    %2667 = vmatprep.subr.bf16.mxu0 %v1926
    %2668 = vmatpush1.bf16.msra.mxu0 %v1925
    %2669 = vmatprep.subr.bf16.mxu0 %v1934
    %2670 = vmatpush1.bf16.msra.mxu0 %v1933
    %2671 = vmatprep.subr.bf16.mxu0 %v1942
    %2672 = vmatpush1.bf16.msra.mxu0 %v1941
    %2673 = vmatprep.subr.bf16.mxu0 %v1950
    %2674 = vmatpush1.bf16.msra.mxu0 %v1949
    %2675 = vmatprep.subr.bf16.mxu0 %v1958
    %2676 = vmatpush1.bf16.msra.mxu0 %v1957
    %2677 = vmatprep.subr.bf16.mxu0 %v1966
    %2678 = vmatpush1.bf16.msra.mxu0 %v1965
    %2679 = vmatprep.mubr.bf16.mxu0 %v554
    %2680 = vmatmul.mubr.bf16.gmra.mrb[0].mxu0 %v553
    %v2681 = vpop.f32.mrb[0].mxu0
    %v2682 = vadd.f32 %v2641, %v2681
    %v2683 = vpop.f32.mrb[0].mxu0
    %v2684 = vadd.f32 %v2643, %v2683
    %v2685 = vpop.f32.mrb[0].mxu0
    %v2686 = vpop.f32.mrb[0].mxu0
    %2687 = vdwg.mxu0
    %2688 = vmatprep.subr.bf16.mxu0 %v1974
    %2689 = vmatpush1.bf16.msra.mxu0 %v1973
    %2690 = vmatprep.subr.bf16.mxu0 %v1982
    %2691 = vmatpush1.bf16.msra.mxu0 %v1981
    %2692 = vmatprep.subr.bf16.mxu0 %v1990
    %2693 = vmatpush1.bf16.msra.mxu0 %v1989
    %2694 = vmatprep.subr.bf16.mxu0 %v1998
    %2695 = vmatpush1.bf16.msra.mxu0 %v1997
    %2696 = vmatprep.subr.bf16.mxu0 %v2006
    %2697 = vmatpush1.bf16.msra.mxu0 %v2005
    %2698 = vmatprep.subr.bf16.mxu0 %v2014
    %2699 = vmatpush1.bf16.msra.mxu0 %v2013
    %2700 = vmatprep.subr.bf16.mxu0 %v2022
    %2701 = vmatpush1.bf16.msra.mxu0 %v2021
    %2702 = vmatprep.subr.bf16.mxu0 %v2030
    %2703 = vmatpush1.bf16.msra.mxu0 %v2029
    %2704 = vmatprep.subr.bf16.mxu0 %v2038
    %2705 = vmatpush1.bf16.msra.mxu0 %v2037
    %2706 = vmatprep.subr.bf16.mxu0 %v2046
    %2707 = vmatpush1.bf16.msra.mxu0 %v2045
    %2708 = vmatprep.subr.bf16.mxu0 %v2054
    %2709 = vmatpush1.bf16.msra.mxu0 %v2053
    %2710 = vmatprep.subr.bf16.mxu0 %v2062
    %2711 = vmatpush1.bf16.msra.mxu0 %v2061
    %2712 = vmatprep.subr.bf16.mxu0 %v2070
    %2713 = vmatpush1.bf16.msra.mxu0 %v2069
    %2714 = vmatprep.subr.bf16.mxu0 %v2078
    %2715 = vmatpush1.bf16.msra.mxu0 %v2077
    %2716 = vmatprep.subr.bf16.mxu0 %v2086
    %2717 = vmatpush1.bf16.msra.mxu0 %v2085
    %2718 = vmatprep.subr.bf16.mxu0 %v2094
    %2719 = vmatpush1.bf16.msra.mxu0 %v2093
    %2720 = vmatprep.mubr.bf16.mxu0 %v556
    %2721 = vmatmul.mubr.bf16.gmra.mrb[0].mxu0 %v555
    %v2722 = vpop.f32.mrb[0].mxu0
    %v2723 = vadd.f32 %v2682, %v2722
    %v2724 = vpop.f32.mrb[0].mxu0
    %v2725 = vadd.f32 %v2684, %v2724
    %v2726 = vpop.f32.mrb[0].mxu0
    %v2727 = vpop.f32.mrb[0].mxu0
    %2728 = vdwg.mxu0
    %2729 = vmatprep.subr.bf16.mxu0 %v1720
    %2730 = vmatpush1.bf16.msra.mxu0 %v1719
    %2731 = vmatprep.subr.bf16.mxu0 %v1728
    %2732 = vmatpush1.bf16.msra.mxu0 %v1727
    %2733 = vmatprep.subr.bf16.mxu0 %v1736
    %2734 = vmatpush1.bf16.msra.mxu0 %v1735
    %2735 = vmatprep.subr.bf16.mxu0 %v1744
    %2736 = vmatpush1.bf16.msra.mxu0 %v1743
    %2737 = vmatprep.subr.bf16.mxu0 %v1752
    %2738 = vmatpush1.bf16.msra.mxu0 %v1751
    %2739 = vmatprep.subr.bf16.mxu0 %v1760
    %2740 = vmatpush1.bf16.msra.mxu0 %v1759
    %2741 = vmatprep.subr.bf16.mxu0 %v1768
    %2742 = vmatpush1.bf16.msra.mxu0 %v1767
    %2743 = vmatprep.subr.bf16.mxu0 %v1776
    %2744 = vmatpush1.bf16.msra.mxu0 %v1775
    %2745 = vmatprep.subr.bf16.mxu0 %v1784
    %2746 = vmatpush1.bf16.msra.mxu0 %v1783
    %2747 = vmatprep.subr.bf16.mxu0 %v1792
    %2748 = vmatpush1.bf16.msra.mxu0 %v1791
    %2749 = vmatprep.subr.bf16.mxu0 %v1800
    %2750 = vmatpush1.bf16.msra.mxu0 %v1799
    %2751 = vmatprep.subr.bf16.mxu0 %v1808
    %2752 = vmatpush1.bf16.msra.mxu0 %v1807
    %2753 = vmatprep.subr.bf16.mxu0 %v1816
    %2754 = vmatpush1.bf16.msra.mxu0 %v1815
    %2755 = vmatprep.subr.bf16.mxu0 %v1824
    %2756 = vmatpush1.bf16.msra.mxu0 %v1823
    %2757 = vmatprep.subr.bf16.mxu0 %v1832
    %2758 = vmatpush1.bf16.msra.mxu0 %v1831
    %2759 = vmatprep.subr.bf16.mxu0 %v1840
    %2760 = vmatpush1.bf16.msra.mxu0 %v1839
    %2761 = vmatprep.mubr.bf16.mxu0 %v552
    %2762 = vmatmul.mubr.bf16.gmra.mrb[0].mxu0 %v551
    %v2763 = vpop.f32.mrb[0].mxu0
    %v2764 = vadd.f32 %v521, %v2763
    %v2765 = vpop.f32.mrb[0].mxu0
    %v2766 = vadd.f32 %v525, %v2765
    %v2767 = vpop.f32.mrb[0].mxu0
    %v2768 = vpop.f32.mrb[0].mxu0
    %2769 = vdwg.mxu0
    %2770 = vmatprep.subr.bf16.mxu0 %v1848
    %2771 = vmatpush1.bf16.msra.mxu0 %v1847
    %2772 = vmatprep.subr.bf16.mxu0 %v1856
    %2773 = vmatpush1.bf16.msra.mxu0 %v1855
    %2774 = vmatprep.subr.bf16.mxu0 %v1864
    %2775 = vmatpush1.bf16.msra.mxu0 %v1863
    %2776 = vmatprep.subr.bf16.mxu0 %v1872
    %2777 = vmatpush1.bf16.msra.mxu0 %v1871
    %2778 = vmatprep.subr.bf16.mxu0 %v1880
    %2779 = vmatpush1.bf16.msra.mxu0 %v1879
    %2780 = vmatprep.subr.bf16.mxu0 %v1888
    %2781 = vmatpush1.bf16.msra.mxu0 %v1887
    %2782 = vmatprep.subr.bf16.mxu0 %v1896
    %2783 = vmatpush1.bf16.msra.mxu0 %v1895
    %2784 = vmatprep.subr.bf16.mxu0 %v1904
    %2785 = vmatpush1.bf16.msra.mxu0 %v1903
    %2786 = vmatprep.subr.bf16.mxu0 %v1912
    %2787 = vmatpush1.bf16.msra.mxu0 %v1911
    %2788 = vmatprep.subr.bf16.mxu0 %v1920
    %2789 = vmatpush1.bf16.msra.mxu0 %v1919
    %2790 = vmatprep.subr.bf16.mxu0 %v1928
    %2791 = vmatpush1.bf16.msra.mxu0 %v1927
    %2792 = vmatprep.subr.bf16.mxu0 %v1936
    %2793 = vmatpush1.bf16.msra.mxu0 %v1935
    %2794 = vmatprep.subr.bf16.mxu0 %v1944
    %2795 = vmatpush1.bf16.msra.mxu0 %v1943
    %2796 = vmatprep.subr.bf16.mxu0 %v1952
    %2797 = vmatpush1.bf16.msra.mxu0 %v1951
    %2798 = vmatprep.subr.bf16.mxu0 %v1960
    %2799 = vmatpush1.bf16.msra.mxu0 %v1959
    %2800 = vmatprep.subr.bf16.mxu0 %v1968
    %2801 = vmatpush1.bf16.msra.mxu0 %v1967
    %2802 = vmatprep.mubr.bf16.mxu0 %v554
    %2803 = vmatmul.mubr.bf16.gmra.mrb[0].mxu0 %v553
    %v2804 = vpop.f32.mrb[0].mxu0
    %v2805 = vadd.f32 %v2764, %v2804
    %v2806 = vpop.f32.mrb[0].mxu0
    %v2807 = vadd.f32 %v2766, %v2806
    %v2808 = vpop.f32.mrb[0].mxu0
    %v2809 = vpop.f32.mrb[0].mxu0
    %2810 = vdwg.mxu0
    %2811 = vmatprep.subr.bf16.mxu0 %v1976
    %2812 = vmatpush1.bf16.msra.mxu0 %v1975
    %2813 = vmatprep.subr.bf16.mxu0 %v1984
    %2814 = vmatpush1.bf16.msra.mxu0 %v1983
    %2815 = vmatprep.subr.bf16.mxu0 %v1992
    %2816 = vmatpush1.bf16.msra.mxu0 %v1991
    %2817 = vmatprep.subr.bf16.mxu0 %v2000
    %2818 = vmatpush1.bf16.msra.mxu0 %v1999
    %2819 = vmatprep.subr.bf16.mxu0 %v2008
    %2820 = vmatpush1.bf16.msra.mxu0 %v2007
    %2821 = vmatprep.subr.bf16.mxu0 %v2016
    %2822 = vmatpush1.bf16.msra.mxu0 %v2015
    %2823 = vmatprep.subr.bf16.mxu0 %v2024
    %2824 = vmatpush1.bf16.msra.mxu0 %v2023
    %2825 = vmatprep.subr.bf16.mxu0 %v2032
    %2826 = vmatpush1.bf16.msra.mxu0 %v2031
    %2827 = vmatprep.subr.bf16.mxu0 %v2040
    %2828 = vmatpush1.bf16.msra.mxu0 %v2039
    %2829 = vmatprep.subr.bf16.mxu0 %v2048
    %2830 = vmatpush1.bf16.msra.mxu0 %v2047
    %2831 = vmatprep.subr.bf16.mxu0 %v2056
    %2832 = vmatpush1.bf16.msra.mxu0 %v2055
    %2833 = vmatprep.subr.bf16.mxu0 %v2064
    %2834 = vmatpush1.bf16.msra.mxu0 %v2063
    %2835 = vmatprep.subr.bf16.mxu0 %v2072
    %2836 = vmatpush1.bf16.msra.mxu0 %v2071
    %2837 = vmatprep.subr.bf16.mxu0 %v2080
    %2838 = vmatpush1.bf16.msra.mxu0 %v2079
    %2839 = vmatprep.subr.bf16.mxu0 %v2088
    %2840 = vmatpush1.bf16.msra.mxu0 %v2087
    %2841 = vmatprep.subr.bf16.mxu0 %v2096
    %2842 = vmatpush1.bf16.msra.mxu0 %v2095
    %2843 = vmatprep.mubr.bf16.mxu0 %v556
    %2844 = vmatmul.mubr.bf16.gmra.mrb[0].mxu0 %v555
    %v2845 = vpop.f32.mrb[0].mxu0
    %v2846 = vadd.f32 %v2805, %v2845
    %v2847 = vpop.f32.mrb[0].mxu0
    %v2848 = vadd.f32 %v2807, %v2847
    %v2849 = vpop.f32.mrb[0].mxu0
    %v2850 = vpop.f32.mrb[0].mxu0
    %2851 = vdwg.mxu0
    %2852 = vmatprep.subr.bf16.mxu0 %v1722
    %2853 = vmatpush1.bf16.msra.mxu0 %v1721
    %2854 = vmatprep.subr.bf16.mxu0 %v1730
    %2855 = vmatpush1.bf16.msra.mxu0 %v1729
    %2856 = vmatprep.subr.bf16.mxu0 %v1738
    %2857 = vmatpush1.bf16.msra.mxu0 %v1737
    %2858 = vmatprep.subr.bf16.mxu0 %v1746
    %2859 = vmatpush1.bf16.msra.mxu0 %v1745
    %2860 = vmatprep.subr.bf16.mxu0 %v1754
    %2861 = vmatpush1.bf16.msra.mxu0 %v1753
    %2862 = vmatprep.subr.bf16.mxu0 %v1762
    %2863 = vmatpush1.bf16.msra.mxu0 %v1761
    %2864 = vmatprep.subr.bf16.mxu0 %v1770
    %2865 = vmatpush1.bf16.msra.mxu0 %v1769
    %2866 = vmatprep.subr.bf16.mxu0 %v1778
    %2867 = vmatpush1.bf16.msra.mxu0 %v1777
    %2868 = vmatprep.subr.bf16.mxu0 %v1786
    %2869 = vmatpush1.bf16.msra.mxu0 %v1785
    %2870 = vmatprep.subr.bf16.mxu0 %v1794
    %2871 = vmatpush1.bf16.msra.mxu0 %v1793
    %2872 = vmatprep.subr.bf16.mxu0 %v1802
    %2873 = vmatpush1.bf16.msra.mxu0 %v1801
    %2874 = vmatprep.subr.bf16.mxu0 %v1810
    %2875 = vmatpush1.bf16.msra.mxu0 %v1809
    %2876 = vmatprep.subr.bf16.mxu0 %v1818
    %2877 = vmatpush1.bf16.msra.mxu0 %v1817
    %2878 = vmatprep.subr.bf16.mxu0 %v1826
    %2879 = vmatpush1.bf16.msra.mxu0 %v1825
    %2880 = vmatprep.subr.bf16.mxu0 %v1834
    %2881 = vmatpush1.bf16.msra.mxu0 %v1833
    %2882 = vmatprep.subr.bf16.mxu0 %v1842
    %2883 = vmatpush1.bf16.msra.mxu0 %v1841
    %2884 = vmatprep.mubr.bf16.mxu0 %v552
    %2885 = vmatmul.mubr.bf16.gmra.mrb[0].mxu0 %v551
    %v2886 = vpop.f32.mrb[0].mxu0
    %v2887 = vadd.f32 %v529, %v2886
    %v2888 = vpop.f32.mrb[0].mxu0
    %v2889 = vadd.f32 %v533, %v2888
    %v2890 = vpop.f32.mrb[0].mxu0
    %v2891 = vpop.f32.mrb[0].mxu0
    %2892 = vdwg.mxu0
    %2893 = vmatprep.subr.bf16.mxu0 %v1850
    %2894 = vmatpush1.bf16.msra.mxu0 %v1849
    %2895 = vmatprep.subr.bf16.mxu0 %v1858
    %2896 = vmatpush1.bf16.msra.mxu0 %v1857
    %2897 = vmatprep.subr.bf16.mxu0 %v1866
    %2898 = vmatpush1.bf16.msra.mxu0 %v1865
    %2899 = vmatprep.subr.bf16.mxu0 %v1874
    %2900 = vmatpush1.bf16.msra.mxu0 %v1873
    %2901 = vmatprep.subr.bf16.mxu0 %v1882
    %2902 = vmatpush1.bf16.msra.mxu0 %v1881
    %2903 = vmatprep.subr.bf16.mxu0 %v1890
    %2904 = vmatpush1.bf16.msra.mxu0 %v1889
    %2905 = vmatprep.subr.bf16.mxu0 %v1898
    %2906 = vmatpush1.bf16.msra.mxu0 %v1897
    %2907 = vmatprep.subr.bf16.mxu0 %v1906
    %2908 = vmatpush1.bf16.msra.mxu0 %v1905
    %2909 = vmatprep.subr.bf16.mxu0 %v1914
    %2910 = vmatpush1.bf16.msra.mxu0 %v1913
    %2911 = vmatprep.subr.bf16.mxu0 %v1922
    %2912 = vmatpush1.bf16.msra.mxu0 %v1921
    %2913 = vmatprep.subr.bf16.mxu0 %v1930
    %2914 = vmatpush1.bf16.msra.mxu0 %v1929
    %2915 = vmatprep.subr.bf16.mxu0 %v1938
    %2916 = vmatpush1.bf16.msra.mxu0 %v1937
    %2917 = vmatprep.subr.bf16.mxu0 %v1946
    %2918 = vmatpush1.bf16.msra.mxu0 %v1945
    %2919 = vmatprep.subr.bf16.mxu0 %v1954
    %2920 = vmatpush1.bf16.msra.mxu0 %v1953
    %2921 = vmatprep.subr.bf16.mxu0 %v1962
    %2922 = vmatpush1.bf16.msra.mxu0 %v1961
    %2923 = vmatprep.subr.bf16.mxu0 %v1970
    %2924 = vmatpush1.bf16.msra.mxu0 %v1969
    %2925 = vmatprep.mubr.bf16.mxu0 %v554
    %2926 = vmatmul.mubr.bf16.gmra.mrb[0].mxu0 %v553
    %v2927 = vpop.f32.mrb[0].mxu0
    %v2928 = vadd.f32 %v2887, %v2927
    %v2929 = vpop.f32.mrb[0].mxu0
    %v2930 = vadd.f32 %v2889, %v2929
    %v2931 = vpop.f32.mrb[0].mxu0
    %v2932 = vpop.f32.mrb[0].mxu0
    %2933 = vdwg.mxu0
    %2934 = vmatprep.subr.bf16.mxu0 %v1978
    %2935 = vmatpush1.bf16.msra.mxu0 %v1977
    %2936 = vmatprep.subr.bf16.mxu0 %v1986
    %2937 = vmatpush1.bf16.msra.mxu0 %v1985
    %2938 = vmatprep.subr.bf16.mxu0 %v1994
    %2939 = vmatpush1.bf16.msra.mxu0 %v1993
    %2940 = vmatprep.subr.bf16.mxu0 %v2002
    %2941 = vmatpush1.bf16.msra.mxu0 %v2001
    %2942 = vmatprep.subr.bf16.mxu0 %v2010
    %2943 = vmatpush1.bf16.msra.mxu0 %v2009
    %2944 = vmatprep.subr.bf16.mxu0 %v2018
    %2945 = vmatpush1.bf16.msra.mxu0 %v2017
    %2946 = vmatprep.subr.bf16.mxu0 %v2026
    %2947 = vmatpush1.bf16.msra.mxu0 %v2025
    %2948 = vmatprep.subr.bf16.mxu0 %v2034
    %2949 = vmatpush1.bf16.msra.mxu0 %v2033
    %2950 = vmatprep.subr.bf16.mxu0 %v2042
    %2951 = vmatpush1.bf16.msra.mxu0 %v2041
    %2952 = vmatprep.subr.bf16.mxu0 %v2050
    %2953 = vmatpush1.bf16.msra.mxu0 %v2049
    %2954 = vmatprep.subr.bf16.mxu0 %v2058
    %2955 = vmatpush1.bf16.msra.mxu0 %v2057
    %2956 = vmatprep.subr.bf16.mxu0 %v2066
    %2957 = vmatpush1.bf16.msra.mxu0 %v2065
    %2958 = vmatprep.subr.bf16.mxu0 %v2074
    %2959 = vmatpush1.bf16.msra.mxu0 %v2073
    %2960 = vmatprep.subr.bf16.mxu0 %v2082
    %2961 = vmatpush1.bf16.msra.mxu0 %v2081
    %2962 = vmatprep.subr.bf16.mxu0 %v2090
    %2963 = vmatpush1.bf16.msra.mxu0 %v2089
    %2964 = vmatprep.subr.bf16.mxu0 %v2098
    %2965 = vmatpush1.bf16.msra.mxu0 %v2097
    %2966 = vmatprep.mubr.bf16.mxu0 %v556
    %2967 = vmatmul.mubr.bf16.gmra.mrb[0].mxu0 %v555
    %v2968 = vpop.f32.mrb[0].mxu0
    %v2969 = vadd.f32 %v2928, %v2968
    %v2970 = vpop.f32.mrb[0].mxu0
    %v2971 = vadd.f32 %v2930, %v2970
    %v2972 = vpop.f32.mrb[0].mxu0
    %v2973 = vpop.f32.mrb[0].mxu0
    %2974 = vdwg.mxu0
    %v2975 = vadd.f32 %v2600, %v2602
    %v2976 = vadd.f32 %v2975, %v2723
    %v2977 = vadd.f32 %v2976, %v2725
    %v2978 = vadd.f32 %v2977, %v2846
    %v2979 = vadd.f32 %v2978, %v2848
    %v2980 = vadd.f32 %v2979, %v2969
    %v2981 = vadd.f32 %v2980, %v2971
    %2982 = vadd.xlane.f32.xlu0 %v2981
    %v2983 = vpop.xlane.xlu0 %2982
    %v2984 = vrcp.pop 1024.0
    %v2985 = vmul.f32 %v2983, %v2984
    %v2986 = vsub.f32 %v2600, %v2985
    %v2987 = vsub.f32 %v2602, %v2985
    %v2988 = vsub.f32 %v2723, %v2985
    %v2989 = vsub.f32 %v2725, %v2985
    %v2990 = vsub.f32 %v2846, %v2985
    %v2991 = vsub.f32 %v2848, %v2985
    %v2992 = vsub.f32 %v2969, %v2985
    %v2993 = vsub.f32 %v2971, %v2985
    %v2994 = vmul.f32 %v2986, %v2986
    %v2995 = vmul.f32 %v2987, %v2987
    %v2996 = vmul.f32 %v2988, %v2988
    %v2997 = vmul.f32 %v2989, %v2989
    %v2998 = vmul.f32 %v2990, %v2990
    %v2999 = vmul.f32 %v2991, %v2991
    %v3000 = vmul.f32 %v2992, %v2992
    %v3001 = vmul.f32 %v2993, %v2993
    %v3002 = vadd.f32 %v2994, %v2995
    %v3003 = vadd.f32 %v3002, %v2996
    %v3004 = vadd.f32 %v3003, %v2997
    %v3005 = vadd.f32 %v3004, %v2998
    %v3006 = vadd.f32 %v3005, %v2999
    %v3007 = vadd.f32 %v3006, %v3000
    %v3008 = vadd.f32 %v3007, %v3001
    %3009 = vadd.xlane.f32.xlu0 %v3008
    %v3010 = vpop.xlane.xlu0 %3009
    %v3011 = vmul.f32 %v3010, %v2984
    %v3012 = vadd.f32 %v3011, 1e-05
    %v3013 = vrsqrt.pop %v3012
    %v3014 = vmul.f32 %v2986, %v3013
    %v3015 = vmul.f32 %v2987, %v3013
    %v3016 = vmul.f32 %v2988, %v3013
    %v3017 = vmul.f32 %v2989, %v3013
    %v3018 = vmul.f32 %v2990, %v3013
    %v3019 = vmul.f32 %v2991, %v3013
    %v3020 = vmul.f32 %v2992, %v3013
    %v3021 = vmul.f32 %v2993, %v3013
    %v3022 = vld [vmem:[#allocation8] sm:$0xff]
    %v3024 = vlaneseq
    %v3025 = vshrl.u32 %v3024, 7
    %v3026 = vsub.s32 0, %v3025
    %v3027 = vrot.slane %v3022, %v3026
    %v3028 = vlaneseq
    %v3029 = vshrl.u32 %v3028, 7
    %v3030 = vsub.s32 1, %v3029
    %v3031 = vrot.slane %v3022, %v3030
    %v3032 = vlaneseq
    %v3033 = vshrl.u32 %v3032, 7
    %v3034 = vsub.s32 2, %v3033
    %v3035 = vrot.slane %v3022, %v3034
    %v3036 = vlaneseq
    %v3037 = vshrl.u32 %v3036, 7
    %v3038 = vsub.s32 3, %v3037
    %v3039 = vrot.slane %v3022, %v3038
    %v3040 = vlaneseq
    %v3041 = vshrl.u32 %v3040, 7
    %v3042 = vsub.s32 4, %v3041
    %v3043 = vrot.slane %v3022, %v3042
    %v3044 = vlaneseq
    %v3045 = vshrl.u32 %v3044, 7
    %v3046 = vsub.s32 5, %v3045
    %v3047 = vrot.slane %v3022, %v3046
    %v3048 = vlaneseq
    %v3049 = vshrl.u32 %v3048, 7
    %v3050 = vsub.s32 6, %v3049
    %v3051 = vrot.slane %v3022, %v3050
    %v3052 = vlaneseq
    %v3053 = vshrl.u32 %v3052, 7
    %v3054 = vsub.s32 7, %v3053
    %v3055 = vrot.slane %v3022, %v3054
    %v3064 = vmul.f32 %v3014, %v3027
    %v3065 = vmul.f32 %v3015, %v3031
    %v3066 = vmul.f32 %v3016, %v3035
    %v3067 = vmul.f32 %v3017, %v3039
    %v3068 = vmul.f32 %v3018, %v3043
    %v3069 = vmul.f32 %v3019, %v3047
    %v3070 = vmul.f32 %v3020, %v3051
    %v3071 = vmul.f32 %v3021, %v3055
    %v3072 = vld [vmem:[#allocation10] sm:$0xff]
    %v3074 = vlaneseq
    %v3075 = vshrl.u32 %v3074, 7
    %v3076 = vsub.s32 0, %v3075
    %v3077 = vrot.slane %v3072, %v3076
    %v3078 = vlaneseq
    %v3079 = vshrl.u32 %v3078, 7
    %v3080 = vsub.s32 1, %v3079
    %v3081 = vrot.slane %v3072, %v3080
    %v3082 = vlaneseq
    %v3083 = vshrl.u32 %v3082, 7
    %v3084 = vsub.s32 2, %v3083
    %v3085 = vrot.slane %v3072, %v3084
    %v3086 = vlaneseq
    %v3087 = vshrl.u32 %v3086, 7
    %v3088 = vsub.s32 3, %v3087
    %v3089 = vrot.slane %v3072, %v3088
    %v3090 = vlaneseq
    %v3091 = vshrl.u32 %v3090, 7
    %v3092 = vsub.s32 4, %v3091
    %v3093 = vrot.slane %v3072, %v3092
    %v3094 = vlaneseq
    %v3095 = vshrl.u32 %v3094, 7
    %v3096 = vsub.s32 5, %v3095
    %v3097 = vrot.slane %v3072, %v3096
    %v3098 = vlaneseq
    %v3099 = vshrl.u32 %v3098, 7
    %v3100 = vsub.s32 6, %v3099
    %v3101 = vrot.slane %v3072, %v3100
    %v3102 = vlaneseq
    %v3103 = vshrl.u32 %v3102, 7
    %v3104 = vsub.s32 7, %v3103
    %v3105 = vrot.slane %v3072, %v3104
    %v3114 = vadd.f32 %v3064, %v3077
    %v3115 = vadd.f32 %v3065, %v3081
    %v3116 = vadd.f32 %v3066, %v3085
    %v3117 = vadd.f32 %v3067, %v3089
    %v3118 = vadd.f32 %v3068, %v3093
    %v3119 = vadd.f32 %v3069, %v3097
    %v3120 = vadd.f32 %v3070, %v3101
    %v3121 = vadd.f32 %v3071, %v3105
    %v3122 = vmax.f32 %v3114, 0.0
    %v3123 = vmax.f32 %v3115, 0.0
    %v3124 = vmax.f32 %v3116, 0.0
    %v3125 = vmax.f32 %v3117, 0.0
    %v3126 = vmax.f32 %v3118, 0.0
    %v3127 = vmax.f32 %v3119, 0.0
    %v3128 = vmax.f32 %v3120, 0.0
    %v3129 = vmax.f32 %v3121, 0.0
    %v3130 = vpack.c.bf16 %v3122, %v3122
    %v3131 = vpack.c.bf16 %v3123, %v3123
    %v3132 = vpack.c.bf16 %v3124, %v3124
    %v3133 = vpack.c.bf16 %v3125, %v3125
    %v3134 = vpack.c.bf16 %v3126, %v3126
    %v3135 = vpack.c.bf16 %v3127, %v3127
    %v3136 = vpack.c.bf16 %v3128, %v3128
    %v3137 = vpack.c.bf16 %v3129, %v3129
    %v3138 = vld [vmem:[#allocation11] sm:$0xf]
    %v3139 = vld [vmem:[#allocation11 + $0x4] sm:$0xf]
    %v3140 = vld [vmem:[#allocation11 + $0x8] sm:$0xf]
    %v3141 = vld [vmem:[#allocation11 + $0xc] sm:$0xf]
    %v3142 = vld [vmem:[#allocation11 + $0x10] sm:$0xf]
    %v3143 = vld [vmem:[#allocation11 + $0x14] sm:$0xf]
    %v3144 = vld [vmem:[#allocation11 + $0x18] sm:$0xf]
    %v3145 = vld [vmem:[#allocation11 + $0x1c] sm:$0xf]
    %v3146 = vld [vmem:[#allocation11 + $0x20] sm:$0xf]
    %v3147 = vld [vmem:[#allocation11 + $0x24] sm:$0xf]
    %v3148 = vld [vmem:[#allocation11 + $0x28] sm:$0xf]
    %v3149 = vld [vmem:[#allocation11 + $0x2c] sm:$0xf]
    %v3150 = vld [vmem:[#allocation11 + $0x30] sm:$0xf]
    %v3151 = vld [vmem:[#allocation11 + $0x34] sm:$0xf]
    %v3152 = vld [vmem:[#allocation11 + $0x38] sm:$0xf]
    %v3153 = vld [vmem:[#allocation11 + $0x3c] sm:$0xf]
    %v3154 = vld [vmem:[#allocation11 + $0x40] sm:$0xf]
    %v3155 = vld [vmem:[#allocation11 + $0x44] sm:$0xf]
    %v3156 = vld [vmem:[#allocation11 + $0x48] sm:$0xf]
    %v3157 = vld [vmem:[#allocation11 + $0x4c] sm:$0xf]
    %v3158 = vld [vmem:[#allocation11 + $0x50] sm:$0xf]
    %v3159 = vld [vmem:[#allocation11 + $0x54] sm:$0xf]
    %v3160 = vld [vmem:[#allocation11 + $0x58] sm:$0xf]
    %v3161 = vld [vmem:[#allocation11 + $0x5c] sm:$0xf]
    %v3162 = vld [vmem:[#allocation11 + $0x60] sm:$0xf]
    %v3163 = vld [vmem:[#allocation11 + $0x64] sm:$0xf]
    %v3164 = vld [vmem:[#allocation11 + $0x68] sm:$0xf]
    %v3165 = vld [vmem:[#allocation11 + $0x6c] sm:$0xf]
    %v3166 = vld [vmem:[#allocation11 + $0x70] sm:$0xf]
    %v3167 = vld [vmem:[#allocation11 + $0x74] sm:$0xf]
    %v3168 = vld [vmem:[#allocation11 + $0x78] sm:$0xf]
    %v3169 = vld [vmem:[#allocation11 + $0x7c] sm:$0xf]
    %v3170 = vld [vmem:[#allocation11 + $0x80] sm:$0xf]
    %v3171 = vld [vmem:[#allocation11 + $0x84] sm:$0xf]
    %v3172 = vld [vmem:[#allocation11 + $0x88] sm:$0xf]
    %v3173 = vld [vmem:[#allocation11 + $0x8c] sm:$0xf]
    %v3174 = vld [vmem:[#allocation11 + $0x90] sm:$0xf]
    %v3175 = vld [vmem:[#allocation11 + $0x94] sm:$0xf]
    %v3176 = vld [vmem:[#allocation11 + $0x98] sm:$0xf]
    %v3177 = vld [vmem:[#allocation11 + $0x9c] sm:$0xf]
    %v3178 = vld [vmem:[#allocation11 + $0xa0] sm:$0xf]
    %v3179 = vld [vmem:[#allocation11 + $0xa4] sm:$0xf]
    %v3180 = vld [vmem:[#allocation11 + $0xa8] sm:$0xf]
    %v3181 = vld [vmem:[#allocation11 + $0xac] sm:$0xf]
    %v3182 = vld [vmem:[#allocation11 + $0xb0] sm:$0xf]
    %v3183 = vld [vmem:[#allocation11 + $0xb4] sm:$0xf]
    %v3184 = vld [vmem:[#allocation11 + $0xb8] sm:$0xf]
    %v3185 = vld [vmem:[#allocation11 + $0xbc] sm:$0xf]
    %v3186 = vld [vmem:[#allocation11 + $0xc0] sm:$0xf]
    %v3187 = vld [vmem:[#allocation11 + $0xc4] sm:$0xf]
    %v3188 = vld [vmem:[#allocation11 + $0xc8] sm:$0xf]
    %v3189 = vld [vmem:[#allocation11 + $0xcc] sm:$0xf]
    %v3190 = vld [vmem:[#allocation11 + $0xd0] sm:$0xf]
    %v3191 = vld [vmem:[#allocation11 + $0xd4] sm:$0xf]
    %v3192 = vld [vmem:[#allocation11 + $0xd8] sm:$0xf]
    %v3193 = vld [vmem:[#allocation11 + $0xdc] sm:$0xf]
    %v3194 = vld [vmem:[#allocation11 + $0xe0] sm:$0xf]
    %v3195 = vld [vmem:[#allocation11 + $0xe4] sm:$0xf]
    %v3196 = vld [vmem:[#allocation11 + $0xe8] sm:$0xf]
    %v3197 = vld [vmem:[#allocation11 + $0xec] sm:$0xf]
    %v3198 = vld [vmem:[#allocation11 + $0xf0] sm:$0xf]
    %v3199 = vld [vmem:[#allocation11 + $0xf4] sm:$0xf]
    %v3200 = vld [vmem:[#allocation11 + $0xf8] sm:$0xf]
    %v3201 = vld [vmem:[#allocation11 + $0xfc] sm:$0xf]
    %v3202 = vld [vmem:[#allocation11 + $0x100] sm:$0xf]
    %v3203 = vld [vmem:[#allocation11 + $0x104] sm:$0xf]
    %v3204 = vld [vmem:[#allocation11 + $0x108] sm:$0xf]
    %v3205 = vld [vmem:[#allocation11 + $0x10c] sm:$0xf]
    %v3206 = vld [vmem:[#allocation11 + $0x110] sm:$0xf]
    %v3207 = vld [vmem:[#allocation11 + $0x114] sm:$0xf]
    %v3208 = vld [vmem:[#allocation11 + $0x118] sm:$0xf]
    %v3209 = vld [vmem:[#allocation11 + $0x11c] sm:$0xf]
    %v3210 = vld [vmem:[#allocation11 + $0x120] sm:$0xf]
    %v3211 = vld [vmem:[#allocation11 + $0x124] sm:$0xf]
    %v3212 = vld [vmem:[#allocation11 + $0x128] sm:$0xf]
    %v3213 = vld [vmem:[#allocation11 + $0x12c] sm:$0xf]
    %v3214 = vld [vmem:[#allocation11 + $0x130] sm:$0xf]
    %v3215 = vld [vmem:[#allocation11 + $0x134] sm:$0xf]
    %v3216 = vld [vmem:[#allocation11 + $0x138] sm:$0xf]
    %v3217 = vld [vmem:[#allocation11 + $0x13c] sm:$0xf]
    %v3218 = vld [vmem:[#allocation11 + $0x140] sm:$0xf]
    %v3219 = vld [vmem:[#allocation11 + $0x144] sm:$0xf]
    %v3220 = vld [vmem:[#allocation11 + $0x148] sm:$0xf]
    %v3221 = vld [vmem:[#allocation11 + $0x14c] sm:$0xf]
    %v3222 = vld [vmem:[#allocation11 + $0x150] sm:$0xf]
    %v3223 = vld [vmem:[#allocation11 + $0x154] sm:$0xf]
    %v3224 = vld [vmem:[#allocation11 + $0x158] sm:$0xf]
    %v3225 = vld [vmem:[#allocation11 + $0x15c] sm:$0xf]
    %v3226 = vld [vmem:[#allocation11 + $0x160] sm:$0xf]
    %v3227 = vld [vmem:[#allocation11 + $0x164] sm:$0xf]
    %v3228 = vld [vmem:[#allocation11 + $0x168] sm:$0xf]
    %v3229 = vld [vmem:[#allocation11 + $0x16c] sm:$0xf]
    %v3230 = vld [vmem:[#allocation11 + $0x170] sm:$0xf]
    %v3231 = vld [vmem:[#allocation11 + $0x174] sm:$0xf]
    %v3232 = vld [vmem:[#allocation11 + $0x178] sm:$0xf]
    %v3233 = vld [vmem:[#allocation11 + $0x17c] sm:$0xf]
    %v3234 = vld [vmem:[#allocation11 + $0x180] sm:$0xf]
    %v3235 = vld [vmem:[#allocation11 + $0x184] sm:$0xf]
    %v3236 = vld [vmem:[#allocation11 + $0x188] sm:$0xf]
    %v3237 = vld [vmem:[#allocation11 + $0x18c] sm:$0xf]
    %v3238 = vld [vmem:[#allocation11 + $0x190] sm:$0xf]
    %v3239 = vld [vmem:[#allocation11 + $0x194] sm:$0xf]
    %v3240 = vld [vmem:[#allocation11 + $0x198] sm:$0xf]
    %v3241 = vld [vmem:[#allocation11 + $0x19c] sm:$0xf]
    %v3242 = vld [vmem:[#allocation11 + $0x1a0] sm:$0xf]
    %v3243 = vld [vmem:[#allocation11 + $0x1a4] sm:$0xf]
    %v3244 = vld [vmem:[#allocation11 + $0x1a8] sm:$0xf]
    %v3245 = vld [vmem:[#allocation11 + $0x1ac] sm:$0xf]
    %v3246 = vld [vmem:[#allocation11 + $0x1b0] sm:$0xf]
    %v3247 = vld [vmem:[#allocation11 + $0x1b4] sm:$0xf]
    %v3248 = vld [vmem:[#allocation11 + $0x1b8] sm:$0xf]
    %v3249 = vld [vmem:[#allocation11 + $0x1bc] sm:$0xf]
    %v3250 = vld [vmem:[#allocation11 + $0x1c0] sm:$0xf]
    %v3251 = vld [vmem:[#allocation11 + $0x1c4] sm:$0xf]
    %v3252 = vld [vmem:[#allocation11 + $0x1c8] sm:$0xf]
    %v3253 = vld [vmem:[#allocation11 + $0x1cc] sm:$0xf]
    %v3254 = vld [vmem:[#allocation11 + $0x1d0] sm:$0xf]
    %v3255 = vld [vmem:[#allocation11 + $0x1d4] sm:$0xf]
    %v3256 = vld [vmem:[#allocation11 + $0x1d8] sm:$0xf]
    %v3257 = vld [vmem:[#allocation11 + $0x1dc] sm:$0xf]
    %v3258 = vld [vmem:[#allocation11 + $0x1e0] sm:$0xf]
    %v3259 = vld [vmem:[#allocation11 + $0x1e4] sm:$0xf]
    %v3260 = vld [vmem:[#allocation11 + $0x1e8] sm:$0xf]
    %v3261 = vld [vmem:[#allocation11 + $0x1ec] sm:$0xf]
    %v3262 = vld [vmem:[#allocation11 + $0x1f0] sm:$0xf]
    %v3263 = vld [vmem:[#allocation11 + $0x1f4] sm:$0xf]
    %v3264 = vld [vmem:[#allocation11 + $0x1f8] sm:$0xf]
    %v3265 = vld [vmem:[#allocation11 + $0x1fc] sm:$0xf]
    %v3266 = vld [vmem:[#allocation13] sm:$0x1]
    %v3268 = vlaneseq
    %v3269 = vshrl.u32 %v3268, 7
    %v3270 = vsub.s32 0, %v3269
    %v3271 = vrot.slane %v3266, %v3270
    %v3401 = vunpack.c.l.b16 %v3138
    %v3402 = vunpack.c.l.b16 %v3139
    %v3403 = vunpack.c.l.b16 %v3140
    %v3404 = vunpack.c.l.b16 %v3141
    %v3405 = vunpack.c.l.b16 %v3142
    %v3406 = vunpack.c.l.b16 %v3143
    %v3407 = vunpack.c.l.b16 %v3144
    %v3408 = vunpack.c.l.b16 %v3145
    %v3409 = vunpack.c.l.b16 %v3146
    %v3410 = vunpack.c.l.b16 %v3147
    %v3411 = vunpack.c.l.b16 %v3148
    %v3412 = vunpack.c.l.b16 %v3149
    %v3413 = vunpack.c.l.b16 %v3150
    %v3414 = vunpack.c.l.b16 %v3151
    %v3415 = vunpack.c.l.b16 %v3152
    %v3416 = vunpack.c.l.b16 %v3153
    %v3417 = vunpack.c.l.b16 %v3154
    %v3418 = vunpack.c.l.b16 %v3155
    %v3419 = vunpack.c.l.b16 %v3156
    %v3420 = vunpack.c.l.b16 %v3157
    %v3421 = vunpack.c.l.b16 %v3158
    %v3422 = vunpack.c.l.b16 %v3159
    %v3423 = vunpack.c.l.b16 %v3160
    %v3424 = vunpack.c.l.b16 %v3161
    %v3425 = vunpack.c.l.b16 %v3162
    %v3426 = vunpack.c.l.b16 %v3163
    %v3427 = vunpack.c.l.b16 %v3164
    %v3428 = vunpack.c.l.b16 %v3165
    %v3429 = vunpack.c.l.b16 %v3166
    %v3430 = vunpack.c.l.b16 %v3167
    %v3431 = vunpack.c.l.b16 %v3168
    %v3432 = vunpack.c.l.b16 %v3169
    %v3433 = vunpack.c.l.b16 %v3170
    %v3434 = vunpack.c.l.b16 %v3171
    %v3435 = vunpack.c.l.b16 %v3172
    %v3436 = vunpack.c.l.b16 %v3173
    %v3437 = vunpack.c.l.b16 %v3174
    %v3438 = vunpack.c.l.b16 %v3175
    %v3439 = vunpack.c.l.b16 %v3176
    %v3440 = vunpack.c.l.b16 %v3177
    %v3441 = vunpack.c.l.b16 %v3178
    %v3442 = vunpack.c.l.b16 %v3179
    %v3443 = vunpack.c.l.b16 %v3180
    %v3444 = vunpack.c.l.b16 %v3181
    %v3445 = vunpack.c.l.b16 %v3182
    %v3446 = vunpack.c.l.b16 %v3183
    %v3447 = vunpack.c.l.b16 %v3184
    %v3448 = vunpack.c.l.b16 %v3185
    %v3449 = vunpack.c.l.b16 %v3186
    %v3450 = vunpack.c.l.b16 %v3187
    %v3451 = vunpack.c.l.b16 %v3188
    %v3452 = vunpack.c.l.b16 %v3189
    %v3453 = vunpack.c.l.b16 %v3190
    %v3454 = vunpack.c.l.b16 %v3191
    %v3455 = vunpack.c.l.b16 %v3192
    %v3456 = vunpack.c.l.b16 %v3193
    %v3457 = vunpack.c.l.b16 %v3194
    %v3458 = vunpack.c.l.b16 %v3195
    %v3459 = vunpack.c.l.b16 %v3196
    %v3460 = vunpack.c.l.b16 %v3197
    %v3461 = vunpack.c.l.b16 %v3198
    %v3462 = vunpack.c.l.b16 %v3199
    %v3463 = vunpack.c.l.b16 %v3200
    %v3464 = vunpack.c.l.b16 %v3201
    %v3465 = vunpack.c.l.b16 %v3202
    %v3466 = vunpack.c.l.b16 %v3203
    %v3467 = vunpack.c.l.b16 %v3204
    %v3468 = vunpack.c.l.b16 %v3205
    %v3469 = vunpack.c.l.b16 %v3206
    %v3470 = vunpack.c.l.b16 %v3207
    %v3471 = vunpack.c.l.b16 %v3208
    %v3472 = vunpack.c.l.b16 %v3209
    %v3473 = vunpack.c.l.b16 %v3210
    %v3474 = vunpack.c.l.b16 %v3211
    %v3475 = vunpack.c.l.b16 %v3212
    %v3476 = vunpack.c.l.b16 %v3213
    %v3477 = vunpack.c.l.b16 %v3214
    %v3478 = vunpack.c.l.b16 %v3215
    %v3479 = vunpack.c.l.b16 %v3216
    %v3480 = vunpack.c.l.b16 %v3217
    %v3481 = vunpack.c.l.b16 %v3218
    %v3482 = vunpack.c.l.b16 %v3219
    %v3483 = vunpack.c.l.b16 %v3220
    %v3484 = vunpack.c.l.b16 %v3221
    %v3485 = vunpack.c.l.b16 %v3222
    %v3486 = vunpack.c.l.b16 %v3223
    %v3487 = vunpack.c.l.b16 %v3224
    %v3488 = vunpack.c.l.b16 %v3225
    %v3489 = vunpack.c.l.b16 %v3226
    %v3490 = vunpack.c.l.b16 %v3227
    %v3491 = vunpack.c.l.b16 %v3228
    %v3492 = vunpack.c.l.b16 %v3229
    %v3493 = vunpack.c.l.b16 %v3230
    %v3494 = vunpack.c.l.b16 %v3231
    %v3495 = vunpack.c.l.b16 %v3232
    %v3496 = vunpack.c.l.b16 %v3233
    %v3497 = vunpack.c.l.b16 %v3234
    %v3498 = vunpack.c.l.b16 %v3235
    %v3499 = vunpack.c.l.b16 %v3236
    %v3500 = vunpack.c.l.b16 %v3237
    %v3501 = vunpack.c.l.b16 %v3238
    %v3502 = vunpack.c.l.b16 %v3239
    %v3503 = vunpack.c.l.b16 %v3240
    %v3504 = vunpack.c.l.b16 %v3241
    %v3505 = vunpack.c.l.b16 %v3242
    %v3506 = vunpack.c.l.b16 %v3243
    %v3507 = vunpack.c.l.b16 %v3244
    %v3508 = vunpack.c.l.b16 %v3245
    %v3509 = vunpack.c.l.b16 %v3246
    %v3510 = vunpack.c.l.b16 %v3247
    %v3511 = vunpack.c.l.b16 %v3248
    %v3512 = vunpack.c.l.b16 %v3249
    %v3513 = vunpack.c.l.b16 %v3250
    %v3514 = vunpack.c.l.b16 %v3251
    %v3515 = vunpack.c.l.b16 %v3252
    %v3516 = vunpack.c.l.b16 %v3253
    %v3517 = vunpack.c.l.b16 %v3254
    %v3518 = vunpack.c.l.b16 %v3255
    %v3519 = vunpack.c.l.b16 %v3256
    %v3520 = vunpack.c.l.b16 %v3257
    %v3521 = vunpack.c.l.b16 %v3258
    %v3522 = vunpack.c.l.b16 %v3259
    %v3523 = vunpack.c.l.b16 %v3260
    %v3524 = vunpack.c.l.b16 %v3261
    %v3525 = vunpack.c.l.b16 %v3262
    %v3526 = vunpack.c.l.b16 %v3263
    %v3527 = vunpack.c.l.b16 %v3264
    %v3528 = vunpack.c.l.b16 %v3265
    %v3529 = vpack.c.b16 %v3402, %v3401
    %v3530 = vpack.c.b16 %v3404, %v3403
    %v3531 = vpack.c.b16 %v3406, %v3405
    %v3532 = vpack.c.b16 %v3408, %v3407
    %v3533 = vpack.c.b16 %v3410, %v3409
    %v3534 = vpack.c.b16 %v3412, %v3411
    %v3535 = vpack.c.b16 %v3414, %v3413
    %v3536 = vpack.c.b16 %v3416, %v3415
    %v3537 = vpack.c.b16 %v3418, %v3417
    %v3538 = vpack.c.b16 %v3420, %v3419
    %v3539 = vpack.c.b16 %v3422, %v3421
    %v3540 = vpack.c.b16 %v3424, %v3423
    %v3541 = vpack.c.b16 %v3426, %v3425
    %v3542 = vpack.c.b16 %v3428, %v3427
    %v3543 = vpack.c.b16 %v3430, %v3429
    %v3544 = vpack.c.b16 %v3432, %v3431
    %v3545 = vpack.c.b16 %v3434, %v3433
    %v3546 = vpack.c.b16 %v3436, %v3435
    %v3547 = vpack.c.b16 %v3438, %v3437
    %v3548 = vpack.c.b16 %v3440, %v3439
    %v3549 = vpack.c.b16 %v3442, %v3441
    %v3550 = vpack.c.b16 %v3444, %v3443
    %v3551 = vpack.c.b16 %v3446, %v3445
    %v3552 = vpack.c.b16 %v3448, %v3447
    %v3553 = vpack.c.b16 %v3450, %v3449
    %v3554 = vpack.c.b16 %v3452, %v3451
    %v3555 = vpack.c.b16 %v3454, %v3453
    %v3556 = vpack.c.b16 %v3456, %v3455
    %v3557 = vpack.c.b16 %v3458, %v3457
    %v3558 = vpack.c.b16 %v3460, %v3459
    %v3559 = vpack.c.b16 %v3462, %v3461
    %v3560 = vpack.c.b16 %v3464, %v3463
    %v3561 = vpack.c.b16 %v3466, %v3465
    %v3562 = vpack.c.b16 %v3468, %v3467
    %v3563 = vpack.c.b16 %v3470, %v3469
    %v3564 = vpack.c.b16 %v3472, %v3471
    %v3565 = vpack.c.b16 %v3474, %v3473
    %v3566 = vpack.c.b16 %v3476, %v3475
    %v3567 = vpack.c.b16 %v3478, %v3477
    %v3568 = vpack.c.b16 %v3480, %v3479
    %v3569 = vpack.c.b16 %v3482, %v3481
    %v3570 = vpack.c.b16 %v3484, %v3483
    %v3571 = vpack.c.b16 %v3486, %v3485
    %v3572 = vpack.c.b16 %v3488, %v3487
    %v3573 = vpack.c.b16 %v3490, %v3489
    %v3574 = vpack.c.b16 %v3492, %v3491
    %v3575 = vpack.c.b16 %v3494, %v3493
    %v3576 = vpack.c.b16 %v3496, %v3495
    %v3577 = vpack.c.b16 %v3498, %v3497
    %v3578 = vpack.c.b16 %v3500, %v3499
    %v3579 = vpack.c.b16 %v3502, %v3501
    %v3580 = vpack.c.b16 %v3504, %v3503
    %v3581 = vpack.c.b16 %v3506, %v3505
    %v3582 = vpack.c.b16 %v3508, %v3507
    %v3583 = vpack.c.b16 %v3510, %v3509
    %v3584 = vpack.c.b16 %v3512, %v3511
    %v3585 = vpack.c.b16 %v3514, %v3513
    %v3586 = vpack.c.b16 %v3516, %v3515
    %v3587 = vpack.c.b16 %v3518, %v3517
    %v3588 = vpack.c.b16 %v3520, %v3519
    %v3589 = vpack.c.b16 %v3522, %v3521
    %v3590 = vpack.c.b16 %v3524, %v3523
    %v3591 = vpack.c.b16 %v3526, %v3525
    %v3592 = vpack.c.b16 %v3528, %v3527
    %3657 = vmatprep.subr.bf16.mxu0 0
    %3658 = vmatpush1.bf16.msra.mxu0 %v3529
    %3659 = vmatprep.subr.bf16.mxu0 0
    %3660 = vmatpush1.bf16.msra.mxu0 %v3530
    %3661 = vmatprep.subr.bf16.mxu0 0
    %3662 = vmatpush1.bf16.msra.mxu0 %v3531
    %3663 = vmatprep.subr.bf16.mxu0 0
    %3664 = vmatpush1.bf16.msra.mxu0 %v3532
    %3665 = vmatprep.subr.bf16.mxu0 0
    %3666 = vmatpush1.bf16.msra.mxu0 %v3533
    %3667 = vmatprep.subr.bf16.mxu0 0
    %3668 = vmatpush1.bf16.msra.mxu0 %v3534
    %3669 = vmatprep.subr.bf16.mxu0 0
    %3670 = vmatpush1.bf16.msra.mxu0 %v3535
    %3671 = vmatprep.subr.bf16.mxu0 0
    %3672 = vmatpush1.bf16.msra.mxu0 %v3536
    %3673 = vmatprep.subr.bf16.mxu0 0
    %3674 = vmatpush1.bf16.msra.mxu0 %v3537
    %3675 = vmatprep.subr.bf16.mxu0 0
    %3676 = vmatpush1.bf16.msra.mxu0 %v3538
    %3677 = vmatprep.subr.bf16.mxu0 0
    %3678 = vmatpush1.bf16.msra.mxu0 %v3539
    %3679 = vmatprep.subr.bf16.mxu0 0
    %3680 = vmatpush1.bf16.msra.mxu0 %v3540
    %3681 = vmatprep.subr.bf16.mxu0 0
    %3682 = vmatpush1.bf16.msra.mxu0 %v3541
    %3683 = vmatprep.subr.bf16.mxu0 0
    %3684 = vmatpush1.bf16.msra.mxu0 %v3542
    %3685 = vmatprep.subr.bf16.mxu0 0
    %3686 = vmatpush1.bf16.msra.mxu0 %v3543
    %3687 = vmatprep.subr.bf16.mxu0 0
    %3688 = vmatpush1.bf16.msra.mxu0 %v3544
    %3689 = vmatprep.mubr.bf16.mxu0 %v3131
    %3690 = vmatmul.mubr.bf16.gmra.mrb[0].mxu0 %v3130
    %v3691 = vpop.f32.mrb[0].mxu0
    %v3692 = vadd.f32 %v3271, %v3691
    %v3693 = vpop.f32.mrb[0].mxu0
    %v3694 = vpop.f32.mrb[0].mxu0
    %v3695 = vpop.f32.mrb[0].mxu0
    %3696 = vdwg.mxu0
    %3697 = vmatprep.subr.bf16.mxu0 0
    %3698 = vmatpush1.bf16.msra.mxu0 %v3545
    %3699 = vmatprep.subr.bf16.mxu0 0
    %3700 = vmatpush1.bf16.msra.mxu0 %v3546
    %3701 = vmatprep.subr.bf16.mxu0 0
    %3702 = vmatpush1.bf16.msra.mxu0 %v3547
    %3703 = vmatprep.subr.bf16.mxu0 0
    %3704 = vmatpush1.bf16.msra.mxu0 %v3548
    %3705 = vmatprep.subr.bf16.mxu0 0
    %3706 = vmatpush1.bf16.msra.mxu0 %v3549
    %3707 = vmatprep.subr.bf16.mxu0 0
    %3708 = vmatpush1.bf16.msra.mxu0 %v3550
    %3709 = vmatprep.subr.bf16.mxu0 0
    %3710 = vmatpush1.bf16.msra.mxu0 %v3551
    %3711 = vmatprep.subr.bf16.mxu0 0
    %3712 = vmatpush1.bf16.msra.mxu0 %v3552
    %3713 = vmatprep.subr.bf16.mxu0 0
    %3714 = vmatpush1.bf16.msra.mxu0 %v3553
    %3715 = vmatprep.subr.bf16.mxu0 0
    %3716 = vmatpush1.bf16.msra.mxu0 %v3554
    %3717 = vmatprep.subr.bf16.mxu0 0
    %3718 = vmatpush1.bf16.msra.mxu0 %v3555
    %3719 = vmatprep.subr.bf16.mxu0 0
    %3720 = vmatpush1.bf16.msra.mxu0 %v3556
    %3721 = vmatprep.subr.bf16.mxu0 0
    %3722 = vmatpush1.bf16.msra.mxu0 %v3557
    %3723 = vmatprep.subr.bf16.mxu0 0
    %3724 = vmatpush1.bf16.msra.mxu0 %v3558
    %3725 = vmatprep.subr.bf16.mxu0 0
    %3726 = vmatpush1.bf16.msra.mxu0 %v3559
    %3727 = vmatprep.subr.bf16.mxu0 0
    %3728 = vmatpush1.bf16.msra.mxu0 %v3560
    %3729 = vmatprep.mubr.bf16.mxu0 %v3133
    %3730 = vmatmul.mubr.bf16.gmra.mrb[0].mxu0 %v3132
    %v3731 = vpop.f32.mrb[0].mxu0
    %v3732 = vadd.f32 %v3692, %v3731
    %v3733 = vpop.f32.mrb[0].mxu0
    %v3734 = vpop.f32.mrb[0].mxu0
    %v3735 = vpop.f32.mrb[0].mxu0
    %3736 = vdwg.mxu0
    %3737 = vmatprep.subr.bf16.mxu0 0
    %3738 = vmatpush1.bf16.msra.mxu0 %v3561
    %3739 = vmatprep.subr.bf16.mxu0 0
    %3740 = vmatpush1.bf16.msra.mxu0 %v3562
    %3741 = vmatprep.subr.bf16.mxu0 0
    %3742 = vmatpush1.bf16.msra.mxu0 %v3563
    %3743 = vmatprep.subr.bf16.mxu0 0
    %3744 = vmatpush1.bf16.msra.mxu0 %v3564
    %3745 = vmatprep.subr.bf16.mxu0 0
    %3746 = vmatpush1.bf16.msra.mxu0 %v3565
    %3747 = vmatprep.subr.bf16.mxu0 0
    %3748 = vmatpush1.bf16.msra.mxu0 %v3566
    %3749 = vmatprep.subr.bf16.mxu0 0
    %3750 = vmatpush1.bf16.msra.mxu0 %v3567
    %3751 = vmatprep.subr.bf16.mxu0 0
    %3752 = vmatpush1.bf16.msra.mxu0 %v3568
    %3753 = vmatprep.subr.bf16.mxu0 0
    %3754 = vmatpush1.bf16.msra.mxu0 %v3569
    %3755 = vmatprep.subr.bf16.mxu0 0
    %3756 = vmatpush1.bf16.msra.mxu0 %v3570
    %3757 = vmatprep.subr.bf16.mxu0 0
    %3758 = vmatpush1.bf16.msra.mxu0 %v3571
    %3759 = vmatprep.subr.bf16.mxu0 0
    %3760 = vmatpush1.bf16.msra.mxu0 %v3572
    %3761 = vmatprep.subr.bf16.mxu0 0
    %3762 = vmatpush1.bf16.msra.mxu0 %v3573
    %3763 = vmatprep.subr.bf16.mxu0 0
    %3764 = vmatpush1.bf16.msra.mxu0 %v3574
    %3765 = vmatprep.subr.bf16.mxu0 0
    %3766 = vmatpush1.bf16.msra.mxu0 %v3575
    %3767 = vmatprep.subr.bf16.mxu0 0
    %3768 = vmatpush1.bf16.msra.mxu0 %v3576
    %3769 = vmatprep.mubr.bf16.mxu0 %v3135
    %3770 = vmatmul.mubr.bf16.gmra.mrb[0].mxu0 %v3134
    %v3771 = vpop.f32.mrb[0].mxu0
    %v3772 = vadd.f32 %v3732, %v3771
    %v3773 = vpop.f32.mrb[0].mxu0
    %v3774 = vpop.f32.mrb[0].mxu0
    %v3775 = vpop.f32.mrb[0].mxu0
    %3776 = vdwg.mxu0
    %3777 = vmatprep.subr.bf16.mxu0 0
    %3778 = vmatpush1.bf16.msra.mxu0 %v3577
    %3779 = vmatprep.subr.bf16.mxu0 0
    %3780 = vmatpush1.bf16.msra.mxu0 %v3578
    %3781 = vmatprep.subr.bf16.mxu0 0
    %3782 = vmatpush1.bf16.msra.mxu0 %v3579
    %3783 = vmatprep.subr.bf16.mxu0 0
    %3784 = vmatpush1.bf16.msra.mxu0 %v3580
    %3785 = vmatprep.subr.bf16.mxu0 0
    %3786 = vmatpush1.bf16.msra.mxu0 %v3581
    %3787 = vmatprep.subr.bf16.mxu0 0
    %3788 = vmatpush1.bf16.msra.mxu0 %v3582
    %3789 = vmatprep.subr.bf16.mxu0 0
    %3790 = vmatpush1.bf16.msra.mxu0 %v3583
    %3791 = vmatprep.subr.bf16.mxu0 0
    %3792 = vmatpush1.bf16.msra.mxu0 %v3584
    %3793 = vmatprep.subr.bf16.mxu0 0
    %3794 = vmatpush1.bf16.msra.mxu0 %v3585
    %3795 = vmatprep.subr.bf16.mxu0 0
    %3796 = vmatpush1.bf16.msra.mxu0 %v3586
    %3797 = vmatprep.subr.bf16.mxu0 0
    %3798 = vmatpush1.bf16.msra.mxu0 %v3587
    %3799 = vmatprep.subr.bf16.mxu0 0
    %3800 = vmatpush1.bf16.msra.mxu0 %v3588
    %3801 = vmatprep.subr.bf16.mxu0 0
    %3802 = vmatpush1.bf16.msra.mxu0 %v3589
    %3803 = vmatprep.subr.bf16.mxu0 0
    %3804 = vmatpush1.bf16.msra.mxu0 %v3590
    %3805 = vmatprep.subr.bf16.mxu0 0
    %3806 = vmatpush1.bf16.msra.mxu0 %v3591
    %3807 = vmatprep.subr.bf16.mxu0 0
    %3808 = vmatpush1.bf16.msra.mxu0 %v3592
    %3809 = vmatprep.mubr.bf16.mxu0 %v3137
    %3810 = vmatmul.mubr.bf16.gmra.mrb[0].mxu0 %v3136
    %v3811 = vpop.f32.mrb[0].mxu0
    %v3812 = vadd.f32 %v3772, %v3811
    %v3813 = vpop.f32.mrb[0].mxu0
    %v3814 = vpop.f32.mrb[0].mxu0
    %v3815 = vpop.f32.mrb[0].mxu0
    %3816 = vdwg.mxu0
    %3817 = vst [vmem:[#allocation14] sm:$0xff] %v3812
    // Predicated region
    $region58: #{tpu_custom_call.1} parent=1 // pred_check
      _
    $region59: #{tpu_custom_call.1} parent=1 // pred_check_branch
      %3819 = sbr.rel (0) target = $region61
    $region60: #{tpu_custom_call.1} parent=1 // pred_region
      %s3821 = ssub.s32 128, 128
      %3822 = vsyncadd [#allocation4], %s3821
      %s3824 = sshll.u32 [#allocation14], 4
      %s3825 = int_to_ptr.vmem [resolvable:$true] %s3824
      %3827 = dma.vmem_to_hbm [thread:$0]  %s3825, 128, %s7, [#allocation4]
    $region61: #{tpu_custom_call.1} parent=1 // pred_fallthru
      _
    // Predicated region
    $region62: #{tpu_custom_call.1} parent=1 // pred_check
      _
    $region63: #{tpu_custom_call.1} parent=1 // pred_check_branch
      %3829 = sbr.rel (0) target = $region65
    $region64: #{tpu_custom_call.1} parent=1 // pred_region
      %3830 = dma.done [#allocation4], 128
    $region65: #{tpu_custom_call.1} parent=1 // pred_fallthru
      _
    %3831 = vsyncpa [#allocation3], 1
    %3832 = vsyncpa [#allocation6], 1
    %3833 = vsyncpa [#allocation9], 1
    %3834 = vsyncpa [#allocation12], 1
    %3835 = vsyncpa [#allocation4], 1

</llo_original>
